<compile_context>
chip_gen: v5e
topology: v5e:2x2
jax: 0.10.0
libtpu: 0.0.40
codegen_flags: <defaults>
</compile_context>

<pallas_src>
import functools
import math

import jax
import jax.numpy as jnp
from jax import lax
from jax.experimental import pallas as pl
from jax.experimental.pallas import tpu as pltpu

LN_EPS = 1e-5          # nn.LayerNorm default eps
NEG_INF = -1e30        # additive mask value (finite stand-in for -inf)


# ----------------------------------------------------------------------------
# in-kernel helpers
# ----------------------------------------------------------------------------
def _layernorm(x, w, b):
    # single-pass mean / mean-of-squares: 2 cross-lane reductions instead of 3
    m1 = jnp.mean(x, axis=-1, keepdims=True)
    m2 = jnp.mean(x * x, axis=-1, keepdims=True)
    var = jnp.maximum(m2 - m1 * m1, 0.0)
    return (x - m1) * lax.rsqrt(var + LN_EPS) * w + b


def _gelu(x):
    # exact (erf) GELU, matching nn.GELU() default
    return 0.5 * x * (1.0 + lax.erf(x * (1.0 / math.sqrt(2.0))))


def _round_up(x, m):
    return ((x + m - 1) // m) * m


# BlockSpec helpers for a grid of (batch_block, layer)
def _bblock(shape, bb):   # (B, a, c) -> block (BB, a, c) indexed by batch-block
    return pl.BlockSpec((bb,) + tuple(shape[1:]), lambda b, l: (b, 0, 0))


def _layer3(shape):       # (NL, a, c) -> block (1, a, c) indexed by layer
    return pl.BlockSpec((1,) + tuple(shape[1:]), lambda b, l: (l, 0, 0))


def _shared(shape):       # whole array, constant block index (loaded once)
    return pl.BlockSpec(tuple(shape), lambda b, l, n=len(shape): (0,) * n)


def _pick_batch_block(batch, seq, hidden, target_rows=512, scratch_cap_bytes=12 << 20):
    """Largest divisor of `batch` keeping BB*S rows reasonable and scratch small."""
    bb = 1
    for cand in range(1, batch + 1):
        if batch % cand:
            continue
        rows = cand * seq
        scratch = rows * hidden * 4 + cand * seq * seq * 4
        if rows <= target_rows and scratch <= scratch_cap_bytes:
            bb = cand
    # v7x has 2 TensorCores: prefer an even number of batch blocks once the MXU
    # rows are already well occupied (never shrink below 256 rows just for this).
    if bb > 1 and (batch // bb) % 2 == 1 and bb % 2 == 0 and (bb // 2) * seq >= 256:
        bb //= 2
    return bb


def _bf16_eup():
    # bf16 exp is ~2x on v6e/v7x EUP; v5e's EUP has no bf16 -> keep f32 there.
    try:
        kind = jax.devices()[0].device_kind.lower()
        return ('v6' in kind) or ('v7' in kind)
    except Exception:
        return False


def _vmem_limit(req_bytes):
    # Never leave the (16/32 MiB) default limit in place; clamp to 3/4 of the
    # physical VMEM when known, otherwise fall back to ~100 MiB (safe on the
    # 128 MiB v5e/v6e parts).
    want = max(int(req_bytes) + (16 << 20), 64 << 20)
    try:
        cap = int(pltpu.get_tpu_info().vmem_capacity_bytes)
        return min(want, cap * 3 // 4)
    except Exception:
        return min(want, 100 << 20)


# ----------------------------------------------------------------------------
# fused kernel: embedding (layer 0) + num_layers transformer blocks + head
# ----------------------------------------------------------------------------
def fused_kernel(lat_ref, act_ref, rew_ref, pad_ref, temb_ref,
                 wlat_ref, wact_ref, wrew_ref, hlnw_ref, hlnb_ref,
                 ln1w_ref, ln1b_ref, wqkv_ref, bqkv_ref, wo_ref, bo_ref,
                 ln2w_ref, ln2b_ref, w1_ref, b1_ref, w2_ref, b2_ref,
                 olnw_ref, olnb_ref, wout_ref,
                 o_ref, x_scr, bias_scr, *, num_heads, exp_bf16):
    layer = pl.program_id(1)
    num_layers = pl.num_programs(1)
    M, H = x_scr.shape                    # M = BB * S
    BB, S, _ = bias_scr.shape
    hd = H // num_heads
    bf16 = jnp.bfloat16
    f32 = jnp.float32

    # ---- layer 0: fused input embedding + hidden LayerNorm; build (causal+pad) bias ----
    @pl.when(layer == 0)
    def _():
        lat = lat_ref[...].reshape(BB, -1).astype(bf16)                  # (BB, L)
        lat_rows = jnp.dot(lat, wlat_ref[...], preferred_element_type=f32)   # (BB, H)
        act = act_ref[...].reshape(M, -1).astype(bf16)                   # (M, C)
        act_emb = jnp.dot(act, wact_ref[...], preferred_element_type=f32)    # (M, H)
        rew_emb = rew_ref[...].reshape(M, 1) * wrew_ref[...]             # (M,1)*(1,H)
        z = (act_emb + rew_emb).reshape(BB, S, H)
        z = z + lat_rows[:, None, :] + temb_ref[...][None, :, :]
        # hidden_drop = identity (eval mode)
        x_scr[...] = _layernorm(z.reshape(M, H), hlnw_ref[...], hlnb_ref[...])
        row = lax.broadcasted_iota(jnp.int32, (S, S), 0)
        col = lax.broadcasted_iota(jnp.int32, (S, S), 1)
        causal = jnp.where(col > row, NEG_INF, 0.0)                      # (S, S)
        bias_scr[...] = causal[None, :, :] + pad_ref[...]                # + key padding

    # ---- transformer block `layer` (pre-LN MHA + pre-LN MLP; dropout = id) ----
    x = x_scr[...]                                            # (M, H) f32, VMEM-resident
    xn = _layernorm(x, ln1w_ref[0], ln1b_ref[0]).astype(bf16)

    # fused full-width QKV projection at M = BB*S rows (scale pre-folded into Q)
    qkv = jnp.dot(xn, wqkv_ref[0], preferred_element_type=f32) + bqkv_ref[0]  # (M, 3H)
    qkv3 = qkv.reshape(BB, S, 3 * H)
    bias = bias_scr[...]                                      # (BB, S, S)
    wo = wo_ref[0]                                            # (H, H) bf16

    # per-head attention on direct lane slices; output projection accumulated per
    # head so no (M, H) context concat is ever materialized.
    acc = None
    for h in range(num_heads):
        off = h * hd
        q_h = qkv3[:, :, off:off + hd].astype(bf16)                      # (BB, S, hd)
        k_h = qkv3[:, :, H + off:H + off + hd].astype(bf16)
        v_h = qkv3[:, :, 2 * H + off:2 * H + off + hd].astype(bf16)
        s = jnp.einsum('bqd,bkd->bqk', q_h, k_h, preferred_element_type=f32)
        s = s + bias
        s = s - jnp.max(s, axis=-1, keepdims=True)
        p = jnp.exp(s.astype(bf16)) if exp_bf16 else jnp.exp(s)
        denom = jnp.sum(p.astype(f32), axis=-1, keepdims=True)           # (BB, S, 1)
        inv = pl.reciprocal(denom, approx=True)                          # EUP
        ctx = jnp.einsum('bqk,bkd->bqd', p.astype(bf16), v_h,
                         preferred_element_type=f32) * inv               # (BB, S, hd)
        part = jnp.dot(ctx.reshape(M, hd).astype(bf16), wo[off:off + hd, :],
                       preferred_element_type=f32)                       # (M, H)
        acc = part if acc is None else acc + part
    x = x + acc + bo_ref[0]                                   # residual (drop = id in eval)

    xn2 = _layernorm(x, ln2w_ref[0], ln2b_ref[0]).astype(bf16)
    h1 = _gelu(jnp.dot(xn2, w1_ref[0], preferred_element_type=f32) + b1_ref[0])
    h2 = jnp.dot(h1.astype(bf16), w2_ref[0], preferred_element_type=f32) + b2_ref[0]
    x = x + h2
    x_scr[...] = x

    # ---- last layer: out_norm + out_layer (lane-dense, padded output) ----
    @pl.when(layer == num_layers - 1)
    def _():
        zn = _layernorm(x, olnw_ref[...], olnb_ref[...]).astype(bf16)
        out = jnp.dot(zn, wout_ref[...], preferred_element_type=f32)     # (M, Lpad)
        o_ref[...] = out.reshape(o_ref.shape)


# ----------------------------------------------------------------------------
# wrapper: full forward
# ----------------------------------------------------------------------------
def trans_dynamic_forward(params, latents, actions, rewards, timesteps, masks,
                          *, num_heads):
    B, S, C = actions.shape
    L = latents.shape[-1]
    H = params['w_hid'].shape[1]
    NL = params['blk_w_qkv'].shape[0]
    hd = H // num_heads
    Lpad = _round_up(L, 128)                                  # lane-dense output slab
    bf16 = jnp.bfloat16

    BB = _pick_batch_block(B, S, H)

    # --- algebraic fusion of the embedding chain (all these Linears are bias-free) ---
    wh = params['w_hid']                                      # (3L, H)
    w_lat = wh[:L].astype(bf16)                               # latent path:  (BB,L)@(L,H)
    w_act = (params['w_cond'] @ wh[L:2 * L]).astype(bf16)     # action path:  (M,C)@(C,H)
    w_rew = params['w_rew'] @ wh[2 * L:]                      # reward path:  (M,1)*(1,H)

    # TODO(synk): timesteps is (1,S) .repeat(B,1) in the module (identical rows);
    # a per-batch timestep tensor would need a per-batch embedding lookup here.
    time_emb = jnp.take(params['emb_table'], timesteps[0], axis=0)             # (S, H)
    pad_bias = jnp.where(masks, NEG_INF, 0.0).astype(jnp.float32)[:, None, :]  # (B,1,S)

    # fold the 1/sqrt(head_dim) attention scale into the Q projection (free)
    scale = 1.0 / math.sqrt(hd)
    w_qkv = params['blk_w_qkv'].at[:, :, :H].multiply(scale).astype(bf16)
    b_qkv = params['blk_b_qkv'].at[:, :, :H].multiply(scale)

    w_out_pad = jnp.zeros((H, Lpad), jnp.float32).at[:, :L].set(params['w_out']).astype(bf16)

    args = (
        latents, actions, rewards, pad_bias, time_emb,
        w_lat, w_act, w_rew, params['hid_ln_w'], params['hid_ln_b'],
        params['blk_ln1_w'], params['blk_ln1_b'], w_qkv, b_qkv,
        params['blk_w_o'].astype(bf16), params['blk_b_o'],
        params['blk_ln2_w'], params['blk_ln2_b'],
        params['blk_w1'].astype(bf16), params['blk_b1'],
        params['blk_w2'].astype(bf16), params['blk_b2'],
        params['out_ln_w'], params['out_ln_b'], w_out_pad,
    )

    in_specs = [
        _bblock(latents.shape, BB), _bblock(actions.shape, BB),
        _bblock(rewards.shape, BB), _bblock(pad_bias.shape, BB),
        _shared(time_emb.shape),
        _shared(w_lat.shape), _shared(w_act.shape), _shared(w_rew.shape),
        _shared(params['hid_ln_w'].shape), _shared(params['hid_ln_b'].shape),
    ] + [
        _layer3(a.shape) for a in (
            params['blk_ln1_w'], params['blk_ln1_b'], w_qkv, b_qkv,
            params['blk_w_o'], params['blk_b_o'],
            params['blk_ln2_w'], params['blk_ln2_b'],
            params['blk_w1'], params['blk_b1'], params['blk_w2'], params['blk_b2'])
    ] + [
        _shared(params['out_ln_w'].shape), _shared(params['out_ln_b'].shape),
        _shared(w_out_pad.shape),
    ]

    # VMEM requirement: double-buffered bf16 per-layer weights (24*H^2) + shared
    # slabs + double-buffered batch-block inputs/outputs + resident scratches.
    weight_bytes = 2 * (H * 3 * H + 3 * H * H) * 2
    shared_bytes = (S * H + 4 * H) * 4 + (L * H + C * H + Lpad * H) * 2 + H * 4
    block_bytes = 2 * BB * (L + S * C + 2 * S + S * Lpad) * 4
    scratch_bytes = BB * S * (H + S) * 4
    vmem_req = weight_bytes + shared_bytes + block_bytes + scratch_bytes

    kernel = functools.partial(fused_kernel, num_heads=num_heads, exp_bf16=_bf16_eup())
    out = pl.pallas_call(
        kernel,
        out_shape=jax.ShapeDtypeStruct((B, S, Lpad), jnp.float32),
        grid=(B // BB, NL),
        in_specs=in_specs,
        out_specs=pl.BlockSpec((BB, S, Lpad), lambda b, l: (b, 0, 0)),
        scratch_shapes=[pltpu.VMEM((BB * S, H), jnp.float32),   # resident activation
                        pltpu.VMEM((BB, S, S), jnp.float32)],   # causal+pad bias
        compiler_params=pltpu.CompilerParams(
            dimension_semantics=("parallel", "arbitrary"),
            vmem_limit_bytes=_vmem_limit(vmem_req)),
    )(*args)
    return out[:, :, :L]


# ----------------------------------------------------------------------------
# deterministic parameter construction (matches module shapes; weights ~ N(0, 0.02),
# linear biases = 0, LayerNorm weight = 1 / bias = 0, per _init_weights)
# ----------------------------------------------------------------------------
def _normal(key, shape):
    return 0.02 * jax.random.normal(key, shape, jnp.float32)


def init_params(key, latent_dim, cond_dim, seq_len, hidden_dim, num_layers, num_heads):
    del num_heads  # head split happens inside the kernel
    keys = jax.random.split(key, 5 + num_layers)
    ones = lambda s: jnp.ones(s, jnp.float32)
    zeros = lambda s: jnp.zeros(s, jnp.float32)
    params = {
        'w_cond': _normal(keys[0], (cond_dim, latent_dim)),        # condition_layer
        'w_rew': _normal(keys[1], (1, latent_dim)),                # reward_layer
        'w_hid': _normal(keys[2], (3 * latent_dim, hidden_dim)),   # hidden_emb
        'emb_table': _normal(keys[3], (seq_len, hidden_dim)),      # timestep_emb
        'hid_ln_w': ones((1, hidden_dim)), 'hid_ln_b': zeros((1, hidden_dim)),
        'out_ln_w': ones((1, hidden_dim)), 'out_ln_b': zeros((1, hidden_dim)),
        'w_out': _normal(keys[4], (hidden_dim, latent_dim)),       # out_layer
    }
    acc = {name: [] for name in (
        'blk_ln1_w', 'blk_ln1_b', 'blk_w_qkv', 'blk_b_qkv', 'blk_w_o', 'blk_b_o',
        'blk_ln2_w', 'blk_ln2_b', 'blk_w1', 'blk_b1', 'blk_w2', 'blk_b2')}
    for li in range(num_layers):
        bk = jax.random.split(keys[5 + li], 4)
        acc['blk_ln1_w'].append(ones((1, hidden_dim)))
        acc['blk_ln1_b'].append(zeros((1, hidden_dim)))
        acc['blk_w_qkv'].append(_normal(bk[0], (hidden_dim, 3 * hidden_dim)))
        acc['blk_b_qkv'].append(zeros((1, 3 * hidden_dim)))
        acc['blk_w_o'].append(_normal(bk[1], (hidden_dim, hidden_dim)))
        acc['blk_b_o'].append(zeros((1, hidden_dim)))
        acc['blk_ln2_w'].append(ones((1, hidden_dim)))
        acc['blk_ln2_b'].append(zeros((1, hidden_dim)))
        acc['blk_w1'].append(_normal(bk[2], (hidden_dim, hidden_dim)))
        acc['blk_b1'].append(zeros((1, hidden_dim)))
        acc['blk_w2'].append(_normal(bk[3], (hidden_dim, hidden_dim)))
        acc['blk_b2'].append(zeros((1, hidden_dim)))
    params.update({k: jnp.stack(v, axis=0) for k, v in acc.items()})
    return params


# ----------------------------------------------------------------------------
if __name__ == "__main__":
    B, S = 2, 8
    LATENT, COND, HIDDEN = 8, 6, 32
    NUM_LAYERS, NUM_HEADS = 4, 4

    key = jax.random.PRNGKey(0)
    k_params, k_lat, k_act, k_rew = jax.random.split(key, 4)
    params = init_params(k_params, LATENT, COND, S, HIDDEN, NUM_LAYERS, NUM_HEADS)

    latents = jax.random.normal(k_lat, (B, 1, LATENT), jnp.float32)
    actions = jax.random.normal(k_act, (B, S, COND), jnp.float32)
    rewards = jax.random.normal(k_rew, (B, S, 1), jnp.float32)
    timesteps = jnp.broadcast_to(jnp.arange(S, dtype=jnp.int32)[None, :], (1, S))
    masks = jnp.zeros((B, S), dtype=bool).at[:, S - 2:].set(True)  # last 2 steps padded

    fwd = jax.jit(functools.partial(trans_dynamic_forward, num_heads=NUM_HEADS))
    out = fwd(params, latents, actions, rewards, timesteps, masks)
    out = jax.block_until_ready(out)

    assert out.shape == (B, S, LATENT), out.shape
    assert bool(jnp.all(jnp.isfinite(out)))
    print("KERNEL_OK")
</pallas_src>

<mosaic_0001>
module attributes {stable_mosaic.version = 11 : i64} {
  func.func @fused_kernel(%arg0: i32, %arg1: i32, %arg2: memref<2x1x8xf32, #tpu.memory_space<vmem>>, %arg3: memref<2x8x6xf32, #tpu.memory_space<vmem>>, %arg4: memref<2x8x1xf32, #tpu.memory_space<vmem>>, %arg5: memref<2x1x8xf32, #tpu.memory_space<vmem>>, %arg6: memref<8x32xf32, #tpu.memory_space<vmem>>, %arg7: memref<8x32xbf16, #tpu.memory_space<vmem>>, %arg8: memref<6x32xbf16, #tpu.memory_space<vmem>>, %arg9: memref<1x32xf32, #tpu.memory_space<vmem>>, %arg10: memref<1x32xf32, #tpu.memory_space<vmem>>, %arg11: memref<1x32xf32, #tpu.memory_space<vmem>>, %arg12: memref<1x1x32xf32, #tpu.memory_space<vmem>>, %arg13: memref<1x1x32xf32, #tpu.memory_space<vmem>>, %arg14: memref<1x32x96xbf16, #tpu.memory_space<vmem>>, %arg15: memref<1x1x96xf32, #tpu.memory_space<vmem>>, %arg16: memref<1x32x32xbf16, #tpu.memory_space<vmem>>, %arg17: memref<1x1x32xf32, #tpu.memory_space<vmem>>, %arg18: memref<1x1x32xf32, #tpu.memory_space<vmem>>, %arg19: memref<1x1x32xf32, #tpu.memory_space<vmem>>, %arg20: memref<1x32x32xbf16, #tpu.memory_space<vmem>>, %arg21: memref<1x1x32xf32, #tpu.memory_space<vmem>>, %arg22: memref<1x32x32xbf16, #tpu.memory_space<vmem>>, %arg23: memref<1x1x32xf32, #tpu.memory_space<vmem>>, %arg24: memref<1x32xf32, #tpu.memory_space<vmem>>, %arg25: memref<1x32xf32, #tpu.memory_space<vmem>>, %arg26: memref<32x128xbf16, #tpu.memory_space<vmem>>, %arg27: memref<2x8x128xf32, #tpu.memory_space<vmem>>, %arg28: memref<16x32xf32, #tpu.memory_space<vmem>>, %arg29: memref<2x8x8xf32, #tpu.memory_space<vmem>>) attributes {dimension_semantics = [#tpu.dimension_semantics<parallel>, #tpu.dimension_semantics<arbitrary>], iteration_bounds = array<i64: 1, 4>, scalar_prefetch = 0 : i64, scratch_operands = 2 : i64, tpu.core_type = #tpu.core_type<tc>, window_params = [{transform_indices = @transform_0, window_bounds = array<i64: 2, 1, 8>}, {transform_indices = @transform_1, window_bounds = array<i64: 2, 8, 6>}, {transform_indices = @transform_2, window_bounds = array<i64: 2, 8, 1>}, {transform_indices = @transform_3, window_bounds = array<i64: 2, 1, 8>}, {pipeline_mode = #tpu.pipeline_mode<synchronous>, transform_indices = @transform_4, window_bounds = array<i64: 8, 32>}, {pipeline_mode = #tpu.pipeline_mode<synchronous>, transform_indices = @transform_5, window_bounds = array<i64: 8, 32>}, {pipeline_mode = #tpu.pipeline_mode<synchronous>, transform_indices = @transform_6, window_bounds = array<i64: 6, 32>}, {pipeline_mode = #tpu.pipeline_mode<synchronous>, transform_indices = @transform_7, window_bounds = array<i64: 1, 32>}, {pipeline_mode = #tpu.pipeline_mode<synchronous>, transform_indices = @transform_8, window_bounds = array<i64: 1, 32>}, {pipeline_mode = #tpu.pipeline_mode<synchronous>, transform_indices = @transform_9, window_bounds = array<i64: 1, 32>}, {transform_indices = @transform_10, window_bounds = array<i64: 1, 1, 32>}, {transform_indices = @transform_11, window_bounds = array<i64: 1, 1, 32>}, {transform_indices = @transform_12, window_bounds = array<i64: 1, 32, 96>}, {transform_indices = @transform_13, window_bounds = array<i64: 1, 1, 96>}, {transform_indices = @transform_14, window_bounds = array<i64: 1, 32, 32>}, {transform_indices = @transform_15, window_bounds = array<i64: 1, 1, 32>}, {transform_indices = @transform_16, window_bounds = array<i64: 1, 1, 32>}, {transform_indices = @transform_17, window_bounds = array<i64: 1, 1, 32>}, {transform_indices = @transform_18, window_bounds = array<i64: 1, 32, 32>}, {transform_indices = @transform_19, window_bounds = array<i64: 1, 1, 32>}, {transform_indices = @transform_20, window_bounds = array<i64: 1, 32, 32>}, {transform_indices = @transform_21, window_bounds = array<i64: 1, 1, 32>}, {pipeline_mode = #tpu.pipeline_mode<synchronous>, transform_indices = @transform_22, window_bounds = array<i64: 1, 32>}, {pipeline_mode = #tpu.pipeline_mode<synchronous>, transform_indices = @transform_23, window_bounds = array<i64: 1, 32>}, {pipeline_mode = #tpu.pipeline_mode<synchronous>, transform_indices = @transform_24, window_bounds = array<i64: 32, 128>}, {transform_indices = @transform_25, window_bounds = array<i64: 2, 8, 128>}]} {
    %c0_i32 = arith.constant 0 : i32
    %0 = arith.cmpi eq, %arg1, %c0_i32 : i32
    %1 = arith.extui %0 : i1 to i32
    %c0_i32_0 = arith.constant 0 : i32
    %2 = arith.cmpi ne, %1, %c0_i32_0 : i32
    scf.if %2 {
      %c0_81 = arith.constant 0 : index
      %c0_82 = arith.constant 0 : index
      %c0_83 = arith.constant 0 : index
      %205 = vector.load %arg2[%c0_81, %c0_82, %c0_83] : memref<2x1x8xf32, #tpu.memory_space<vmem>>, vector<2x1x8xf32>
      %206 = vector.shape_cast %205 : vector<2x1x8xf32> to vector<2x8xf32>
      %207 = arith.truncf %206 : vector<2x8xf32> to vector<2x8xbf16>
      %c0_84 = arith.constant 0 : index
      %c0_85 = arith.constant 0 : index
      %208 = vector.load %arg7[%c0_84, %c0_85] : memref<8x32xbf16, #tpu.memory_space<vmem>>, vector<8x32xbf16>
      %cst_86 = arith.constant dense<0.000000e+00> : vector<2x32xf32>
      %209 = tpu.matmul %207, %208, %cst_86 {dimension_numbers = #tpu.dot_dimension_numbers<[1], [0], [0], [1], [0, 0, 1, 1], [], []>} : vector<2x8xbf16>, vector<8x32xbf16>, vector<2x32xf32> -> vector<2x32xf32>
      %c0_87 = arith.constant 0 : index
      %c0_88 = arith.constant 0 : index
      %c0_89 = arith.constant 0 : index
      %210 = vector.load %arg3[%c0_87, %c0_88, %c0_89] : memref<2x8x6xf32, #tpu.memory_space<vmem>>, vector<2x8x6xf32>
      %211 = vector.shape_cast %210 : vector<2x8x6xf32> to vector<16x6xf32>
      %212 = arith.truncf %211 : vector<16x6xf32> to vector<16x6xbf16>
      %c0_90 = arith.constant 0 : index
      %c0_91 = arith.constant 0 : index
      %213 = vector.load %arg8[%c0_90, %c0_91] : memref<6x32xbf16, #tpu.memory_space<vmem>>, vector<6x32xbf16>
      %cst_92 = arith.constant dense<0.000000e+00> : vector<16x32xf32>
      %214 = tpu.matmul %212, %213, %cst_92 {dimension_numbers = #tpu.dot_dimension_numbers<[1], [0], [0], [1], [0, 0, 1, 1], [], []>} : vector<16x6xbf16>, vector<6x32xbf16>, vector<16x32xf32> -> vector<16x32xf32>
      %c0_93 = arith.constant 0 : index
      %c0_94 = arith.constant 0 : index
      %c0_95 = arith.constant 0 : index
      %215 = vector.load %arg4[%c0_93, %c0_94, %c0_95] : memref<2x8x1xf32, #tpu.memory_space<vmem>>, vector<2x8x1xf32>
      %216 = vector.shape_cast %215 : vector<2x8x1xf32> to vector<16x1xf32>
      %c0_96 = arith.constant 0 : index
      %c0_97 = arith.constant 0 : index
      %217 = vector.load %arg9[%c0_96, %c0_97] : memref<1x32xf32, #tpu.memory_space<vmem>>, vector<1x32xf32>
      %218 = vector.broadcast %216 : vector<16x1xf32> to vector<16x32xf32>
      %219 = vector.broadcast %217 : vector<1x32xf32> to vector<16x32xf32>
      %220 = arith.mulf %218, %219 : vector<16x32xf32>
      %221 = arith.addf %214, %220 : vector<16x32xf32>
      %222 = vector.shape_cast %221 : vector<16x32xf32> to vector<2x8x32xf32>
      %223 = vector.shape_cast %209 : vector<2x32xf32> to vector<2x1x32xf32>
      %224 = vector.broadcast %223 : vector<2x1x32xf32> to vector<2x8x32xf32>
      %225 = arith.addf %222, %224 : vector<2x8x32xf32>
      %c0_98 = arith.constant 0 : index
      %c0_99 = arith.constant 0 : index
      %226 = vector.load %arg6[%c0_98, %c0_99] : memref<8x32xf32, #tpu.memory_space<vmem>>, vector<8x32xf32>
      %227 = vector.shape_cast %226 : vector<8x32xf32> to vector<1x8x32xf32>
      %228 = vector.broadcast %227 : vector<1x8x32xf32> to vector<2x8x32xf32>
      %229 = arith.addf %225, %228 : vector<2x8x32xf32>
      %230 = vector.shape_cast %229 : vector<2x8x32xf32> to vector<16x32xf32>
      %c0_100 = arith.constant 0 : index
      %c0_101 = arith.constant 0 : index
      %231 = vector.load %arg10[%c0_100, %c0_101] : memref<1x32xf32, #tpu.memory_space<vmem>>, vector<1x32xf32>
      %c0_102 = arith.constant 0 : index
      %c0_103 = arith.constant 0 : index
      %232 = vector.load %arg11[%c0_102, %c0_103] : memref<1x32xf32, #tpu.memory_space<vmem>>, vector<1x32xf32>
      %cst_104 = arith.constant dense<0.000000e+00> : vector<16xf32>
      %233 = vector.multi_reduction <add>, %230, %cst_104 [1] : vector<16x32xf32> to vector<16xf32>
      %234 = vector.shape_cast %233 : vector<16xf32> to vector<16x1xf32>
      %cst_105 = arith.constant 3.200000e+01 : f32
      %235 = vector.broadcast %cst_105 : f32 to vector<16x1xf32>
      %236 = arith.divf %234, %235 : vector<16x1xf32>
      %237 = arith.mulf %230, %230 : vector<16x32xf32>
      %cst_106 = arith.constant dense<0.000000e+00> : vector<16xf32>
      %238 = vector.multi_reduction <add>, %237, %cst_106 [1] : vector<16x32xf32> to vector<16xf32>
      %239 = vector.shape_cast %238 : vector<16xf32> to vector<16x1xf32>
      %cst_107 = arith.constant 3.200000e+01 : f32
      %240 = vector.broadcast %cst_107 : f32 to vector<16x1xf32>
      %241 = arith.divf %239, %240 : vector<16x1xf32>
      %242 = arith.mulf %236, %236 : vector<16x1xf32>
      %243 = arith.subf %241, %242 : vector<16x1xf32>
      %cst_108 = arith.constant 0.000000e+00 : f32
      %244 = vector.broadcast %cst_108 : f32 to vector<16x1xf32>
      %245 = arith.maximumf %243, %244 : vector<16x1xf32>
      %246 = vector.broadcast %236 : vector<16x1xf32> to vector<16x32xf32>
      %247 = arith.subf %230, %246 : vector<16x32xf32>
      %cst_109 = arith.constant 9.99999974E-6 : f32
      %248 = vector.broadcast %cst_109 : f32 to vector<16x1xf32>
      %249 = arith.addf %245, %248 : vector<16x1xf32>
      %250 = math.rsqrt %249 : vector<16x1xf32>
      %251 = vector.broadcast %250 : vector<16x1xf32> to vector<16x32xf32>
      %252 = arith.mulf %247, %251 : vector<16x32xf32>
      %253 = vector.broadcast %231 : vector<1x32xf32> to vector<16x32xf32>
      %254 = arith.mulf %252, %253 : vector<16x32xf32>
      %255 = vector.broadcast %232 : vector<1x32xf32> to vector<16x32xf32>
      %256 = arith.addf %254, %255 : vector<16x32xf32>
      %c0_110 = arith.constant 0 : index
      %c0_111 = arith.constant 0 : index
      %257 = vector.load %arg28[%c0_110, %c0_111] : memref<16x32xf32, #tpu.memory_space<vmem>>, vector<16x32xf32>
      tpu.vector_store %arg28[%c0_110, %c0_111], %256 {strides = array<i32>} : memref<16x32xf32, #tpu.memory_space<vmem>>, vector<16x32xf32>,
      %258 = tpu.iota {dimensions = array<i32: 0>} : vector<8x8xi32>
      %259 = tpu.iota {dimensions = array<i32: 1>} : vector<8x8xi32>
      %260 = arith.cmpi sgt, %259, %258 : vector<8x8xi32>
      %cst_112 = arith.constant -1.000000e+30 : f32
      %cst_113 = arith.constant 0.000000e+00 : f32
      %261 = vector.broadcast %cst_112 : f32 to vector<8x8xf32>
      %262 = vector.broadcast %cst_113 : f32 to vector<8x8xf32>
      %263 = arith.select %260, %261, %262 : vector<8x8xi1>, vector<8x8xf32>
      %264 = vector.shape_cast %263 : vector<8x8xf32> to vector<1x8x8xf32>
      %c0_114 = arith.constant 0 : index
      %c0_115 = arith.constant 0 : index
      %c0_116 = arith.constant 0 : index
      %265 = vector.load %arg5[%c0_114, %c0_115, %c0_116] : memref<2x1x8xf32, #tpu.memory_space<vmem>>, vector<2x1x8xf32>
      %266 = vector.broadcast %264 : vector<1x8x8xf32> to vector<2x8x8xf32>
      %267 = vector.broadcast %265 : vector<2x1x8xf32> to vector<2x8x8xf32>
      %268 = arith.addf %266, %267 : vector<2x8x8xf32>
      %c0_117 = arith.constant 0 : index
      %c0_118 = arith.constant 0 : index
      %c0_119 = arith.constant 0 : index
      %269 = vector.load %arg29[%c0_117, %c0_118, %c0_119] : memref<2x8x8xf32, #tpu.memory_space<vmem>>, vector<2x8x8xf32>
      tpu.vector_store %arg29[%c0_117, %c0_118, %c0_119], %268 {strides = array<i32>} : memref<2x8x8xf32, #tpu.memory_space<vmem>>, vector<2x8x8xf32>,
    } else {
    }
    %c0 = arith.constant 0 : index
    %c0_1 = arith.constant 0 : index
    %3 = vector.load %arg28[%c0, %c0_1] : memref<16x32xf32, #tpu.memory_space<vmem>>, vector<16x32xf32>
    %c0_2 = arith.constant 0 : index
    %c0_3 = arith.constant 0 : index
    %c0_4 = arith.constant 0 : index
    %4 = vector.load %arg12[%c0_2, %c0_3, %c0_4] : memref<1x1x32xf32, #tpu.memory_space<vmem>>, vector<1x1x32xf32>
    %5 = vector.shape_cast %4 : vector<1x1x32xf32> to vector<1x32xf32>
    %c0_5 = arith.constant 0 : index
    %c0_6 = arith.constant 0 : index
    %c0_7 = arith.constant 0 : index
    %6 = vector.load %arg13[%c0_5, %c0_6, %c0_7] : memref<1x1x32xf32, #tpu.memory_space<vmem>>, vector<1x1x32xf32>
    %7 = vector.shape_cast %6 : vector<1x1x32xf32> to vector<1x32xf32>
    %cst = arith.constant dense<0.000000e+00> : vector<16xf32>
    %8 = vector.multi_reduction <add>, %3, %cst [1] : vector<16x32xf32> to vector<16xf32>
    %9 = vector.shape_cast %8 : vector<16xf32> to vector<16x1xf32>
    %cst_8 = arith.constant 3.200000e+01 : f32
    %10 = vector.broadcast %cst_8 : f32 to vector<16x1xf32>
    %11 = arith.divf %9, %10 : vector<16x1xf32>
    %12 = arith.mulf %3, %3 : vector<16x32xf32>
    %cst_9 = arith.constant dense<0.000000e+00> : vector<16xf32>
    %13 = vector.multi_reduction <add>, %12, %cst_9 [1] : vector<16x32xf32> to vector<16xf32>
    %14 = vector.shape_cast %13 : vector<16xf32> to vector<16x1xf32>
    %cst_10 = arith.constant 3.200000e+01 : f32
    %15 = vector.broadcast %cst_10 : f32 to vector<16x1xf32>
    %16 = arith.divf %14, %15 : vector<16x1xf32>
    %17 = arith.mulf %11, %11 : vector<16x1xf32>
    %18 = arith.subf %16, %17 : vector<16x1xf32>
    %cst_11 = arith.constant 0.000000e+00 : f32
    %19 = vector.broadcast %cst_11 : f32 to vector<16x1xf32>
    %20 = arith.maximumf %18, %19 : vector<16x1xf32>
    %21 = vector.broadcast %11 : vector<16x1xf32> to vector<16x32xf32>
    %22 = arith.subf %3, %21 : vector<16x32xf32>
    %cst_12 = arith.constant 9.99999974E-6 : f32
    %23 = vector.broadcast %cst_12 : f32 to vector<16x1xf32>
    %24 = arith.addf %20, %23 : vector<16x1xf32>
    %25 = math.rsqrt %24 : vector<16x1xf32>
    %26 = vector.broadcast %25 : vector<16x1xf32> to vector<16x32xf32>
    %27 = arith.mulf %22, %26 : vector<16x32xf32>
    %28 = vector.broadcast %5 : vector<1x32xf32> to vector<16x32xf32>
    %29 = arith.mulf %27, %28 : vector<16x32xf32>
    %30 = vector.broadcast %7 : vector<1x32xf32> to vector<16x32xf32>
    %31 = arith.addf %29, %30 : vector<16x32xf32>
    %32 = arith.truncf %31 : vector<16x32xf32> to vector<16x32xbf16>
    %c0_13 = arith.constant 0 : index
    %c0_14 = arith.constant 0 : index
    %c0_15 = arith.constant 0 : index
    %33 = vector.load %arg14[%c0_13, %c0_14, %c0_15] : memref<1x32x96xbf16, #tpu.memory_space<vmem>>, vector<1x32x96xbf16>
    %34 = vector.shape_cast %33 : vector<1x32x96xbf16> to vector<32x96xbf16>
    %cst_16 = arith.constant dense<0.000000e+00> : vector<16x96xf32>
    %35 = tpu.matmul %32, %34, %cst_16 {dimension_numbers = #tpu.dot_dimension_numbers<[1], [0], [0], [1], [0, 0, 1, 1], [], []>} : vector<16x32xbf16>, vector<32x96xbf16>, vector<16x96xf32> -> vector<16x96xf32>
    %c0_17 = arith.constant 0 : index
    %c0_18 = arith.constant 0 : index
    %c0_19 = arith.constant 0 : index
    %36 = vector.load %arg15[%c0_17, %c0_18, %c0_19] : memref<1x1x96xf32, #tpu.memory_space<vmem>>, vector<1x1x96xf32>
    %37 = vector.shape_cast %36 : vector<1x1x96xf32> to vector<1x96xf32>
    %38 = vector.broadcast %37 : vector<1x96xf32> to vector<16x96xf32>
    %39 = arith.addf %35, %38 : vector<16x96xf32>
    %40 = vector.shape_cast %39 : vector<16x96xf32> to vector<2x8x96xf32>
    %c0_20 = arith.constant 0 : index
    %c0_21 = arith.constant 0 : index
    %c0_22 = arith.constant 0 : index
    %41 = vector.load %arg29[%c0_20, %c0_21, %c0_22] : memref<2x8x8xf32, #tpu.memory_space<vmem>>, vector<2x8x8xf32>
    %c0_23 = arith.constant 0 : index
    %c0_24 = arith.constant 0 : index
    %c0_25 = arith.constant 0 : index
    %42 = vector.load %arg16[%c0_23, %c0_24, %c0_25] : memref<1x32x32xbf16, #tpu.memory_space<vmem>>, vector<1x32x32xbf16>
    %43 = vector.shape_cast %42 : vector<1x32x32xbf16> to vector<32x32xbf16>
    %44 = vector.extract_strided_slice %40 {offsets = [0, 0, 0], sizes = [2, 8, 8], strides = [1, 1, 1]} : vector<2x8x96xf32> to vector<2x8x8xf32>
    %45 = arith.truncf %44 : vector<2x8x8xf32> to vector<2x8x8xbf16>
    %46 = vector.extract_strided_slice %40 {offsets = [0, 0, 32], sizes = [2, 8, 8], strides = [1, 1, 1]} : vector<2x8x96xf32> to vector<2x8x8xf32>
    %47 = arith.truncf %46 : vector<2x8x8xf32> to vector<2x8x8xbf16>
    %48 = vector.extract_strided_slice %40 {offsets = [0, 0, 64], sizes = [2, 8, 8], strides = [1, 1, 1]} : vector<2x8x96xf32> to vector<2x8x8xf32>
    %49 = arith.truncf %48 : vector<2x8x8xf32> to vector<2x8x8xbf16>
    "tpu.trace_start"() <{level = 10 : i32, message = "bqd,bkd->bqk"}> : () -> ()
    %cst_26 = arith.constant dense<0.000000e+00> : vector<2x8x8xf32>
    %50 = tpu.matmul %45, %47, %cst_26 {dimension_numbers = #tpu.dot_dimension_numbers<[2], [2], [1], [1], [0, 0, 0, 1, 1, 1], [0], [0]>} : vector<2x8x8xbf16>, vector<2x8x8xbf16>, vector<2x8x8xf32> -> vector<2x8x8xf32>
    "tpu.trace_stop"() : () -> ()
    %51 = arith.addf %50, %41 : vector<2x8x8xf32>
    %cst_27 = arith.constant dense<0xFF800000> : vector<2x8xf32>
    %52 = vector.multi_reduction <maximumf>, %51, %cst_27 [2] : vector<2x8x8xf32> to vector<2x8xf32>
    %53 = vector.shape_cast %52 : vector<2x8xf32> to vector<2x8x1xf32>
    %54 = vector.broadcast %53 : vector<2x8x1xf32> to vector<2x8x8xf32>
    %55 = arith.subf %51, %54 : vector<2x8x8xf32>
    %56 = math.exp %55 : vector<2x8x8xf32>
    %cst_28 = arith.constant dense<0.000000e+00> : vector<2x8xf32>
    %57 = vector.multi_reduction <add>, %56, %cst_28 [2] : vector<2x8x8xf32> to vector<2x8xf32>
    %58 = vector.shape_cast %57 : vector<2x8xf32> to vector<2x8x1xf32>
    %59 = tpu.reciprocal %58 {approx = true} : vector<2x8x1xf32> -> vector<2x8x1xf32>
    %60 = arith.truncf %56 : vector<2x8x8xf32> to vector<2x8x8xbf16>
    "tpu.trace_start"() <{level = 10 : i32, message = "bqk,bkd->bqd"}> : () -> ()
    %cst_29 = arith.constant dense<0.000000e+00> : vector<2x8x8xf32>
    %61 = tpu.matmul %60, %49, %cst_29 {dimension_numbers = #tpu.dot_dimension_numbers<[2], [1], [1], [2], [0, 0, 0, 1, 1, 2], [0], [0]>} : vector<2x8x8xbf16>, vector<2x8x8xbf16>, vector<2x8x8xf32> -> vector<2x8x8xf32>
    "tpu.trace_stop"() : () -> ()
    %62 = vector.broadcast %59 : vector<2x8x1xf32> to vector<2x8x8xf32>
    %63 = arith.mulf %61, %62 : vector<2x8x8xf32>
    %64 = vector.shape_cast %63 : vector<2x8x8xf32> to vector<16x8xf32>
    %65 = arith.truncf %64 : vector<16x8xf32> to vector<16x8xbf16>
    %66 = vector.extract_strided_slice %43 {offsets = [0, 0], sizes = [8, 32], strides = [1, 1]} : vector<32x32xbf16> to vector<8x32xbf16>
    %cst_30 = arith.constant dense<0.000000e+00> : vector<16x32xf32>
    %67 = tpu.matmul %65, %66, %cst_30 {dimension_numbers = #tpu.dot_dimension_numbers<[1], [0], [0], [1], [0, 0, 1, 1], [], []>} : vector<16x8xbf16>, vector<8x32xbf16>, vector<16x32xf32> -> vector<16x32xf32>
    %68 = vector.extract_strided_slice %40 {offsets = [0, 0, 8], sizes = [2, 8, 8], strides = [1, 1, 1]} : vector<2x8x96xf32> to vector<2x8x8xf32>
    %69 = arith.truncf %68 : vector<2x8x8xf32> to vector<2x8x8xbf16>
    %70 = vector.extract_strided_slice %40 {offsets = [0, 0, 40], sizes = [2, 8, 8], strides = [1, 1, 1]} : vector<2x8x96xf32> to vector<2x8x8xf32>
    %71 = arith.truncf %70 : vector<2x8x8xf32> to vector<2x8x8xbf16>
    %72 = vector.extract_strided_slice %40 {offsets = [0, 0, 72], sizes = [2, 8, 8], strides = [1, 1, 1]} : vector<2x8x96xf32> to vector<2x8x8xf32>
    %73 = arith.truncf %72 : vector<2x8x8xf32> to vector<2x8x8xbf16>
    "tpu.trace_start"() <{level = 10 : i32, message = "bqd,bkd->bqk"}> : () -> ()
    %cst_31 = arith.constant dense<0.000000e+00> : vector<2x8x8xf32>
    %74 = tpu.matmul %69, %71, %cst_31 {dimension_numbers = #tpu.dot_dimension_numbers<[2], [2], [1], [1], [0, 0, 0, 1, 1, 1], [0], [0]>} : vector<2x8x8xbf16>, vector<2x8x8xbf16>, vector<2x8x8xf32> -> vector<2x8x8xf32>
    "tpu.trace_stop"() : () -> ()
    %75 = arith.addf %74, %41 : vector<2x8x8xf32>
    %cst_32 = arith.constant dense<0xFF800000> : vector<2x8xf32>
    %76 = vector.multi_reduction <maximumf>, %75, %cst_32 [2] : vector<2x8x8xf32> to vector<2x8xf32>
    %77 = vector.shape_cast %76 : vector<2x8xf32> to vector<2x8x1xf32>
    %78 = vector.broadcast %77 : vector<2x8x1xf32> to vector<2x8x8xf32>
    %79 = arith.subf %75, %78 : vector<2x8x8xf32>
    %80 = math.exp %79 : vector<2x8x8xf32>
    %cst_33 = arith.constant dense<0.000000e+00> : vector<2x8xf32>
    %81 = vector.multi_reduction <add>, %80, %cst_33 [2] : vector<2x8x8xf32> to vector<2x8xf32>
    %82 = vector.shape_cast %81 : vector<2x8xf32> to vector<2x8x1xf32>
    %83 = tpu.reciprocal %82 {approx = true} : vector<2x8x1xf32> -> vector<2x8x1xf32>
    %84 = arith.truncf %80 : vector<2x8x8xf32> to vector<2x8x8xbf16>
    "tpu.trace_start"() <{level = 10 : i32, message = "bqk,bkd->bqd"}> : () -> ()
    %cst_34 = arith.constant dense<0.000000e+00> : vector<2x8x8xf32>
    %85 = tpu.matmul %84, %73, %cst_34 {dimension_numbers = #tpu.dot_dimension_numbers<[2], [1], [1], [2], [0, 0, 0, 1, 1, 2], [0], [0]>} : vector<2x8x8xbf16>, vector<2x8x8xbf16>, vector<2x8x8xf32> -> vector<2x8x8xf32>
    "tpu.trace_stop"() : () -> ()
    %86 = vector.broadcast %83 : vector<2x8x1xf32> to vector<2x8x8xf32>
    %87 = arith.mulf %85, %86 : vector<2x8x8xf32>
    %88 = vector.shape_cast %87 : vector<2x8x8xf32> to vector<16x8xf32>
    %89 = arith.truncf %88 : vector<16x8xf32> to vector<16x8xbf16>
    %90 = vector.extract_strided_slice %43 {offsets = [8, 0], sizes = [8, 32], strides = [1, 1]} : vector<32x32xbf16> to vector<8x32xbf16>
    %cst_35 = arith.constant dense<0.000000e+00> : vector<16x32xf32>
    %91 = tpu.matmul %89, %90, %cst_35 {dimension_numbers = #tpu.dot_dimension_numbers<[1], [0], [0], [1], [0, 0, 1, 1], [], []>} : vector<16x8xbf16>, vector<8x32xbf16>, vector<16x32xf32> -> vector<16x32xf32>
    %92 = arith.addf %67, %91 : vector<16x32xf32>
    %93 = vector.extract_strided_slice %40 {offsets = [0, 0, 16], sizes = [2, 8, 8], strides = [1, 1, 1]} : vector<2x8x96xf32> to vector<2x8x8xf32>
    %94 = arith.truncf %93 : vector<2x8x8xf32> to vector<2x8x8xbf16>
    %95 = vector.extract_strided_slice %40 {offsets = [0, 0, 48], sizes = [2, 8, 8], strides = [1, 1, 1]} : vector<2x8x96xf32> to vector<2x8x8xf32>
    %96 = arith.truncf %95 : vector<2x8x8xf32> to vector<2x8x8xbf16>
    %97 = vector.extract_strided_slice %40 {offsets = [0, 0, 80], sizes = [2, 8, 8], strides = [1, 1, 1]} : vector<2x8x96xf32> to vector<2x8x8xf32>
    %98 = arith.truncf %97 : vector<2x8x8xf32> to vector<2x8x8xbf16>
    "tpu.trace_start"() <{level = 10 : i32, message = "bqd,bkd->bqk"}> : () -> ()
    %cst_36 = arith.constant dense<0.000000e+00> : vector<2x8x8xf32>
    %99 = tpu.matmul %94, %96, %cst_36 {dimension_numbers = #tpu.dot_dimension_numbers<[2], [2], [1], [1], [0, 0, 0, 1, 1, 1], [0], [0]>} : vector<2x8x8xbf16>, vector<2x8x8xbf16>, vector<2x8x8xf32> -> vector<2x8x8xf32>
    "tpu.trace_stop"() : () -> ()
    %100 = arith.addf %99, %41 : vector<2x8x8xf32>
    %cst_37 = arith.constant dense<0xFF800000> : vector<2x8xf32>
    %101 = vector.multi_reduction <maximumf>, %100, %cst_37 [2] : vector<2x8x8xf32> to vector<2x8xf32>
    %102 = vector.shape_cast %101 : vector<2x8xf32> to vector<2x8x1xf32>
    %103 = vector.broadcast %102 : vector<2x8x1xf32> to vector<2x8x8xf32>
    %104 = arith.subf %100, %103 : vector<2x8x8xf32>
    %105 = math.exp %104 : vector<2x8x8xf32>
    %cst_38 = arith.constant dense<0.000000e+00> : vector<2x8xf32>
    %106 = vector.multi_reduction <add>, %105, %cst_38 [2] : vector<2x8x8xf32> to vector<2x8xf32>
    %107 = vector.shape_cast %106 : vector<2x8xf32> to vector<2x8x1xf32>
    %108 = tpu.reciprocal %107 {approx = true} : vector<2x8x1xf32> -> vector<2x8x1xf32>
    %109 = arith.truncf %105 : vector<2x8x8xf32> to vector<2x8x8xbf16>
    "tpu.trace_start"() <{level = 10 : i32, message = "bqk,bkd->bqd"}> : () -> ()
    %cst_39 = arith.constant dense<0.000000e+00> : vector<2x8x8xf32>
    %110 = tpu.matmul %109, %98, %cst_39 {dimension_numbers = #tpu.dot_dimension_numbers<[2], [1], [1], [2], [0, 0, 0, 1, 1, 2], [0], [0]>} : vector<2x8x8xbf16>, vector<2x8x8xbf16>, vector<2x8x8xf32> -> vector<2x8x8xf32>
    "tpu.trace_stop"() : () -> ()
    %111 = vector.broadcast %108 : vector<2x8x1xf32> to vector<2x8x8xf32>
    %112 = arith.mulf %110, %111 : vector<2x8x8xf32>
    %113 = vector.shape_cast %112 : vector<2x8x8xf32> to vector<16x8xf32>
    %114 = arith.truncf %113 : vector<16x8xf32> to vector<16x8xbf16>
    %115 = vector.extract_strided_slice %43 {offsets = [16, 0], sizes = [8, 32], strides = [1, 1]} : vector<32x32xbf16> to vector<8x32xbf16>
    %cst_40 = arith.constant dense<0.000000e+00> : vector<16x32xf32>
    %116 = tpu.matmul %114, %115, %cst_40 {dimension_numbers = #tpu.dot_dimension_numbers<[1], [0], [0], [1], [0, 0, 1, 1], [], []>} : vector<16x8xbf16>, vector<8x32xbf16>, vector<16x32xf32> -> vector<16x32xf32>
    %117 = arith.addf %92, %116 : vector<16x32xf32>
    %118 = vector.extract_strided_slice %40 {offsets = [0, 0, 24], sizes = [2, 8, 8], strides = [1, 1, 1]} : vector<2x8x96xf32> to vector<2x8x8xf32>
    %119 = arith.truncf %118 : vector<2x8x8xf32> to vector<2x8x8xbf16>
    %120 = vector.extract_strided_slice %40 {offsets = [0, 0, 56], sizes = [2, 8, 8], strides = [1, 1, 1]} : vector<2x8x96xf32> to vector<2x8x8xf32>
    %121 = arith.truncf %120 : vector<2x8x8xf32> to vector<2x8x8xbf16>
    %122 = vector.extract_strided_slice %40 {offsets = [0, 0, 88], sizes = [2, 8, 8], strides = [1, 1, 1]} : vector<2x8x96xf32> to vector<2x8x8xf32>
    %123 = arith.truncf %122 : vector<2x8x8xf32> to vector<2x8x8xbf16>
    "tpu.trace_start"() <{level = 10 : i32, message = "bqd,bkd->bqk"}> : () -> ()
    %cst_41 = arith.constant dense<0.000000e+00> : vector<2x8x8xf32>
    %124 = tpu.matmul %119, %121, %cst_41 {dimension_numbers = #tpu.dot_dimension_numbers<[2], [2], [1], [1], [0, 0, 0, 1, 1, 1], [0], [0]>} : vector<2x8x8xbf16>, vector<2x8x8xbf16>, vector<2x8x8xf32> -> vector<2x8x8xf32>
    "tpu.trace_stop"() : () -> ()
    %125 = arith.addf %124, %41 : vector<2x8x8xf32>
    %cst_42 = arith.constant dense<0xFF800000> : vector<2x8xf32>
    %126 = vector.multi_reduction <maximumf>, %125, %cst_42 [2] : vector<2x8x8xf32> to vector<2x8xf32>
    %127 = vector.shape_cast %126 : vector<2x8xf32> to vector<2x8x1xf32>
    %128 = vector.broadcast %127 : vector<2x8x1xf32> to vector<2x8x8xf32>
    %129 = arith.subf %125, %128 : vector<2x8x8xf32>
    %130 = math.exp %129 : vector<2x8x8xf32>
    %cst_43 = arith.constant dense<0.000000e+00> : vector<2x8xf32>
    %131 = vector.multi_reduction <add>, %130, %cst_43 [2] : vector<2x8x8xf32> to vector<2x8xf32>
    %132 = vector.shape_cast %131 : vector<2x8xf32> to vector<2x8x1xf32>
    %133 = tpu.reciprocal %132 {approx = true} : vector<2x8x1xf32> -> vector<2x8x1xf32>
    %134 = arith.truncf %130 : vector<2x8x8xf32> to vector<2x8x8xbf16>
    "tpu.trace_start"() <{level = 10 : i32, message = "bqk,bkd->bqd"}> : () -> ()
    %cst_44 = arith.constant dense<0.000000e+00> : vector<2x8x8xf32>
    %135 = tpu.matmul %134, %123, %cst_44 {dimension_numbers = #tpu.dot_dimension_numbers<[2], [1], [1], [2], [0, 0, 0, 1, 1, 2], [0], [0]>} : vector<2x8x8xbf16>, vector<2x8x8xbf16>, vector<2x8x8xf32> -> vector<2x8x8xf32>
    "tpu.trace_stop"() : () -> ()
    %136 = vector.broadcast %133 : vector<2x8x1xf32> to vector<2x8x8xf32>
    %137 = arith.mulf %135, %136 : vector<2x8x8xf32>
    %138 = vector.shape_cast %137 : vector<2x8x8xf32> to vector<16x8xf32>
    %139 = arith.truncf %138 : vector<16x8xf32> to vector<16x8xbf16>
    %140 = vector.extract_strided_slice %43 {offsets = [24, 0], sizes = [8, 32], strides = [1, 1]} : vector<32x32xbf16> to vector<8x32xbf16>
    %cst_45 = arith.constant dense<0.000000e+00> : vector<16x32xf32>
    %141 = tpu.matmul %139, %140, %cst_45 {dimension_numbers = #tpu.dot_dimension_numbers<[1], [0], [0], [1], [0, 0, 1, 1], [], []>} : vector<16x8xbf16>, vector<8x32xbf16>, vector<16x32xf32> -> vector<16x32xf32>
    %142 = arith.addf %117, %141 : vector<16x32xf32>
    %143 = arith.addf %3, %142 : vector<16x32xf32>
    %c0_46 = arith.constant 0 : index
    %c0_47 = arith.constant 0 : index
    %c0_48 = arith.constant 0 : index
    %144 = vector.load %arg17[%c0_46, %c0_47, %c0_48] : memref<1x1x32xf32, #tpu.memory_space<vmem>>, vector<1x1x32xf32>
    %145 = vector.shape_cast %144 : vector<1x1x32xf32> to vector<1x32xf32>
    %146 = vector.broadcast %145 : vector<1x32xf32> to vector<16x32xf32>
    %147 = arith.addf %143, %146 : vector<16x32xf32>
    %c0_49 = arith.constant 0 : index
    %c0_50 = arith.constant 0 : index
    %c0_51 = arith.constant 0 : index
    %148 = vector.load %arg18[%c0_49, %c0_50, %c0_51] : memref<1x1x32xf32, #tpu.memory_space<vmem>>, vector<1x1x32xf32>
    %149 = vector.shape_cast %148 : vector<1x1x32xf32> to vector<1x32xf32>
    %c0_52 = arith.constant 0 : index
    %c0_53 = arith.constant 0 : index
    %c0_54 = arith.constant 0 : index
    %150 = vector.load %arg19[%c0_52, %c0_53, %c0_54] : memref<1x1x32xf32, #tpu.memory_space<vmem>>, vector<1x1x32xf32>
    %151 = vector.shape_cast %150 : vector<1x1x32xf32> to vector<1x32xf32>
    %cst_55 = arith.constant dense<0.000000e+00> : vector<16xf32>
    %152 = vector.multi_reduction <add>, %147, %cst_55 [1] : vector<16x32xf32> to vector<16xf32>
    %153 = vector.shape_cast %152 : vector<16xf32> to vector<16x1xf32>
    %cst_56 = arith.constant 3.200000e+01 : f32
    %154 = vector.broadcast %cst_56 : f32 to vector<16x1xf32>
    %155 = arith.divf %153, %154 : vector<16x1xf32>
    %156 = arith.mulf %147, %147 : vector<16x32xf32>
    %cst_57 = arith.constant dense<0.000000e+00> : vector<16xf32>
    %157 = vector.multi_reduction <add>, %156, %cst_57 [1] : vector<16x32xf32> to vector<16xf32>
    %158 = vector.shape_cast %157 : vector<16xf32> to vector<16x1xf32>
    %cst_58 = arith.constant 3.200000e+01 : f32
    %159 = vector.broadcast %cst_58 : f32 to vector<16x1xf32>
    %160 = arith.divf %158, %159 : vector<16x1xf32>
    %161 = arith.mulf %155, %155 : vector<16x1xf32>
    %162 = arith.subf %160, %161 : vector<16x1xf32>
    %cst_59 = arith.constant 0.000000e+00 : f32
    %163 = vector.broadcast %cst_59 : f32 to vector<16x1xf32>
    %164 = arith.maximumf %162, %163 : vector<16x1xf32>
    %165 = vector.broadcast %155 : vector<16x1xf32> to vector<16x32xf32>
    %166 = arith.subf %147, %165 : vector<16x32xf32>
    %cst_60 = arith.constant 9.99999974E-6 : f32
    %167 = vector.broadcast %cst_60 : f32 to vector<16x1xf32>
    %168 = arith.addf %164, %167 : vector<16x1xf32>
    %169 = math.rsqrt %168 : vector<16x1xf32>
    %170 = vector.broadcast %169 : vector<16x1xf32> to vector<16x32xf32>
    %171 = arith.mulf %166, %170 : vector<16x32xf32>
    %172 = vector.broadcast %149 : vector<1x32xf32> to vector<16x32xf32>
    %173 = arith.mulf %171, %172 : vector<16x32xf32>
    %174 = vector.broadcast %151 : vector<1x32xf32> to vector<16x32xf32>
    %175 = arith.addf %173, %174 : vector<16x32xf32>
    %176 = arith.truncf %175 : vector<16x32xf32> to vector<16x32xbf16>
    %c0_61 = arith.constant 0 : index
    %c0_62 = arith.constant 0 : index
    %c0_63 = arith.constant 0 : index
    %177 = vector.load %arg20[%c0_61, %c0_62, %c0_63] : memref<1x32x32xbf16, #tpu.memory_space<vmem>>, vector<1x32x32xbf16>
    %178 = vector.shape_cast %177 : vector<1x32x32xbf16> to vector<32x32xbf16>
    %cst_64 = arith.constant dense<0.000000e+00> : vector<16x32xf32>
    %179 = tpu.matmul %176, %178, %cst_64 {dimension_numbers = #tpu.dot_dimension_numbers<[1], [0], [0], [1], [0, 0, 1, 1], [], []>} : vector<16x32xbf16>, vector<32x32xbf16>, vector<16x32xf32> -> vector<16x32xf32>
    %c0_65 = arith.constant 0 : index
    %c0_66 = arith.constant 0 : index
    %c0_67 = arith.constant 0 : index
    %180 = vector.load %arg21[%c0_65, %c0_66, %c0_67] : memref<1x1x32xf32, #tpu.memory_space<vmem>>, vector<1x1x32xf32>
    %181 = vector.shape_cast %180 : vector<1x1x32xf32> to vector<1x32xf32>
    %182 = vector.broadcast %181 : vector<1x32xf32> to vector<16x32xf32>
    %183 = arith.addf %179, %182 : vector<16x32xf32>
    %cst_68 = arith.constant 5.000000e-01 : f32
    %184 = vector.broadcast %cst_68 : f32 to vector<16x32xf32>
    %185 = arith.mulf %184, %183 : vector<16x32xf32>
    %cst_69 = arith.constant 0.707106769 : f32
    %186 = vector.broadcast %cst_69 : f32 to vector<16x32xf32>
    %187 = arith.mulf %183, %186 : vector<16x32xf32>
    %188 = math.erf %187 : vector<16x32xf32>
    %cst_70 = arith.constant 1.000000e+00 : f32
    %189 = vector.broadcast %cst_70 : f32 to vector<16x32xf32>
    %190 = arith.addf %189, %188 : vector<16x32xf32>
    %191 = arith.mulf %185, %190 : vector<16x32xf32>
    %192 = arith.truncf %191 : vector<16x32xf32> to vector<16x32xbf16>
    %c0_71 = arith.constant 0 : index
    %c0_72 = arith.constant 0 : index
    %c0_73 = arith.constant 0 : index
    %193 = vector.load %arg22[%c0_71, %c0_72, %c0_73] : memref<1x32x32xbf16, #tpu.memory_space<vmem>>, vector<1x32x32xbf16>
    %194 = vector.shape_cast %193 : vector<1x32x32xbf16> to vector<32x32xbf16>
    %cst_74 = arith.constant dense<0.000000e+00> : vector<16x32xf32>
    %195 = tpu.matmul %192, %194, %cst_74 {dimension_numbers = #tpu.dot_dimension_numbers<[1], [0], [0], [1], [0, 0, 1, 1], [], []>} : vector<16x32xbf16>, vector<32x32xbf16>, vector<16x32xf32> -> vector<16x32xf32>
    %c0_75 = arith.constant 0 : index
    %c0_76 = arith.constant 0 : index
    %c0_77 = arith.constant 0 : index
    %196 = vector.load %arg23[%c0_75, %c0_76, %c0_77] : memref<1x1x32xf32, #tpu.memory_space<vmem>>, vector<1x1x32xf32>
    %197 = vector.shape_cast %196 : vector<1x1x32xf32> to vector<1x32xf32>
    %198 = vector.broadcast %197 : vector<1x32xf32> to vector<16x32xf32>
    %199 = arith.addf %195, %198 : vector<16x32xf32>
    %200 = arith.addf %147, %199 : vector<16x32xf32>
    %c0_78 = arith.constant 0 : index
    %c0_79 = arith.constant 0 : index
    %201 = vector.load %arg28[%c0_78, %c0_79] : memref<16x32xf32, #tpu.memory_space<vmem>>, vector<16x32xf32>
    tpu.vector_store %arg28[%c0_78, %c0_79], %200 {strides = array<i32>} : memref<16x32xf32, #tpu.memory_space<vmem>>, vector<16x32xf32>,
    %c3_i32 = arith.constant 3 : i32
    %202 = arith.cmpi eq, %arg1, %c3_i32 : i32
    %203 = arith.extui %202 : i1 to i32
    %c0_i32_80 = arith.constant 0 : i32
    %204 = arith.cmpi ne, %203, %c0_i32_80 : i32
    scf.if %204 {
      %c0_81 = arith.constant 0 : index
      %c0_82 = arith.constant 0 : index
      %205 = vector.load %arg24[%c0_81, %c0_82] : memref<1x32xf32, #tpu.memory_space<vmem>>, vector<1x32xf32>
      %c0_83 = arith.constant 0 : index
      %c0_84 = arith.constant 0 : index
      %206 = vector.load %arg25[%c0_83, %c0_84] : memref<1x32xf32, #tpu.memory_space<vmem>>, vector<1x32xf32>
      %cst_85 = arith.constant dense<0.000000e+00> : vector<16xf32>
      %207 = vector.multi_reduction <add>, %200, %cst_85 [1] : vector<16x32xf32> to vector<16xf32>
      %208 = vector.shape_cast %207 : vector<16xf32> to vector<16x1xf32>
      %cst_86 = arith.constant 3.200000e+01 : f32
      %209 = vector.broadcast %cst_86 : f32 to vector<16x1xf32>
      %210 = arith.divf %208, %209 : vector<16x1xf32>
      %211 = arith.mulf %200, %200 : vector<16x32xf32>
      %cst_87 = arith.constant dense<0.000000e+00> : vector<16xf32>
      %212 = vector.multi_reduction <add>, %211, %cst_87 [1] : vector<16x32xf32> to vector<16xf32>
      %213 = vector.shape_cast %212 : vector<16xf32> to vector<16x1xf32>
      %cst_88 = arith.constant 3.200000e+01 : f32
      %214 = vector.broadcast %cst_88 : f32 to vector<16x1xf32>
      %215 = arith.divf %213, %214 : vector<16x1xf32>
      %216 = arith.mulf %210, %210 : vector<16x1xf32>
      %217 = arith.subf %215, %216 : vector<16x1xf32>
      %cst_89 = arith.constant 0.000000e+00 : f32
      %218 = vector.broadcast %cst_89 : f32 to vector<16x1xf32>
      %219 = arith.maximumf %217, %218 : vector<16x1xf32>
      %220 = vector.broadcast %210 : vector<16x1xf32> to vector<16x32xf32>
      %221 = arith.subf %200, %220 : vector<16x32xf32>
      %cst_90 = arith.constant 9.99999974E-6 : f32
      %222 = vector.broadcast %cst_90 : f32 to vector<16x1xf32>
      %223 = arith.addf %219, %222 : vector<16x1xf32>
      %224 = math.rsqrt %223 : vector<16x1xf32>
      %225 = vector.broadcast %224 : vector<16x1xf32> to vector<16x32xf32>
      %226 = arith.mulf %221, %225 : vector<16x32xf32>
      %227 = vector.broadcast %205 : vector<1x32xf32> to vector<16x32xf32>
      %228 = arith.mulf %226, %227 : vector<16x32xf32>
      %229 = vector.broadcast %206 : vector<1x32xf32> to vector<16x32xf32>
      %230 = arith.addf %228, %229 : vector<16x32xf32>
      %231 = arith.truncf %230 : vector<16x32xf32> to vector<16x32xbf16>
      %c0_91 = arith.constant 0 : index
      %c0_92 = arith.constant 0 : index
      %232 = vector.load %arg26[%c0_91, %c0_92] : memref<32x128xbf16, #tpu.memory_space<vmem>>, vector<32x128xbf16>
      %cst_93 = arith.constant dense<0.000000e+00> : vector<16x128xf32>
      %233 = tpu.matmul %231, %232, %cst_93 {dimension_numbers = #tpu.dot_dimension_numbers<[1], [0], [0], [1], [0, 0, 1, 1], [], []>} : vector<16x32xbf16>, vector<32x128xbf16>, vector<16x128xf32> -> vector<16x128xf32>
      %234 = vector.shape_cast %233 : vector<16x128xf32> to vector<2x8x128xf32>
      %c0_94 = arith.constant 0 : index
      %c0_95 = arith.constant 0 : index
      %c0_96 = arith.constant 0 : index
      %235 = vector.load %arg27[%c0_94, %c0_95, %c0_96] : memref<2x8x128xf32, #tpu.memory_space<vmem>>, vector<2x8x128xf32>
      tpu.vector_store %arg27[%c0_94, %c0_95, %c0_96], %234 {strides = array<i32>} : memref<2x8x128xf32, #tpu.memory_space<vmem>>, vector<2x8x128xf32>,
    } else {
    }
    return
  }
  func.func @transform_0(%arg0: i32, %arg1: i32) -> (i32, i32, i32) {
    %c0_i32 = arith.constant 0 : i32
    %c0_i32_0 = arith.constant 0 : i32
    %c0_i32_1 = arith.constant 0 : i32
    return %arg0, %c0_i32, %c0_i32_0 : i32, i32, i32
  }
  func.func @transform_1(%arg0: i32, %arg1: i32) -> (i32, i32, i32) {
    %c0_i32 = arith.constant 0 : i32
    %c0_i32_0 = arith.constant 0 : i32
    %c0_i32_1 = arith.constant 0 : i32
    return %arg0, %c0_i32, %c0_i32_0 : i32, i32, i32
  }
  func.func @transform_2(%arg0: i32, %arg1: i32) -> (i32, i32, i32) {
    %c0_i32 = arith.constant 0 : i32
    %c0_i32_0 = arith.constant 0 : i32
    %c0_i32_1 = arith.constant 0 : i32
    return %arg0, %c0_i32, %c0_i32_0 : i32, i32, i32
  }
  func.func @transform_3(%arg0: i32, %arg1: i32) -> (i32, i32, i32) {
    %c0_i32 = arith.constant 0 : i32
    %c0_i32_0 = arith.constant 0 : i32
    %c0_i32_1 = arith.constant 0 : i32
    return %arg0, %c0_i32, %c0_i32_0 : i32, i32, i32
  }
  func.func @transform_4(%arg0: i32, %arg1: i32) -> (i32, i32) {
    %c0_i32 = arith.constant 0 : i32
    %c0_i32_0 = arith.constant 0 : i32
    %c0_i32_1 = arith.constant 0 : i32
    return %c0_i32, %c0_i32_0 : i32, i32
  }
  func.func @transform_5(%arg0: i32, %arg1: i32) -> (i32, i32) {
    %c0_i32 = arith.constant 0 : i32
    %c0_i32_0 = arith.constant 0 : i32
    %c0_i32_1 = arith.constant 0 : i32
    return %c0_i32, %c0_i32_0 : i32, i32
  }
  func.func @transform_6(%arg0: i32, %arg1: i32) -> (i32, i32) {
    %c0_i32 = arith.constant 0 : i32
    %c0_i32_0 = arith.constant 0 : i32
    %c0_i32_1 = arith.constant 0 : i32
    return %c0_i32, %c0_i32_0 : i32, i32
  }
  func.func @transform_7(%arg0: i32, %arg1: i32) -> (i32, i32) {
    %c0_i32 = arith.constant 0 : i32
    %c0_i32_0 = arith.constant 0 : i32
    %c0_i32_1 = arith.constant 0 : i32
    return %c0_i32, %c0_i32_0 : i32, i32
  }
  func.func @transform_8(%arg0: i32, %arg1: i32) -> (i32, i32) {
    %c0_i32 = arith.constant 0 : i32
    %c0_i32_0 = arith.constant 0 : i32
    %c0_i32_1 = arith.constant 0 : i32
    return %c0_i32, %c0_i32_0 : i32, i32
  }
  func.func @transform_9(%arg0: i32, %arg1: i32) -> (i32, i32) {
    %c0_i32 = arith.constant 0 : i32
    %c0_i32_0 = arith.constant 0 : i32
    %c0_i32_1 = arith.constant 0 : i32
    return %c0_i32, %c0_i32_0 : i32, i32
  }
  func.func @transform_10(%arg0: i32, %arg1: i32) -> (i32, i32, i32) {
    %c0_i32 = arith.constant 0 : i32
    %c0_i32_0 = arith.constant 0 : i32
    %c0_i32_1 = arith.constant 0 : i32
    return %arg1, %c0_i32, %c0_i32_0 : i32, i32, i32
  }
  func.func @transform_11(%arg0: i32, %arg1: i32) -> (i32, i32, i32) {
    %c0_i32 = arith.constant 0 : i32
    %c0_i32_0 = arith.constant 0 : i32
    %c0_i32_1 = arith.constant 0 : i32
    return %arg1, %c0_i32, %c0_i32_0 : i32, i32, i32
  }
  func.func @transform_12(%arg0: i32, %arg1: i32) -> (i32, i32, i32) {
    %c0_i32 = arith.constant 0 : i32
    %c0_i32_0 = arith.constant 0 : i32
    %c0_i32_1 = arith.constant 0 : i32
    return %arg1, %c0_i32, %c0_i32_0 : i32, i32, i32
  }
  func.func @transform_13(%arg0: i32, %arg1: i32) -> (i32, i32, i32) {
    %c0_i32 = arith.constant 0 : i32
    %c0_i32_0 = arith.constant 0 : i32
    %c0_i32_1 = arith.constant 0 : i32
    return %arg1, %c0_i32, %c0_i32_0 : i32, i32, i32
  }
  func.func @transform_14(%arg0: i32, %arg1: i32) -> (i32, i32, i32) {
    %c0_i32 = arith.constant 0 : i32
    %c0_i32_0 = arith.constant 0 : i32
    %c0_i32_1 = arith.constant 0 : i32
    return %arg1, %c0_i32, %c0_i32_0 : i32, i32, i32
  }
  func.func @transform_15(%arg0: i32, %arg1: i32) -> (i32, i32, i32) {
    %c0_i32 = arith.constant 0 : i32
    %c0_i32_0 = arith.constant 0 : i32
    %c0_i32_1 = arith.constant 0 : i32
    return %arg1, %c0_i32, %c0_i32_0 : i32, i32, i32
  }
  func.func @transform_16(%arg0: i32, %arg1: i32) -> (i32, i32, i32) {
    %c0_i32 = arith.constant 0 : i32
    %c0_i32_0 = arith.constant 0 : i32
    %c0_i32_1 = arith.constant 0 : i32
    return %arg1, %c0_i32, %c0_i32_0 : i32, i32, i32
  }
  func.func @transform_17(%arg0: i32, %arg1: i32) -> (i32, i32, i32) {
    %c0_i32 = arith.constant 0 : i32
    %c0_i32_0 = arith.constant 0 : i32
    %c0_i32_1 = arith.constant 0 : i32
    return %arg1, %c0_i32, %c0_i32_0 : i32, i32, i32
  }
  func.func @transform_18(%arg0: i32, %arg1: i32) -> (i32, i32, i32) {
    %c0_i32 = arith.constant 0 : i32
    %c0_i32_0 = arith.constant 0 : i32
    %c0_i32_1 = arith.constant 0 : i32
    return %arg1, %c0_i32, %c0_i32_0 : i32, i32, i32
  }
  func.func @transform_19(%arg0: i32, %arg1: i32) -> (i32, i32, i32) {
    %c0_i32 = arith.constant 0 : i32
    %c0_i32_0 = arith.constant 0 : i32
    %c0_i32_1 = arith.constant 0 : i32
    return %arg1, %c0_i32, %c0_i32_0 : i32, i32, i32
  }
  func.func @transform_20(%arg0: i32, %arg1: i32) -> (i32, i32, i32) {
    %c0_i32 = arith.constant 0 : i32
    %c0_i32_0 = arith.constant 0 : i32
    %c0_i32_1 = arith.constant 0 : i32
    return %arg1, %c0_i32, %c0_i32_0 : i32, i32, i32
  }
  func.func @transform_21(%arg0: i32, %arg1: i32) -> (i32, i32, i32) {
    %c0_i32 = arith.constant 0 : i32
    %c0_i32_0 = arith.constant 0 : i32
    %c0_i32_1 = arith.constant 0 : i32
    return %arg1, %c0_i32, %c0_i32_0 : i32, i32, i32
  }
  func.func @transform_22(%arg0: i32, %arg1: i32) -> (i32, i32) {
    %c0_i32 = arith.constant 0 : i32
    %c0_i32_0 = arith.constant 0 : i32
    %c0_i32_1 = arith.constant 0 : i32
    return %c0_i32, %c0_i32_0 : i32, i32
  }
  func.func @transform_23(%arg0: i32, %arg1: i32) -> (i32, i32) {
    %c0_i32 = arith.constant 0 : i32
    %c0_i32_0 = arith.constant 0 : i32
    %c0_i32_1 = arith.constant 0 : i32
    return %c0_i32, %c0_i32_0 : i32, i32
  }
  func.func @transform_24(%arg0: i32, %arg1: i32) -> (i32, i32) {
    %c0_i32 = arith.constant 0 : i32
    %c0_i32_0 = arith.constant 0 : i32
    %c0_i32_1 = arith.constant 0 : i32
    return %c0_i32, %c0_i32_0 : i32, i32
  }
  func.func @transform_25(%arg0: i32, %arg1: i32) -> (i32, i32, i32) {
    %c0_i32 = arith.constant 0 : i32
    %c0_i32_0 = arith.constant 0 : i32
    %c0_i32_1 = arith.constant 0 : i32
    return %arg0, %c0_i32, %c0_i32_0 : i32, i32, i32
  }
}

</mosaic_0001>

<llo_original>
// kernel: trans_dynamic_forward.1
$region0: #{trans_dynamic_forward.1}
  #allocation0 [shape = 'u32[]', space=smem, size = 0x4, offset = 0x4, fixed_abs, tag = 'smem constant byte address 0x4 - core index']
  #allocation1 [shape = 'u32[72,128]{1,0:T(1,128)}', space=vmem, size = 0x9000, scoped, tag = 'internal scratch']
  #allocation2 [shape = 'f32[16,32]{1,0:T(8,128)}', space=vmem, size = 0x2000, scoped, tag = 'scratch operand']
  #allocation3 [shape = 'f32[2,8,8]{2,1,0:T(8,128)}', space=vmem, size = 0x2000, scoped, tag = 'scratch operand']
  %s0 = inlined_call_operand.vmem [shape: f32[2,1,8], index: 0, kind: input, shape index: {}]
  %s1 = inlined_call_operand.vmem [shape: f32[2,8,6], index: 1, kind: input, shape index: {}]
  %s2 = inlined_call_operand.vmem [shape: f32[2,8,1], index: 2, kind: input, shape index: {}]
  %s3 = inlined_call_operand.vmem [shape: f32[2,1,8], index: 3, kind: input, shape index: {}]
  %s4 = inlined_call_operand.vmem [shape: f32[8,32], index: 4, kind: input, shape index: {}]
  %s5 = inlined_call_operand.vmem [shape: bf16[8,32], index: 5, kind: input, shape index: {}]
  %s6 = inlined_call_operand.vmem [shape: bf16[6,32], index: 6, kind: input, shape index: {}]
  %s7 = inlined_call_operand.vmem [shape: f32[1,32], index: 7, kind: input, shape index: {}]
  %s8 = inlined_call_operand.vmem [shape: f32[1,32], index: 8, kind: input, shape index: {}]
  %s9 = inlined_call_operand.vmem [shape: f32[1,32], index: 9, kind: input, shape index: {}]
  %s10 = inlined_call_operand.vmem [shape: f32[4,1,32], index: 10, kind: input, shape index: {}]
  %s11 = inlined_call_operand.vmem [shape: f32[4,1,32], index: 11, kind: input, shape index: {}]
  %s12 = inlined_call_operand.vmem [shape: bf16[4,32,96], index: 12, kind: input, shape index: {}]
  %s13 = inlined_call_operand.vmem [shape: f32[4,1,96], index: 13, kind: input, shape index: {}]
  %s14 = inlined_call_operand.vmem [shape: bf16[4,32,32], index: 14, kind: input, shape index: {}]
  %s15 = inlined_call_operand.vmem [shape: f32[4,1,32], index: 15, kind: input, shape index: {}]
  %s16 = inlined_call_operand.vmem [shape: f32[4,1,32], index: 16, kind: input, shape index: {}]
  %s17 = inlined_call_operand.vmem [shape: f32[4,1,32], index: 17, kind: input, shape index: {}]
  %s18 = inlined_call_operand.vmem [shape: bf16[4,32,32], index: 18, kind: input, shape index: {}]
  %s19 = inlined_call_operand.vmem [shape: f32[4,1,32], index: 19, kind: input, shape index: {}]
  %s20 = inlined_call_operand.vmem [shape: bf16[4,32,32], index: 20, kind: input, shape index: {}]
  %s21 = inlined_call_operand.vmem [shape: f32[4,1,32], index: 21, kind: input, shape index: {}]
  %s22 = inlined_call_operand.vmem [shape: f32[1,32], index: 22, kind: input, shape index: {}]
  %s23 = inlined_call_operand.vmem [shape: f32[1,32], index: 23, kind: input, shape index: {}]
  %s24 = inlined_call_operand.vmem [shape: bf16[32,128], index: 24, kind: input, shape index: {}]
  %s25 = inlined_call_operand.hbm [shape: f32[2,8,128], index: 25, kind: output, shape index: {}]
  %s26 = sld [smem:[#allocation0]]
  $region141: #{trans_dynamic_forward.1} parent=0
    _
  %s28 = ssub.s32 1, %s26
  %s29 = scalar_select 0, %s28, %s26
  $region1: #{trans_dynamic_forward.1} parent=0
    #allocation4 [shape = 'u8[8192]{0}', space=vmem, size = 0x2000, scoped, tag = 'output window, operand 0, single buffered']
    #allocation5 [shape = 's32[2]{0}', space=sflag, size = 0x8, scoped, tag = 'scoped memory for trans_dynamic_forward.1']
    %30 = vsyncpa [#allocation5], 0
    loop: start=0, step=1, limit=6
    $region2: #{trans_dynamic_forward.1} parent=1 // loop_pre_header
      _
    $region3: #{trans_dynamic_forward.1} parent=1 // loop_header
      %s32 = sphi 0, %s36
      %p33 = scmp.ge.s32.totalorder %s32, 6
      %s39 = sphi 0, %s51
      %s40 = sphi 0, %s47
      %s41 = sphi 0, %s39
      %s42 = sphi 0, %s40
      %s43 = sphi 0, %s41
      %s44 = sphi 0, %s42
      %s54 = sphi 0, %s56
      %s57 = sphi 0, %s54
      %s58 = sphi 0, %s57
      %s74 = sphi 0, %s58
      %s80 = sphi 0, %s82
      %s83 = sphi 0, %s80
      %s84 = sphi 0, %s83
      %s100 = sphi 0, %s84
      %s106 = sphi 0, %s108
      %s109 = sphi 0, %s106
      %s110 = sphi 0, %s109
      %s126 = sphi 0, %s110
      %s132 = sphi 0, %s134
      %s135 = sphi 0, %s132
      %s136 = sphi 0, %s135
      %s152 = sphi 0, %s136
      %s156 = sphi 0, %s156
      %s158 = sphi 0, %s156
      %s159 = sphi 0, %s158
      %s173 = sphi 0, %s159
      %s177 = sphi 0, %s177
      %s179 = sphi 0, %s177
      %s180 = sphi 0, %s179
      %s194 = sphi 0, %s180
      %s198 = sphi 0, %s198
      %s200 = sphi 0, %s198
      %s201 = sphi 0, %s200
      %s215 = sphi 0, %s201
      %s219 = sphi 0, %s219
      %s221 = sphi 0, %s219
      %s222 = sphi 0, %s221
      %s236 = sphi 0, %s222
      %s240 = sphi 0, %s240
      %s242 = sphi 0, %s240
      %s243 = sphi 0, %s242
      %s257 = sphi 0, %s243
      %s261 = sphi 0, %s261
      %s263 = sphi 0, %s261
      %s264 = sphi 0, %s263
      %s278 = sphi 0, %s264
      %s284 = sphi 0, %s286
      %s287 = sphi 0, %s284
      %s288 = sphi 0, %s287
      %s304 = sphi 0, %s288
      %s310 = sphi 0, %s312
      %s313 = sphi 0, %s310
      %s314 = sphi 0, %s313
      %s330 = sphi 0, %s314
      %s336 = sphi 0, %s338
      %s339 = sphi 0, %s336
      %s340 = sphi 0, %s339
      %s356 = sphi 0, %s340
      %s362 = sphi 0, %s364
      %s365 = sphi 0, %s362
      %s366 = sphi 0, %s365
      %s382 = sphi 0, %s366
      %s388 = sphi 0, %s390
      %s391 = sphi 0, %s388
      %s392 = sphi 0, %s391
      %s408 = sphi 0, %s392
      %s414 = sphi 0, %s416
      %s417 = sphi 0, %s414
      %s418 = sphi 0, %s417
      %s434 = sphi 0, %s418
      %s440 = sphi 0, %s442
      %s443 = sphi 0, %s440
      %s444 = sphi 0, %s443
      %s460 = sphi 0, %s444
      %s466 = sphi 0, %s468
      %s469 = sphi 0, %s466
      %s470 = sphi 0, %s469
      %s486 = sphi 0, %s470
      %s492 = sphi 0, %s494
      %s495 = sphi 0, %s492
      %s496 = sphi 0, %s495
      %s512 = sphi 0, %s496
      %s518 = sphi 0, %s520
      %s521 = sphi 0, %s518
      %s522 = sphi 0, %s521
      %s538 = sphi 0, %s522
      %s544 = sphi 0, %s546
      %s547 = sphi 0, %s544
      %s548 = sphi 0, %s547
      %s564 = sphi 0, %s548
      %s570 = sphi 0, %s572
      %s573 = sphi 0, %s570
      %s574 = sphi 0, %s573
      %s590 = sphi 0, %s574
      %s594 = sphi 0, %s594
      %s596 = sphi 0, %s594
      %s597 = sphi 0, %s596
      %s611 = sphi 0, %s597
      %s615 = sphi 0, %s615
      %s617 = sphi 0, %s615
      %s618 = sphi 0, %s617
      %s632 = sphi 0, %s618
      %s636 = sphi 0, %s636
      %s638 = sphi 0, %s636
      %s639 = sphi 0, %s638
      %s653 = sphi 0, %s639
      %s659 = sphi 0, %s661
      %s662 = sphi 0, %s659
      %s663 = sphi 0, %s662
      %s679 = sphi 0, %s663
    $region4: #{trans_dynamic_forward.1} parent=1 // loop_header_branch
      %35 = sbr.rel (%p33) target = $region8
    $region5: #{trans_dynamic_forward.1} parent=1 // loop_body
      %s37 = ssub.s32 %s32, 1
      %s38 = ssub.s32 %s32, 2
      %s45 = sadd.s32 1, %s40
      %p46 = scmp.ge.s32.totalorder %s45, 4
      %s47 = scalar_select %p46, 0, %s45
      %s48 = sadd.s32 1, %s39
      %s49 = scalar_select %p46, %s48, %s39
      %p50 = scmp.ge.s32.totalorder %s49, 1
      %s51 = scalar_select %p50, 0, %s49
      %s52 = ssub.s32 %s39, %s51
      %p53 = scmp.eq.s32.totalorder %s52, 0
      %s55 = sadd.s32 %s54, 1
      %s56 = scalar_select %p53, %s54, %s55
      %p59 = pneg %p53
      %p60 = scmp.eq.s32.totalorder %s32, 3
      %p61 = por %p59, %p60
      %p62 = scmp.ne.s32.totalorder %s54, %s57
      %p63 = scmp.eq.s32.totalorder %s32, 0
      %p64 = por %p62, %p63
      %p65 = scmp.ne.s32.totalorder %s54, %s57
      %p66 = scmp.eq.s32.totalorder %s37, 3
      %p67 = por %p65, %p66
      %p68 = scmp.ne.s32.totalorder %s57, %s58
      %p69 = scmp.eq.s32.totalorder %s37, 0
      %p70 = por %p68, %p69
      %p71 = scmp.ne.s32.totalorder %s57, %s58
      %p72 = scmp.eq.s32.totalorder %s38, 3
      %p73 = por %p71, %p72
      %p75 = scmp.ne.s32.totalorder %s58, %s74
      %p76 = scmp.eq.s32.totalorder %s38, 0
      %p77 = por %p75, %p76
      %s78 = ssub.s32 %s39, %s51
      %p79 = scmp.eq.s32.totalorder %s78, 0
      %s81 = sadd.s32 %s80, 1
      %s82 = scalar_select %p79, %s80, %s81
      %p85 = pneg %p79
      %p86 = scmp.eq.s32.totalorder %s32, 3
      %p87 = por %p85, %p86
      %p88 = scmp.ne.s32.totalorder %s80, %s83
      %p89 = scmp.eq.s32.totalorder %s32, 0
      %p90 = por %p88, %p89
      %p91 = scmp.ne.s32.totalorder %s80, %s83
      %p92 = scmp.eq.s32.totalorder %s37, 3
      %p93 = por %p91, %p92
      %p94 = scmp.ne.s32.totalorder %s83, %s84
      %p95 = scmp.eq.s32.totalorder %s37, 0
      %p96 = por %p94, %p95
      %p97 = scmp.ne.s32.totalorder %s83, %s84
      %p98 = scmp.eq.s32.totalorder %s38, 3
      %p99 = por %p97, %p98
      %p101 = scmp.ne.s32.totalorder %s84, %s100
      %p102 = scmp.eq.s32.totalorder %s38, 0
      %p103 = por %p101, %p102
      %s104 = ssub.s32 %s39, %s51
      %p105 = scmp.eq.s32.totalorder %s104, 0
      %s107 = sadd.s32 %s106, 1
      %s108 = scalar_select %p105, %s106, %s107
      %p111 = pneg %p105
      %p112 = scmp.eq.s32.totalorder %s32, 3
      %p113 = por %p111, %p112
      %p114 = scmp.ne.s32.totalorder %s106, %s109
      %p115 = scmp.eq.s32.totalorder %s32, 0
      %p116 = por %p114, %p115
      %p117 = scmp.ne.s32.totalorder %s106, %s109
      %p118 = scmp.eq.s32.totalorder %s37, 3
      %p119 = por %p117, %p118
      %p120 = scmp.ne.s32.totalorder %s109, %s110
      %p121 = scmp.eq.s32.totalorder %s37, 0
      %p122 = por %p120, %p121
      %p123 = scmp.ne.s32.totalorder %s109, %s110
      %p124 = scmp.eq.s32.totalorder %s38, 3
      %p125 = por %p123, %p124
      %p127 = scmp.ne.s32.totalorder %s110, %s126
      %p128 = scmp.eq.s32.totalorder %s38, 0
      %p129 = por %p127, %p128
      %s130 = ssub.s32 %s39, %s51
      %p131 = scmp.eq.s32.totalorder %s130, 0
      %s133 = sadd.s32 %s132, 1
      %s134 = scalar_select %p131, %s132, %s133
      %p137 = pneg %p131
      %p138 = scmp.eq.s32.totalorder %s32, 3
      %p139 = por %p137, %p138
      %p140 = scmp.ne.s32.totalorder %s132, %s135
      %p141 = scmp.eq.s32.totalorder %s32, 0
      %p142 = por %p140, %p141
      %p143 = scmp.ne.s32.totalorder %s132, %s135
      %p144 = scmp.eq.s32.totalorder %s37, 3
      %p145 = por %p143, %p144
      %p146 = scmp.ne.s32.totalorder %s135, %s136
      %p147 = scmp.eq.s32.totalorder %s37, 0
      %p148 = por %p146, %p147
      %p149 = scmp.ne.s32.totalorder %s135, %s136
      %p150 = scmp.eq.s32.totalorder %s38, 3
      %p151 = por %p149, %p150
      %p153 = scmp.ne.s32.totalorder %s136, %s152
      %p154 = scmp.eq.s32.totalorder %s38, 0
      %p155 = por %p153, %p154
      %s157 = sadd.s32 %s156, 1
      %p160 = scmp.eq.s32.totalorder %s32, 3
      %p161 = scmp.ne.s32.totalorder %s156, %s158
      %p162 = scmp.eq.s32.totalorder %s32, 0
      %p163 = por %p161, %p162
      %p164 = scmp.ne.s32.totalorder %s156, %s158
      %p165 = scmp.eq.s32.totalorder %s37, 3
      %p166 = por %p164, %p165
      %p167 = scmp.ne.s32.totalorder %s158, %s159
      %p168 = scmp.eq.s32.totalorder %s37, 0
      %p169 = por %p167, %p168
      %p170 = scmp.ne.s32.totalorder %s158, %s159
      %p171 = scmp.eq.s32.totalorder %s38, 3
      %p172 = por %p170, %p171
      %p174 = scmp.ne.s32.totalorder %s159, %s173
      %p175 = scmp.eq.s32.totalorder %s38, 0
      %p176 = por %p174, %p175
      %s178 = sadd.s32 %s177, 1
      %p181 = scmp.eq.s32.totalorder %s32, 3
      %p182 = scmp.ne.s32.totalorder %s177, %s179
      %p183 = scmp.eq.s32.totalorder %s32, 0
      %p184 = por %p182, %p183
      %p185 = scmp.ne.s32.totalorder %s177, %s179
      %p186 = scmp.eq.s32.totalorder %s37, 3
      %p187 = por %p185, %p186
      %p188 = scmp.ne.s32.totalorder %s179, %s180
      %p189 = scmp.eq.s32.totalorder %s37, 0
      %p190 = por %p188, %p189
      %p191 = scmp.ne.s32.totalorder %s179, %s180
      %p192 = scmp.eq.s32.totalorder %s38, 3
      %p193 = por %p191, %p192
      %p195 = scmp.ne.s32.totalorder %s180, %s194
      %p196 = scmp.eq.s32.totalorder %s38, 0
      %p197 = por %p195, %p196
      %s199 = sadd.s32 %s198, 1
      %p202 = scmp.eq.s32.totalorder %s32, 3
      %p203 = scmp.ne.s32.totalorder %s198, %s200
      %p204 = scmp.eq.s32.totalorder %s32, 0
      %p205 = por %p203, %p204
      %p206 = scmp.ne.s32.totalorder %s198, %s200
      %p207 = scmp.eq.s32.totalorder %s37, 3
      %p208 = por %p206, %p207
      %p209 = scmp.ne.s32.totalorder %s200, %s201
      %p210 = scmp.eq.s32.totalorder %s37, 0
      %p211 = por %p209, %p210
      %p212 = scmp.ne.s32.totalorder %s200, %s201
      %p213 = scmp.eq.s32.totalorder %s38, 3
      %p214 = por %p212, %p213
      %p216 = scmp.ne.s32.totalorder %s201, %s215
      %p217 = scmp.eq.s32.totalorder %s38, 0
      %p218 = por %p216, %p217
      %s220 = sadd.s32 %s219, 1
      %p223 = scmp.eq.s32.totalorder %s32, 3
      %p224 = scmp.ne.s32.totalorder %s219, %s221
      %p225 = scmp.eq.s32.totalorder %s32, 0
      %p226 = por %p224, %p225
      %p227 = scmp.ne.s32.totalorder %s219, %s221
      %p228 = scmp.eq.s32.totalorder %s37, 3
      %p229 = por %p227, %p228
      %p230 = scmp.ne.s32.totalorder %s221, %s222
      %p231 = scmp.eq.s32.totalorder %s37, 0
      %p232 = por %p230, %p231
      %p233 = scmp.ne.s32.totalorder %s221, %s222
      %p234 = scmp.eq.s32.totalorder %s38, 3
      %p235 = por %p233, %p234
      %p237 = scmp.ne.s32.totalorder %s222, %s236
      %p238 = scmp.eq.s32.totalorder %s38, 0
      %p239 = por %p237, %p238
      %s241 = sadd.s32 %s240, 1
      %p244 = scmp.eq.s32.totalorder %s32, 3
      %p245 = scmp.ne.s32.totalorder %s240, %s242
      %p246 = scmp.eq.s32.totalorder %s32, 0
      %p247 = por %p245, %p246
      %p248 = scmp.ne.s32.totalorder %s240, %s242
      %p249 = scmp.eq.s32.totalorder %s37, 3
      %p250 = por %p248, %p249
      %p251 = scmp.ne.s32.totalorder %s242, %s243
      %p252 = scmp.eq.s32.totalorder %s37, 0
      %p253 = por %p251, %p252
      %p254 = scmp.ne.s32.totalorder %s242, %s243
      %p255 = scmp.eq.s32.totalorder %s38, 3
      %p256 = por %p254, %p255
      %p258 = scmp.ne.s32.totalorder %s243, %s257
      %p259 = scmp.eq.s32.totalorder %s38, 0
      %p260 = por %p258, %p259
      %s262 = sadd.s32 %s261, 1
      %p265 = scmp.eq.s32.totalorder %s32, 3
      %p266 = scmp.ne.s32.totalorder %s261, %s263
      %p267 = scmp.eq.s32.totalorder %s32, 0
      %p268 = por %p266, %p267
      %p269 = scmp.ne.s32.totalorder %s261, %s263
      %p270 = scmp.eq.s32.totalorder %s37, 3
      %p271 = por %p269, %p270
      %p272 = scmp.ne.s32.totalorder %s263, %s264
      %p273 = scmp.eq.s32.totalorder %s37, 0
      %p274 = por %p272, %p273
      %p275 = scmp.ne.s32.totalorder %s263, %s264
      %p276 = scmp.eq.s32.totalorder %s38, 3
      %p277 = por %p275, %p276
      %p279 = scmp.ne.s32.totalorder %s264, %s278
      %p280 = scmp.eq.s32.totalorder %s38, 0
      %p281 = por %p279, %p280
      %s282 = ssub.s32 %s40, %s47
      %p283 = scmp.eq.s32.totalorder %s282, 0
      %s285 = sadd.s32 %s284, 1
      %s286 = scalar_select %p283, %s284, %s285
      %p289 = pneg %p283
      %p290 = scmp.eq.s32.totalorder %s32, 3
      %p291 = por %p289, %p290
      %p292 = scmp.ne.s32.totalorder %s284, %s287
      %p293 = scmp.eq.s32.totalorder %s32, 0
      %p294 = por %p292, %p293
      %p295 = scmp.ne.s32.totalorder %s284, %s287
      %p296 = scmp.eq.s32.totalorder %s37, 3
      %p297 = por %p295, %p296
      %p298 = scmp.ne.s32.totalorder %s287, %s288
      %p299 = scmp.eq.s32.totalorder %s37, 0
      %p300 = por %p298, %p299
      %p301 = scmp.ne.s32.totalorder %s287, %s288
      %p302 = scmp.eq.s32.totalorder %s38, 3
      %p303 = por %p301, %p302
      %p305 = scmp.ne.s32.totalorder %s288, %s304
      %p306 = scmp.eq.s32.totalorder %s38, 0
      %p307 = por %p305, %p306
      %s308 = ssub.s32 %s40, %s47
      %p309 = scmp.eq.s32.totalorder %s308, 0
      %s311 = sadd.s32 %s310, 1
      %s312 = scalar_select %p309, %s310, %s311
      %p315 = pneg %p309
      %p316 = scmp.eq.s32.totalorder %s32, 3
      %p317 = por %p315, %p316
      %p318 = scmp.ne.s32.totalorder %s310, %s313
      %p319 = scmp.eq.s32.totalorder %s32, 0
      %p320 = por %p318, %p319
      %p321 = scmp.ne.s32.totalorder %s310, %s313
      %p322 = scmp.eq.s32.totalorder %s37, 3
      %p323 = por %p321, %p322
      %p324 = scmp.ne.s32.totalorder %s313, %s314
      %p325 = scmp.eq.s32.totalorder %s37, 0
      %p326 = por %p324, %p325
      %p327 = scmp.ne.s32.totalorder %s313, %s314
      %p328 = scmp.eq.s32.totalorder %s38, 3
      %p329 = por %p327, %p328
      %p331 = scmp.ne.s32.totalorder %s314, %s330
      %p332 = scmp.eq.s32.totalorder %s38, 0
      %p333 = por %p331, %p332
      %s334 = ssub.s32 %s40, %s47
      %p335 = scmp.eq.s32.totalorder %s334, 0
      %s337 = sadd.s32 %s336, 1
      %s338 = scalar_select %p335, %s336, %s337
      %p341 = pneg %p335
      %p342 = scmp.eq.s32.totalorder %s32, 3
      %p343 = por %p341, %p342
      %p344 = scmp.ne.s32.totalorder %s336, %s339
      %p345 = scmp.eq.s32.totalorder %s32, 0
      %p346 = por %p344, %p345
      %p347 = scmp.ne.s32.totalorder %s336, %s339
      %p348 = scmp.eq.s32.totalorder %s37, 3
      %p349 = por %p347, %p348
      %p350 = scmp.ne.s32.totalorder %s339, %s340
      %p351 = scmp.eq.s32.totalorder %s37, 0
      %p352 = por %p350, %p351
      %p353 = scmp.ne.s32.totalorder %s339, %s340
      %p354 = scmp.eq.s32.totalorder %s38, 3
      %p355 = por %p353, %p354
      %p357 = scmp.ne.s32.totalorder %s340, %s356
      %p358 = scmp.eq.s32.totalorder %s38, 0
      %p359 = por %p357, %p358
      %s360 = ssub.s32 %s40, %s47
      %p361 = scmp.eq.s32.totalorder %s360, 0
      %s363 = sadd.s32 %s362, 1
      %s364 = scalar_select %p361, %s362, %s363
      %p367 = pneg %p361
      %p368 = scmp.eq.s32.totalorder %s32, 3
      %p369 = por %p367, %p368
      %p370 = scmp.ne.s32.totalorder %s362, %s365
      %p371 = scmp.eq.s32.totalorder %s32, 0
      %p372 = por %p370, %p371
      %p373 = scmp.ne.s32.totalorder %s362, %s365
      %p374 = scmp.eq.s32.totalorder %s37, 3
      %p375 = por %p373, %p374
      %p376 = scmp.ne.s32.totalorder %s365, %s366
      %p377 = scmp.eq.s32.totalorder %s37, 0
      %p378 = por %p376, %p377
      %p379 = scmp.ne.s32.totalorder %s365, %s366
      %p380 = scmp.eq.s32.totalorder %s38, 3
      %p381 = por %p379, %p380
      %p383 = scmp.ne.s32.totalorder %s366, %s382
      %p384 = scmp.eq.s32.totalorder %s38, 0
      %p385 = por %p383, %p384
      %s386 = ssub.s32 %s40, %s47
      %p387 = scmp.eq.s32.totalorder %s386, 0
      %s389 = sadd.s32 %s388, 1
      %s390 = scalar_select %p387, %s388, %s389
      %p393 = pneg %p387
      %p394 = scmp.eq.s32.totalorder %s32, 3
      %p395 = por %p393, %p394
      %p396 = scmp.ne.s32.totalorder %s388, %s391
      %p397 = scmp.eq.s32.totalorder %s32, 0
      %p398 = por %p396, %p397
      %p399 = scmp.ne.s32.totalorder %s388, %s391
      %p400 = scmp.eq.s32.totalorder %s37, 3
      %p401 = por %p399, %p400
      %p402 = scmp.ne.s32.totalorder %s391, %s392
      %p403 = scmp.eq.s32.totalorder %s37, 0
      %p404 = por %p402, %p403
      %p405 = scmp.ne.s32.totalorder %s391, %s392
      %p406 = scmp.eq.s32.totalorder %s38, 3
      %p407 = por %p405, %p406
      %p409 = scmp.ne.s32.totalorder %s392, %s408
      %p410 = scmp.eq.s32.totalorder %s38, 0
      %p411 = por %p409, %p410
      %s412 = ssub.s32 %s40, %s47
      %p413 = scmp.eq.s32.totalorder %s412, 0
      %s415 = sadd.s32 %s414, 1
      %s416 = scalar_select %p413, %s414, %s415
      %p419 = pneg %p413
      %p420 = scmp.eq.s32.totalorder %s32, 3
      %p421 = por %p419, %p420
      %p422 = scmp.ne.s32.totalorder %s414, %s417
      %p423 = scmp.eq.s32.totalorder %s32, 0
      %p424 = por %p422, %p423
      %p425 = scmp.ne.s32.totalorder %s414, %s417
      %p426 = scmp.eq.s32.totalorder %s37, 3
      %p427 = por %p425, %p426
      %p428 = scmp.ne.s32.totalorder %s417, %s418
      %p429 = scmp.eq.s32.totalorder %s37, 0
      %p430 = por %p428, %p429
      %p431 = scmp.ne.s32.totalorder %s417, %s418
      %p432 = scmp.eq.s32.totalorder %s38, 3
      %p433 = por %p431, %p432
      %p435 = scmp.ne.s32.totalorder %s418, %s434
      %p436 = scmp.eq.s32.totalorder %s38, 0
      %p437 = por %p435, %p436
      %s438 = ssub.s32 %s40, %s47
      %p439 = scmp.eq.s32.totalorder %s438, 0
      %s441 = sadd.s32 %s440, 1
      %s442 = scalar_select %p439, %s440, %s441
      %p445 = pneg %p439
      %p446 = scmp.eq.s32.totalorder %s32, 3
      %p447 = por %p445, %p446
      %p448 = scmp.ne.s32.totalorder %s440, %s443
      %p449 = scmp.eq.s32.totalorder %s32, 0
      %p450 = por %p448, %p449
      %p451 = scmp.ne.s32.totalorder %s440, %s443
      %p452 = scmp.eq.s32.totalorder %s37, 3
      %p453 = por %p451, %p452
      %p454 = scmp.ne.s32.totalorder %s443, %s444
      %p455 = scmp.eq.s32.totalorder %s37, 0
      %p456 = por %p454, %p455
      %p457 = scmp.ne.s32.totalorder %s443, %s444
      %p458 = scmp.eq.s32.totalorder %s38, 3
      %p459 = por %p457, %p458
      %p461 = scmp.ne.s32.totalorder %s444, %s460
      %p462 = scmp.eq.s32.totalorder %s38, 0
      %p463 = por %p461, %p462
      %s464 = ssub.s32 %s40, %s47
      %p465 = scmp.eq.s32.totalorder %s464, 0
      %s467 = sadd.s32 %s466, 1
      %s468 = scalar_select %p465, %s466, %s467
      %p471 = pneg %p465
      %p472 = scmp.eq.s32.totalorder %s32, 3
      %p473 = por %p471, %p472
      %p474 = scmp.ne.s32.totalorder %s466, %s469
      %p475 = scmp.eq.s32.totalorder %s32, 0
      %p476 = por %p474, %p475
      %p477 = scmp.ne.s32.totalorder %s466, %s469
      %p478 = scmp.eq.s32.totalorder %s37, 3
      %p479 = por %p477, %p478
      %p480 = scmp.ne.s32.totalorder %s469, %s470
      %p481 = scmp.eq.s32.totalorder %s37, 0
      %p482 = por %p480, %p481
      %p483 = scmp.ne.s32.totalorder %s469, %s470
      %p484 = scmp.eq.s32.totalorder %s38, 3
      %p485 = por %p483, %p484
      %p487 = scmp.ne.s32.totalorder %s470, %s486
      %p488 = scmp.eq.s32.totalorder %s38, 0
      %p489 = por %p487, %p488
      %s490 = ssub.s32 %s40, %s47
      %p491 = scmp.eq.s32.totalorder %s490, 0
      %s493 = sadd.s32 %s492, 1
      %s494 = scalar_select %p491, %s492, %s493
      %p497 = pneg %p491
      %p498 = scmp.eq.s32.totalorder %s32, 3
      %p499 = por %p497, %p498
      %p500 = scmp.ne.s32.totalorder %s492, %s495
      %p501 = scmp.eq.s32.totalorder %s32, 0
      %p502 = por %p500, %p501
      %p503 = scmp.ne.s32.totalorder %s492, %s495
      %p504 = scmp.eq.s32.totalorder %s37, 3
      %p505 = por %p503, %p504
      %p506 = scmp.ne.s32.totalorder %s495, %s496
      %p507 = scmp.eq.s32.totalorder %s37, 0
      %p508 = por %p506, %p507
      %p509 = scmp.ne.s32.totalorder %s495, %s496
      %p510 = scmp.eq.s32.totalorder %s38, 3
      %p511 = por %p509, %p510
      %p513 = scmp.ne.s32.totalorder %s496, %s512
      %p514 = scmp.eq.s32.totalorder %s38, 0
      %p515 = por %p513, %p514
      %s516 = ssub.s32 %s40, %s47
      %p517 = scmp.eq.s32.totalorder %s516, 0
      %s519 = sadd.s32 %s518, 1
      %s520 = scalar_select %p517, %s518, %s519
      %p523 = pneg %p517
      %p524 = scmp.eq.s32.totalorder %s32, 3
      %p525 = por %p523, %p524
      %p526 = scmp.ne.s32.totalorder %s518, %s521
      %p527 = scmp.eq.s32.totalorder %s32, 0
      %p528 = por %p526, %p527
      %p529 = scmp.ne.s32.totalorder %s518, %s521
      %p530 = scmp.eq.s32.totalorder %s37, 3
      %p531 = por %p529, %p530
      %p532 = scmp.ne.s32.totalorder %s521, %s522
      %p533 = scmp.eq.s32.totalorder %s37, 0
      %p534 = por %p532, %p533
      %p535 = scmp.ne.s32.totalorder %s521, %s522
      %p536 = scmp.eq.s32.totalorder %s38, 3
      %p537 = por %p535, %p536
      %p539 = scmp.ne.s32.totalorder %s522, %s538
      %p540 = scmp.eq.s32.totalorder %s38, 0
      %p541 = por %p539, %p540
      %s542 = ssub.s32 %s40, %s47
      %p543 = scmp.eq.s32.totalorder %s542, 0
      %s545 = sadd.s32 %s544, 1
      %s546 = scalar_select %p543, %s544, %s545
      %p549 = pneg %p543
      %p550 = scmp.eq.s32.totalorder %s32, 3
      %p551 = por %p549, %p550
      %p552 = scmp.ne.s32.totalorder %s544, %s547
      %p553 = scmp.eq.s32.totalorder %s32, 0
      %p554 = por %p552, %p553
      %p555 = scmp.ne.s32.totalorder %s544, %s547
      %p556 = scmp.eq.s32.totalorder %s37, 3
      %p557 = por %p555, %p556
      %p558 = scmp.ne.s32.totalorder %s547, %s548
      %p559 = scmp.eq.s32.totalorder %s37, 0
      %p560 = por %p558, %p559
      %p561 = scmp.ne.s32.totalorder %s547, %s548
      %p562 = scmp.eq.s32.totalorder %s38, 3
      %p563 = por %p561, %p562
      %p565 = scmp.ne.s32.totalorder %s548, %s564
      %p566 = scmp.eq.s32.totalorder %s38, 0
      %p567 = por %p565, %p566
      %s568 = ssub.s32 %s40, %s47
      %p569 = scmp.eq.s32.totalorder %s568, 0
      %s571 = sadd.s32 %s570, 1
      %s572 = scalar_select %p569, %s570, %s571
      %p575 = pneg %p569
      %p576 = scmp.eq.s32.totalorder %s32, 3
      %p577 = por %p575, %p576
      %p578 = scmp.ne.s32.totalorder %s570, %s573
      %p579 = scmp.eq.s32.totalorder %s32, 0
      %p580 = por %p578, %p579
      %p581 = scmp.ne.s32.totalorder %s570, %s573
      %p582 = scmp.eq.s32.totalorder %s37, 3
      %p583 = por %p581, %p582
      %p584 = scmp.ne.s32.totalorder %s573, %s574
      %p585 = scmp.eq.s32.totalorder %s37, 0
      %p586 = por %p584, %p585
      %p587 = scmp.ne.s32.totalorder %s573, %s574
      %p588 = scmp.eq.s32.totalorder %s38, 3
      %p589 = por %p587, %p588
      %p591 = scmp.ne.s32.totalorder %s574, %s590
      %p592 = scmp.eq.s32.totalorder %s38, 0
      %p593 = por %p591, %p592
      %s595 = sadd.s32 %s594, 1
      %p598 = scmp.eq.s32.totalorder %s32, 3
      %p599 = scmp.ne.s32.totalorder %s594, %s596
      %p600 = scmp.eq.s32.totalorder %s32, 0
      %p601 = por %p599, %p600
      %p602 = scmp.ne.s32.totalorder %s594, %s596
      %p603 = scmp.eq.s32.totalorder %s37, 3
      %p604 = por %p602, %p603
      %p605 = scmp.ne.s32.totalorder %s596, %s597
      %p606 = scmp.eq.s32.totalorder %s37, 0
      %p607 = por %p605, %p606
      %p608 = scmp.ne.s32.totalorder %s596, %s597
      %p609 = scmp.eq.s32.totalorder %s38, 3
      %p610 = por %p608, %p609
      %p612 = scmp.ne.s32.totalorder %s597, %s611
      %p613 = scmp.eq.s32.totalorder %s38, 0
      %p614 = por %p612, %p613
      %s616 = sadd.s32 %s615, 1
      %p619 = scmp.eq.s32.totalorder %s32, 3
      %p620 = scmp.ne.s32.totalorder %s615, %s617
      %p621 = scmp.eq.s32.totalorder %s32, 0
      %p622 = por %p620, %p621
      %p623 = scmp.ne.s32.totalorder %s615, %s617
      %p624 = scmp.eq.s32.totalorder %s37, 3
      %p625 = por %p623, %p624
      %p626 = scmp.ne.s32.totalorder %s617, %s618
      %p627 = scmp.eq.s32.totalorder %s37, 0
      %p628 = por %p626, %p627
      %p629 = scmp.ne.s32.totalorder %s617, %s618
      %p630 = scmp.eq.s32.totalorder %s38, 3
      %p631 = por %p629, %p630
      %p633 = scmp.ne.s32.totalorder %s618, %s632
      %p634 = scmp.eq.s32.totalorder %s38, 0
      %p635 = por %p633, %p634
      %s637 = sadd.s32 %s636, 1
      %p640 = scmp.eq.s32.totalorder %s32, 3
      %p641 = scmp.ne.s32.totalorder %s636, %s638
      %p642 = scmp.eq.s32.totalorder %s32, 0
      %p643 = por %p641, %p642
      %p644 = scmp.ne.s32.totalorder %s636, %s638
      %p645 = scmp.eq.s32.totalorder %s37, 3
      %p646 = por %p644, %p645
      %p647 = scmp.ne.s32.totalorder %s638, %s639
      %p648 = scmp.eq.s32.totalorder %s37, 0
      %p649 = por %p647, %p648
      %p650 = scmp.ne.s32.totalorder %s638, %s639
      %p651 = scmp.eq.s32.totalorder %s38, 3
      %p652 = por %p650, %p651
      %p654 = scmp.ne.s32.totalorder %s639, %s653
      %p655 = scmp.eq.s32.totalorder %s38, 0
      %p656 = por %p654, %p655
      %s657 = ssub.s32 %s39, %s51
      %p658 = scmp.eq.s32.totalorder %s657, 0
      %s660 = sadd.s32 %s659, 1
      %s661 = scalar_select %p658, %s659, %s660
      %p664 = pneg %p658
      %p665 = scmp.eq.s32.totalorder %s32, 3
      %p666 = por %p664, %p665
      %p667 = scmp.ne.s32.totalorder %s659, %s662
      %p668 = scmp.eq.s32.totalorder %s32, 0
      %p669 = por %p667, %p668
      %p670 = scmp.ne.s32.totalorder %s659, %s662
      %p671 = scmp.eq.s32.totalorder %s37, 3
      %p672 = por %p670, %p671
      %p673 = scmp.ne.s32.totalorder %s662, %s663
      %p674 = scmp.eq.s32.totalorder %s37, 0
      %p675 = por %p673, %p674
      %p676 = scmp.ne.s32.totalorder %s662, %s663
      %p677 = scmp.eq.s32.totalorder %s38, 3
      %p678 = por %p676, %p677
      %p680 = scmp.ne.s32.totalorder %s663, %s679
      %p681 = scmp.eq.s32.totalorder %s38, 0
      %p682 = por %p680, %p681
      %p683 = scmp.le.s32.totalorder 1, %s32
      %p684 = scmp.lt.s32.totalorder %s32, 5
      %p685 = pnand %p683, %p684
      %p686 = pneg %p685
      // Predicated region
      $region9: #{trans_dynamic_forward.1} parent=5 // pred_check
        _
      $region10: #{trans_dynamic_forward.1} parent=5 // pred_check_branch
        %688 = sbr.rel (%p685) target = $region12
      $region11: #{trans_dynamic_forward.1} parent=5 // pred_region
        %s689 = ssub.s32 %s32, 1
        // Predicated region
        $region13: #{trans_dynamic_forward.1} parent=11 // pred_check
          %p690 = pneg %p70
        $region14: #{trans_dynamic_forward.1} parent=11 // pred_check_branch
          %692 = sbr.rel (%p690) target = $region16
        $region15: #{trans_dynamic_forward.1} parent=11 // pred_region
          %s693 = smul.u32 2, %s41
          %p694 = scmp.lt.s32.totalorder %s693, 1
          %s695 = scalar_select %p694, %s693, 1
          %s696 = scalar_lea.vmem %s0, %s695
          %s697 = smul.u32 2, %s41
        $region16: #{trans_dynamic_forward.1} parent=11 // pred_fallthru
          _
        // Predicated region
        $region17: #{trans_dynamic_forward.1} parent=11 // pred_check
          %p698 = pneg %p96
        $region18: #{trans_dynamic_forward.1} parent=11 // pred_check_branch
          %700 = sbr.rel (%p698) target = $region20
        $region19: #{trans_dynamic_forward.1} parent=11 // pred_region
          %s701 = smul.u32 2, %s41
          %p702 = scmp.lt.s32.totalorder %s701, 1
          %s703 = scalar_select %p702, %s701, 1
          %s704 = smul.addr %s703, 8
          %s705 = scalar_lea.vmem %s1, %s704
          %s706 = smul.u32 2, %s41
        $region20: #{trans_dynamic_forward.1} parent=11 // pred_fallthru
          _
        // Predicated region
        $region21: #{trans_dynamic_forward.1} parent=11 // pred_check
          %p707 = pneg %p122
        $region22: #{trans_dynamic_forward.1} parent=11 // pred_check_branch
          %709 = sbr.rel (%p707) target = $region24
        $region23: #{trans_dynamic_forward.1} parent=11 // pred_region
          %s710 = smul.u32 2, %s41
          %p711 = scmp.lt.s32.totalorder %s710, 1
          %s712 = scalar_select %p711, %s710, 1
          %s713 = smul.addr %s712, 8
          %s714 = scalar_lea.vmem %s2, %s713
          %s715 = smul.u32 2, %s41
        $region24: #{trans_dynamic_forward.1} parent=11 // pred_fallthru
          _
        // Predicated region
        $region25: #{trans_dynamic_forward.1} parent=11 // pred_check
          %p716 = pneg %p148
        $region26: #{trans_dynamic_forward.1} parent=11 // pred_check_branch
          %718 = sbr.rel (%p716) target = $region28
        $region27: #{trans_dynamic_forward.1} parent=11 // pred_region
          %s719 = smul.u32 2, %s41
          %p720 = scmp.lt.s32.totalorder %s719, 1
          %s721 = scalar_select %p720, %s719, 1
          %s722 = scalar_lea.vmem %s3, %s721
          %s723 = smul.u32 2, %s41
        $region28: #{trans_dynamic_forward.1} parent=11 // pred_fallthru
          _
        // Predicated region
        $region29: #{trans_dynamic_forward.1} parent=11 // pred_check
          %p724 = pneg %p169
        $region30: #{trans_dynamic_forward.1} parent=11 // pred_check_branch
          %726 = sbr.rel (%p724) target = $region32
        $region31: #{trans_dynamic_forward.1} parent=11 // pred_region
          _
        $region32: #{trans_dynamic_forward.1} parent=11 // pred_fallthru
          _
        // Predicated region
        $region33: #{trans_dynamic_forward.1} parent=11 // pred_check
          %p727 = pneg %p190
        $region34: #{trans_dynamic_forward.1} parent=11 // pred_check_branch
          %729 = sbr.rel (%p727) target = $region36
        $region35: #{trans_dynamic_forward.1} parent=11 // pred_region
          _
        $region36: #{trans_dynamic_forward.1} parent=11 // pred_fallthru
          _
        // Predicated region
        $region37: #{trans_dynamic_forward.1} parent=11 // pred_check
          %p730 = pneg %p211
        $region38: #{trans_dynamic_forward.1} parent=11 // pred_check_branch
          %732 = sbr.rel (%p730) target = $region40
        $region39: #{trans_dynamic_forward.1} parent=11 // pred_region
          _
        $region40: #{trans_dynamic_forward.1} parent=11 // pred_fallthru
          _
        // Predicated region
        $region41: #{trans_dynamic_forward.1} parent=11 // pred_check
          %p733 = pneg %p232
        $region42: #{trans_dynamic_forward.1} parent=11 // pred_check_branch
          %735 = sbr.rel (%p733) target = $region44
        $region43: #{trans_dynamic_forward.1} parent=11 // pred_region
          _
        $region44: #{trans_dynamic_forward.1} parent=11 // pred_fallthru
          _
        // Predicated region
        $region45: #{trans_dynamic_forward.1} parent=11 // pred_check
          %p736 = pneg %p253
        $region46: #{trans_dynamic_forward.1} parent=11 // pred_check_branch
          %738 = sbr.rel (%p736) target = $region48
        $region47: #{trans_dynamic_forward.1} parent=11 // pred_region
          _
        $region48: #{trans_dynamic_forward.1} parent=11 // pred_fallthru
          _
        // Predicated region
        $region49: #{trans_dynamic_forward.1} parent=11 // pred_check
          %p739 = pneg %p274
        $region50: #{trans_dynamic_forward.1} parent=11 // pred_check_branch
          %741 = sbr.rel (%p739) target = $region52
        $region51: #{trans_dynamic_forward.1} parent=11 // pred_region
          _
        $region52: #{trans_dynamic_forward.1} parent=11 // pred_fallthru
          _
        // Predicated region
        $region53: #{trans_dynamic_forward.1} parent=11 // pred_check
          %p742 = pneg %p607
        $region54: #{trans_dynamic_forward.1} parent=11 // pred_check_branch
          %744 = sbr.rel (%p742) target = $region56
        $region55: #{trans_dynamic_forward.1} parent=11 // pred_region
          _
        $region56: #{trans_dynamic_forward.1} parent=11 // pred_fallthru
          _
        // Predicated region
        $region57: #{trans_dynamic_forward.1} parent=11 // pred_check
          %p745 = pneg %p628
        $region58: #{trans_dynamic_forward.1} parent=11 // pred_check_branch
          %747 = sbr.rel (%p745) target = $region60
        $region59: #{trans_dynamic_forward.1} parent=11 // pred_region
          _
        $region60: #{trans_dynamic_forward.1} parent=11 // pred_fallthru
          _
        // Predicated region
        $region61: #{trans_dynamic_forward.1} parent=11 // pred_check
          %p748 = pneg %p649
        $region62: #{trans_dynamic_forward.1} parent=11 // pred_check_branch
          %750 = sbr.rel (%p748) target = $region64
        $region63: #{trans_dynamic_forward.1} parent=11 // pred_region
          _
        $region64: #{trans_dynamic_forward.1} parent=11 // pred_fallthru
          _
      $region12: #{trans_dynamic_forward.1} parent=5 // pred_fallthru
        _
      %p751 = scmp.lt.s32.totalorder %s32, 4
      // Predicated region
      $region65: #{trans_dynamic_forward.1} parent=5 // pred_check
        %p752 = pneg %p751
      $region66: #{trans_dynamic_forward.1} parent=5 // pred_check_branch
        %754 = sbr.rel (%p752) target = $region68
      $region67: #{trans_dynamic_forward.1} parent=5 // pred_region
        // Predicated region
        $region69: #{trans_dynamic_forward.1} parent=67 // pred_check
          %p755 = pneg %p294
        $region70: #{trans_dynamic_forward.1} parent=67 // pred_check_branch
          %757 = sbr.rel (%p755) target = $region72
        $region71: #{trans_dynamic_forward.1} parent=67 // pred_region
          %p758 = scmp.lt.s32.totalorder %s40, 3
          %s759 = scalar_select %p758, %s40, 3
          %s760 = scalar_lea.vmem %s10, %s759
        $region72: #{trans_dynamic_forward.1} parent=67 // pred_fallthru
          _
        // Predicated region
        $region73: #{trans_dynamic_forward.1} parent=67 // pred_check
          %p761 = pneg %p320
        $region74: #{trans_dynamic_forward.1} parent=67 // pred_check_branch
          %763 = sbr.rel (%p761) target = $region76
        $region75: #{trans_dynamic_forward.1} parent=67 // pred_region
          %p764 = scmp.lt.s32.totalorder %s40, 3
          %s765 = scalar_select %p764, %s40, 3
          %s766 = scalar_lea.vmem %s11, %s765
        $region76: #{trans_dynamic_forward.1} parent=67 // pred_fallthru
          _
        // Predicated region
        $region77: #{trans_dynamic_forward.1} parent=67 // pred_check
          %p767 = pneg %p346
        $region78: #{trans_dynamic_forward.1} parent=67 // pred_check_branch
          %769 = sbr.rel (%p767) target = $region80
        $region79: #{trans_dynamic_forward.1} parent=67 // pred_region
          %p770 = scmp.lt.s32.totalorder %s40, 3
          %s771 = scalar_select %p770, %s40, 3
          %s772 = smul.addr %s771, 4
          %s773 = smul.addr %s772, 4
          %s774 = scalar_lea.vmem %s12, %s773
        $region80: #{trans_dynamic_forward.1} parent=67 // pred_fallthru
          _
        // Predicated region
        $region81: #{trans_dynamic_forward.1} parent=67 // pred_check
          %p775 = pneg %p372
        $region82: #{trans_dynamic_forward.1} parent=67 // pred_check_branch
          %777 = sbr.rel (%p775) target = $region84
        $region83: #{trans_dynamic_forward.1} parent=67 // pred_region
          %p778 = scmp.lt.s32.totalorder %s40, 3
          %s779 = scalar_select %p778, %s40, 3
          %s780 = scalar_lea.vmem %s13, %s779
        $region84: #{trans_dynamic_forward.1} parent=67 // pred_fallthru
          _
        // Predicated region
        $region85: #{trans_dynamic_forward.1} parent=67 // pred_check
          %p781 = pneg %p398
        $region86: #{trans_dynamic_forward.1} parent=67 // pred_check_branch
          %783 = sbr.rel (%p781) target = $region88
        $region87: #{trans_dynamic_forward.1} parent=67 // pred_region
          %p784 = scmp.lt.s32.totalorder %s40, 3
          %s785 = scalar_select %p784, %s40, 3
          %s786 = smul.addr %s785, 4
          %s787 = smul.addr %s786, 4
          %s788 = scalar_lea.vmem %s14, %s787
        $region88: #{trans_dynamic_forward.1} parent=67 // pred_fallthru
          _
        // Predicated region
        $region89: #{trans_dynamic_forward.1} parent=67 // pred_check
          %p789 = pneg %p424
        $region90: #{trans_dynamic_forward.1} parent=67 // pred_check_branch
          %791 = sbr.rel (%p789) target = $region92
        $region91: #{trans_dynamic_forward.1} parent=67 // pred_region
          %p792 = scmp.lt.s32.totalorder %s40, 3
          %s793 = scalar_select %p792, %s40, 3
          %s794 = scalar_lea.vmem %s15, %s793
        $region92: #{trans_dynamic_forward.1} parent=67 // pred_fallthru
          _
        // Predicated region
        $region93: #{trans_dynamic_forward.1} parent=67 // pred_check
          %p795 = pneg %p450
        $region94: #{trans_dynamic_forward.1} parent=67 // pred_check_branch
          %797 = sbr.rel (%p795) target = $region96
        $region95: #{trans_dynamic_forward.1} parent=67 // pred_region
          %p798 = scmp.lt.s32.totalorder %s40, 3
          %s799 = scalar_select %p798, %s40, 3
          %s800 = scalar_lea.vmem %s16, %s799
        $region96: #{trans_dynamic_forward.1} parent=67 // pred_fallthru
          _
        // Predicated region
        $region97: #{trans_dynamic_forward.1} parent=67 // pred_check
          %p801 = pneg %p476
        $region98: #{trans_dynamic_forward.1} parent=67 // pred_check_branch
          %803 = sbr.rel (%p801) target = $region100
        $region99: #{trans_dynamic_forward.1} parent=67 // pred_region
          %p804 = scmp.lt.s32.totalorder %s40, 3
          %s805 = scalar_select %p804, %s40, 3
          %s806 = scalar_lea.vmem %s17, %s805
        $region100: #{trans_dynamic_forward.1} parent=67 // pred_fallthru
          _
        // Predicated region
        $region101: #{trans_dynamic_forward.1} parent=67 // pred_check
          %p807 = pneg %p502
        $region102: #{trans_dynamic_forward.1} parent=67 // pred_check_branch
          %809 = sbr.rel (%p807) target = $region104
        $region103: #{trans_dynamic_forward.1} parent=67 // pred_region
          %p810 = scmp.lt.s32.totalorder %s40, 3
          %s811 = scalar_select %p810, %s40, 3
          %s812 = smul.addr %s811, 4
          %s813 = smul.addr %s812, 4
          %s814 = scalar_lea.vmem %s18, %s813
        $region104: #{trans_dynamic_forward.1} parent=67 // pred_fallthru
          _
        // Predicated region
        $region105: #{trans_dynamic_forward.1} parent=67 // pred_check
          %p815 = pneg %p528
        $region106: #{trans_dynamic_forward.1} parent=67 // pred_check_branch
          %817 = sbr.rel (%p815) target = $region108
        $region107: #{trans_dynamic_forward.1} parent=67 // pred_region
          %p818 = scmp.lt.s32.totalorder %s40, 3
          %s819 = scalar_select %p818, %s40, 3
          %s820 = scalar_lea.vmem %s19, %s819
        $region108: #{trans_dynamic_forward.1} parent=67 // pred_fallthru
          _
        // Predicated region
        $region109: #{trans_dynamic_forward.1} parent=67 // pred_check
          %p821 = pneg %p554
        $region110: #{trans_dynamic_forward.1} parent=67 // pred_check_branch
          %823 = sbr.rel (%p821) target = $region112
        $region111: #{trans_dynamic_forward.1} parent=67 // pred_region
          %p824 = scmp.lt.s32.totalorder %s40, 3
          %s825 = scalar_select %p824, %s40, 3
          %s826 = smul.addr %s825, 4
          %s827 = smul.addr %s826, 4
          %s828 = scalar_lea.vmem %s20, %s827
        $region112: #{trans_dynamic_forward.1} parent=67 // pred_fallthru
          _
        // Predicated region
        $region113: #{trans_dynamic_forward.1} parent=67 // pred_check
          %p829 = pneg %p580
        $region114: #{trans_dynamic_forward.1} parent=67 // pred_check_branch
          %831 = sbr.rel (%p829) target = $region116
        $region115: #{trans_dynamic_forward.1} parent=67 // pred_region
          %p832 = scmp.lt.s32.totalorder %s40, 3
          %s833 = scalar_select %p832, %s40, 3
          %s834 = scalar_lea.vmem %s21, %s833
        $region116: #{trans_dynamic_forward.1} parent=67 // pred_fallthru
          _
      $region68: #{trans_dynamic_forward.1} parent=5 // pred_fallthru
        _
      %p835 = scmp.le.s32.totalorder 1, %s32
      %p836 = scmp.lt.s32.totalorder %s32, 5
      %p837 = pnand %p835, %p836
      %p838 = pneg %p837
      // Predicated region
      $region117: #{trans_dynamic_forward.1} parent=5 // pred_check
        _
      $region118: #{trans_dynamic_forward.1} parent=5 // pred_check_branch
        %840 = sbr.rel (%p837) target = $region120
      $region119: #{trans_dynamic_forward.1} parent=5 // pred_region
        %s841 = ssub.s32 %s32, 1
        %s842 = smul.u32 2, %s41
        %p843 = scmp.lt.s32.totalorder %s842, 1
        %s844 = scalar_select %p843, %s842, 1
        %s845 = scalar_lea.vmem %s0, %s844
        %p846 = pneg %p70
        %p847 = pneg %p67
        %s848 = smul.u32 2, %s41
        %p849 = scmp.lt.s32.totalorder %s848, 1
        %s850 = scalar_select %p849, %s848, 1
        %s851 = smul.addr %s850, 8
        %s852 = scalar_lea.vmem %s1, %s851
        %p853 = pneg %p96
        %p854 = pneg %p93
        %s855 = smul.u32 2, %s41
        %p856 = scmp.lt.s32.totalorder %s855, 1
        %s857 = scalar_select %p856, %s855, 1
        %s858 = smul.addr %s857, 8
        %s859 = scalar_lea.vmem %s2, %s858
        %p860 = pneg %p122
        %p861 = pneg %p119
        %s862 = smul.u32 2, %s41
        %p863 = scmp.lt.s32.totalorder %s862, 1
        %s864 = scalar_select %p863, %s862, 1
        %s865 = scalar_lea.vmem %s3, %s864
        %p866 = pneg %p148
        %p867 = pneg %p145
        %p868 = pneg %p169
        %p869 = pneg %p166
        %p870 = pneg %p190
        %p871 = pneg %p187
        %p872 = pneg %p211
        %p873 = pneg %p208
        %p874 = pneg %p232
        %p875 = pneg %p229
        %p876 = pneg %p253
        %p877 = pneg %p250
        %p878 = pneg %p274
        %p879 = pneg %p271
        %p880 = scmp.lt.s32.totalorder %s42, 3
        %s881 = scalar_select %p880, %s42, 3
        %s882 = scalar_lea.vmem %s10, %s881
        %p883 = pneg %p300
        %p884 = pneg %p297
        %p885 = scmp.lt.s32.totalorder %s42, 3
        %s886 = scalar_select %p885, %s42, 3
        %s887 = scalar_lea.vmem %s11, %s886
        %p888 = pneg %p326
        %p889 = pneg %p323
        %p890 = scmp.lt.s32.totalorder %s42, 3
        %s891 = scalar_select %p890, %s42, 3
        %s892 = smul.addr %s891, 4
        %s893 = smul.addr %s892, 4
        %s894 = scalar_lea.vmem %s12, %s893
        %p895 = pneg %p352
        %p896 = pneg %p349
        %p897 = scmp.lt.s32.totalorder %s42, 3
        %s898 = scalar_select %p897, %s42, 3
        %s899 = scalar_lea.vmem %s13, %s898
        %p900 = pneg %p378
        %p901 = pneg %p375
        %p902 = scmp.lt.s32.totalorder %s42, 3
        %s903 = scalar_select %p902, %s42, 3
        %s904 = smul.addr %s903, 4
        %s905 = smul.addr %s904, 4
        %s906 = scalar_lea.vmem %s14, %s905
        %p907 = pneg %p404
        %p908 = pneg %p401
        %p909 = scmp.lt.s32.totalorder %s42, 3
        %s910 = scalar_select %p909, %s42, 3
        %s911 = scalar_lea.vmem %s15, %s910
        %p912 = pneg %p430
        %p913 = pneg %p427
        %p914 = scmp.lt.s32.totalorder %s42, 3
        %s915 = scalar_select %p914, %s42, 3
        %s916 = scalar_lea.vmem %s16, %s915
        %p917 = pneg %p456
        %p918 = pneg %p453
        %p919 = scmp.lt.s32.totalorder %s42, 3
        %s920 = scalar_select %p919, %s42, 3
        %s921 = scalar_lea.vmem %s17, %s920
        %p922 = pneg %p482
        %p923 = pneg %p479
        %p924 = scmp.lt.s32.totalorder %s42, 3
        %s925 = scalar_select %p924, %s42, 3
        %s926 = smul.addr %s925, 4
        %s927 = smul.addr %s926, 4
        %s928 = scalar_lea.vmem %s18, %s927
        %p929 = pneg %p508
        %p930 = pneg %p505
        %p931 = scmp.lt.s32.totalorder %s42, 3
        %s932 = scalar_select %p931, %s42, 3
        %s933 = scalar_lea.vmem %s19, %s932
        %p934 = pneg %p534
        %p935 = pneg %p531
        %p936 = scmp.lt.s32.totalorder %s42, 3
        %s937 = scalar_select %p936, %s42, 3
        %s938 = smul.addr %s937, 4
        %s939 = smul.addr %s938, 4
        %s940 = scalar_lea.vmem %s20, %s939
        %p941 = pneg %p560
        %p942 = pneg %p557
        %p943 = scmp.lt.s32.totalorder %s42, 3
        %s944 = scalar_select %p943, %s42, 3
        %s945 = scalar_lea.vmem %s21, %s944
        %p946 = pneg %p586
        %p947 = pneg %p583
        %p948 = pneg %p607
        %p949 = pneg %p604
        %p950 = pneg %p628
        %p951 = pneg %p625
        %p952 = pneg %p649
        %p953 = pneg %p646
        %p954 = pneg %p675
        %p955 = pneg %p672
        %s956 = smul.u32 2, %s41
        %p957 = scmp.lt.s32.totalorder %s956, 1
        %s958 = scalar_select %p957, %s956, 1
        %s959 = scalar_lea.vmem %s0, %s958
        %s960 = smul.u32 2, %s41
        %s961 = smul.u32 2, %s41
        %p962 = scmp.lt.s32.totalorder %s961, 1
        %s963 = scalar_select %p962, %s961, 1
        %s964 = smul.addr %s963, 8
        %s965 = scalar_lea.vmem %s1, %s964
        %s966 = smul.u32 2, %s41
        %s967 = smul.u32 2, %s41
        %p968 = scmp.lt.s32.totalorder %s967, 1
        %s969 = scalar_select %p968, %s967, 1
        %s970 = smul.addr %s969, 8
        %s971 = scalar_lea.vmem %s2, %s970
        %s972 = smul.u32 2, %s41
        %s973 = smul.u32 2, %s41
        %p974 = scmp.lt.s32.totalorder %s973, 1
        %s975 = scalar_select %p974, %s973, 1
        %s976 = scalar_lea.vmem %s3, %s975
        %s977 = smul.u32 2, %s41
        %p978 = scmp.lt.s32.totalorder %s42, 3
        %s979 = scalar_select %p978, %s42, 3
        %s980 = scalar_lea.vmem %s10, %s979
        %p981 = scmp.lt.s32.totalorder %s42, 3
        %s982 = scalar_select %p981, %s42, 3
        %s983 = scalar_lea.vmem %s11, %s982
        %p984 = scmp.lt.s32.totalorder %s42, 3
        %s985 = scalar_select %p984, %s42, 3
        %s986 = smul.addr %s985, 4
        %s987 = smul.addr %s986, 4
        %s988 = scalar_lea.vmem %s12, %s987
        %p989 = scmp.lt.s32.totalorder %s42, 3
        %s990 = scalar_select %p989, %s42, 3
        %s991 = scalar_lea.vmem %s13, %s990
        %p992 = scmp.lt.s32.totalorder %s42, 3
        %s993 = scalar_select %p992, %s42, 3
        %s994 = smul.addr %s993, 4
        %s995 = smul.addr %s994, 4
        %s996 = scalar_lea.vmem %s14, %s995
        %p997 = scmp.lt.s32.totalorder %s42, 3
        %s998 = scalar_select %p997, %s42, 3
        %s999 = scalar_lea.vmem %s15, %s998
        %p1000 = scmp.lt.s32.totalorder %s42, 3
        %s1001 = scalar_select %p1000, %s42, 3
        %s1002 = scalar_lea.vmem %s16, %s1001
        %p1003 = scmp.lt.s32.totalorder %s42, 3
        %s1004 = scalar_select %p1003, %s42, 3
        %s1005 = scalar_lea.vmem %s17, %s1004
        %p1006 = scmp.lt.s32.totalorder %s42, 3
        %s1007 = scalar_select %p1006, %s42, 3
        %s1008 = smul.addr %s1007, 4
        %s1009 = smul.addr %s1008, 4
        %s1010 = scalar_lea.vmem %s18, %s1009
        %p1011 = scmp.lt.s32.totalorder %s42, 3
        %s1012 = scalar_select %p1011, %s42, 3
        %s1013 = scalar_lea.vmem %s19, %s1012
        %p1014 = scmp.lt.s32.totalorder %s42, 3
        %s1015 = scalar_select %p1014, %s42, 3
        %s1016 = smul.addr %s1015, 4
        %s1017 = smul.addr %s1016, 4
        %s1018 = scalar_lea.vmem %s20, %s1017
        %p1019 = scmp.lt.s32.totalorder %s42, 3
        %s1020 = scalar_select %p1019, %s42, 3
        %s1021 = scalar_lea.vmem %s21, %s1020
        %s1022 = smul.u32 2, %s41
        %p1024 = scmp.eq.s32.totalorder %s42, 0
        // Predicated region
        $region121: #{trans_dynamic_forward.1} parent=119 // pred_check
          %p1025 = pneg %p1024
        $region122: #{trans_dynamic_forward.1} parent=119 // pred_check_branch
          %1027 = sbr.rel (%p1025) target = $region124
        $region123: #{trans_dynamic_forward.1} parent=119 // pred_region
          %v1028 = vld [vmem:[%s959] sm:$0x1]
          %v1029 = vld [vmem:[%s959 + $0x1] sm:$0x1]
          %v1030 = vpack.c.bf16 %v1028, %v1028
          %v1031 = vpack.c.bf16 %v1029, %v1029
          %v1032 = vld [vmem:[%s5] sm:$0xf]
          %v1035 = vunpack.c.l.b16 %v1030
          %v1036 = vunpack.c.l.b16 %v1031
          %v1037 = vrot.slane %v1036, 7
          %vm1038 = vcmask 1041409
          %v1039 = vsel %vm1038, %v1037, %v1035
          %v1040 = vpack.c.b16 %v1039, %v1039
          %vm1041 = vcmask 64512
          %v1043 = vsel %vm1041, %v1040, 0
          %vm1045 = vcmask 1043456
          %v1047 = vsel %vm1045, %v1032, 0
          %1049 = vmatpush.bf16.msra.mxu0 0
          %1050 = vmatpush.bf16.msra.mxu0 0
          %1051 = vmatpush.bf16.msra.mxu0 0
          %1052 = vmatpush.bf16.msra.mxu0 0
          %1053 = vmatpush.bf16.msra.mxu0 0
          %1054 = vmatpush.bf16.msra.mxu0 0
          %1055 = vmatpush.bf16.msra.mxu0 0
          %1056 = vmatpush.bf16.msra.mxu0 %v1047
          %1057 = vmatmul.bf16.gmra.mxu0 %v1043
          %v1058 = vpop.f32.mrf.mxu0
          %v1059 = vadd.f32 0.0, %v1058
          %v1060 = vpop.f32.mrf.mxu0
          %1061 = vdwg.mxu0
          %v1062 = vld [vmem:[%s965] sm:$0xff]
          %v1063 = vld [vmem:[%s965 + $0x8] sm:$0xff]
          %v1064 = vpack.c.bf16 %v1063, %v1062
          %v1065 = vld [vmem:[%s6] sm:$0x7]
          %v1066 = vld [vmem:[%s971] sm:$0xff]
          %v1067 = vld [vmem:[%s971 + $0x8] sm:$0xff]
          %v1068 = vld [vmem:[%s7] sm:$0x1]
          %1070 = vset.pattern.permute.xlu0 0
          %1071 = vperm.xlu0 %1070, %v1066
          %v1072 = vpop.permute.xlu0 %1071
          %1075 = vset.pattern.permute.xlu0 0
          %1076 = vperm.xlu0 %1075, %v1067
          %v1077 = vpop.permute.xlu0 %1076
          %v1080 = vperm.slane %v1068, 0
          %v1082 = vmul.f32 %v1072, %v1080
          %v1083 = vmul.f32 %v1077, %v1080
          %vm1084 = vcmask 48128
          %v1086 = vsel %vm1084, %v1064, 0
          %vm1088 = vcmask 1042432
          %v1090 = vsel %vm1088, %v1065, 0
          %1092 = vmatpush.bf16.msra.mxu0 0
          %1093 = vmatpush.bf16.msra.mxu0 0
          %1094 = vmatpush.bf16.msra.mxu0 0
          %1095 = vmatpush.bf16.msra.mxu0 0
          %1096 = vmatpush.bf16.msra.mxu0 0
          %1097 = vmatpush.bf16.msra.mxu0 0
          %1098 = vmatpush.bf16.msra.mxu0 0
          %1099 = vmatpush.bf16.msra.mxu0 %v1090
          %1100 = vmatmul.bf16.gmra.mxu0 %v1086
          %v1101 = vpop.f32.mrf.mxu0
          %v1102 = vadd.f32 %v1082, %v1101
          %v1103 = vpop.f32.mrf.mxu0
          %v1104 = vadd.f32 %v1083, %v1103
          %1105 = vdwg.mxu0
          %v1107 = vrot.slane %v1059, 1
          %v1108 = vperm.slane %v1059, 0
          %v1109 = vperm.slane %v1107, 0
          %v1112 = vadd.f32 %v1102, %v1108
          %v1113 = vadd.f32 %v1104, %v1109
          %v1114 = vld [vmem:[%s4] sm:$0xff]
          %v1115 = vadd.f32 %v1112, %v1114
          %v1116 = vadd.f32 %v1113, %v1114
          %v1117 = vld [vmem:[%s8] sm:$0x1]
          %v1118 = vld [vmem:[%s9] sm:$0x1]
          %vm1119 = vcmask 261120
          %v1120 = vsel %vm1119, %v1115, 0.0
          %1121 = vadd.xlane.f32.xlu0 %v1120
          %v1122 = vpop.xlane.xlu0 %1121
          %v1123 = vsel %vm1119, %v1116, 0.0
          %1124 = vadd.xlane.f32.xlu0 %v1123
          %v1125 = vpop.xlane.xlu0 %1124
          %v1126 = vrcp.pop 32.0
          %v1127 = vmul.f32 32.0, %v1126
          %v1128 = vsub.f32 1.0, %v1127
          %v1129 = vmul.f32 %v1126, %v1128
          %v1130 = vadd.f32 %v1126, %v1129
          %vm1131 = vweird.f32 %v1126
          %v1132 = vsel %vm1131, %v1126, %v1130
          %v1133 = vmul.f32 %v1122, %v1132
          %v1134 = vmul.f32 %v1125, %v1132
          %v1135 = vmul.f32 %v1115, %v1115
          %v1136 = vmul.f32 %v1116, %v1116
          %v1137 = vsel %vm1119, %v1135, 0.0
          %1138 = vadd.xlane.f32.xlu0 %v1137
          %v1139 = vpop.xlane.xlu0 %1138
          %v1140 = vsel %vm1119, %v1136, 0.0
          %1141 = vadd.xlane.f32.xlu0 %v1140
          %v1142 = vpop.xlane.xlu0 %1141
          %v1143 = vmul.f32 %v1139, %v1132
          %v1144 = vmul.f32 %v1142, %v1132
          %v1145 = vmul.f32 %v1133, %v1133
          %v1146 = vmul.f32 %v1134, %v1134
          %v1147 = vsub.f32 %v1143, %v1145
          %v1148 = vsub.f32 %v1144, %v1146
          %v1149 = vmax.f32 %v1147, 0.0
          %v1150 = vmax.f32 %v1148, 0.0
          %v1151 = vsub.f32 %v1115, %v1133
          %v1152 = vsub.f32 %v1116, %v1134
          %v1153 = vadd.f32 %v1149, 1e-05
          %v1154 = vadd.f32 %v1150, 1e-05
          %v1155 = vrsqrt.pop %v1153
          %v1156 = vmul.f32 %v1155, %v1153
          %v1157 = vmul.f32 %v1156, %v1155
          %v1158 = vmul.f32 0.5, %v1157
          %v1159 = vsub.f32 1.5, %v1158
          %v1160 = vmul.f32 %v1155, %v1159
          %vm1161 = vweird.f32 %v1153
          %vm1162 = vweird.f32 %v1155
          %vm1163 = vmor %vm1161, %vm1162
          %v1164 = vsel %vm1163, %v1155, %v1160
          %v1165 = vrsqrt.pop %v1154
          %v1166 = vmul.f32 %v1165, %v1154
          %v1167 = vmul.f32 %v1166, %v1165
          %v1168 = vmul.f32 0.5, %v1167
          %v1169 = vsub.f32 1.5, %v1168
          %v1170 = vmul.f32 %v1165, %v1169
          %vm1171 = vweird.f32 %v1154
          %vm1172 = vweird.f32 %v1165
          %vm1173 = vmor %vm1171, %vm1172
          %v1174 = vsel %vm1173, %v1165, %v1170
          %v1175 = vmul.f32 %v1151, %v1164
          %v1176 = vmul.f32 %v1152, %v1174
          %v1178 = vperm.slane %v1117, 0
          %v1180 = vmul.f32 %v1175, %v1178
          %v1181 = vmul.f32 %v1176, %v1178
          %v1183 = vperm.slane %v1118, 0
          %v1185 = vadd.f32 %v1180, %v1183
          %v1186 = vadd.f32 %v1181, %v1183
          %1187 = vst.msk [vmem:[#allocation2] sm:$0xff] %vm1119, %v1185
          %1188 = vst.msk [vmem:[#allocation2 + $0x8] sm:$0xff] %vm1119, %v1186
          %v1189 = vlaneseq
          %v1190 = vshrl.u32 %v1189, 7
          %v1191 = vlaneseq
          %v1192 = vand.u32 %v1191, 127
          %vm1193 = vcmp.gt.s32.totalorder %v1192, %v1190
          %v1194 = vsel %vm1193, -1e+30, 0.0
          %v1195 = vld [vmem:[%s976] sm:$0x1]
          %v1196 = vld [vmem:[%s976 + $0x1] sm:$0x1]
          %v1199 = vperm.slane %v1195, 0
          %v1200 = vperm.slane %v1196, 0
          %v1203 = vadd.f32 %v1194, %v1199
          %v1204 = vadd.f32 %v1194, %v1200
          %1205 = vst.msk [vmem:[#allocation3] sm:$0xff] %vm1041, %v1203
          %1206 = vst.msk [vmem:[#allocation3 + $0x8] sm:$0xff] %vm1041, %v1204
        $region124: #{trans_dynamic_forward.1} parent=119 // pred_fallthru
          _
        %v1207 = vld [vmem:[#allocation2] sm:$0xff]
        %v1208 = vld [vmem:[#allocation2 + $0x8] sm:$0xff]
        %v1209 = vld [vmem:[%s980] sm:$0x1]
        %v1210 = vld [vmem:[%s983] sm:$0x1]
        %vm1211 = vcmask 261120
        %v1212 = vsel %vm1211, %v1207, 0.0
        %1213 = vadd.xlane.f32.xlu0 %v1212
        %v1214 = vpop.xlane.xlu0 %1213
        %v1215 = vsel %vm1211, %v1208, 0.0
        %1216 = vadd.xlane.f32.xlu0 %v1215
        %v1217 = vpop.xlane.xlu0 %1216
        %v1218 = vrcp.pop 32.0
        %v1219 = vmul.f32 32.0, %v1218
        %v1220 = vsub.f32 1.0, %v1219
        %v1221 = vmul.f32 %v1218, %v1220
        %v1222 = vadd.f32 %v1218, %v1221
        %vm1223 = vweird.f32 %v1218
        %v1224 = vsel %vm1223, %v1218, %v1222
        %v1225 = vmul.f32 %v1214, %v1224
        %v1226 = vmul.f32 %v1217, %v1224
        %v1227 = vmul.f32 %v1207, %v1207
        %v1228 = vmul.f32 %v1208, %v1208
        %v1229 = vsel %vm1211, %v1227, 0.0
        %1230 = vadd.xlane.f32.xlu0 %v1229
        %v1231 = vpop.xlane.xlu0 %1230
        %v1232 = vsel %vm1211, %v1228, 0.0
        %1233 = vadd.xlane.f32.xlu0 %v1232
        %v1234 = vpop.xlane.xlu0 %1233
        %v1235 = vmul.f32 %v1231, %v1224
        %v1236 = vmul.f32 %v1234, %v1224
        %v1237 = vmul.f32 %v1225, %v1225
        %v1238 = vmul.f32 %v1226, %v1226
        %v1239 = vsub.f32 %v1235, %v1237
        %v1240 = vsub.f32 %v1236, %v1238
        %v1241 = vmax.f32 %v1239, 0.0
        %v1242 = vmax.f32 %v1240, 0.0
        %v1243 = vsub.f32 %v1207, %v1225
        %v1244 = vsub.f32 %v1208, %v1226
        %v1245 = vadd.f32 %v1241, 1e-05
        %v1246 = vadd.f32 %v1242, 1e-05
        %v1247 = vrsqrt.pop %v1245
        %v1248 = vmul.f32 %v1247, %v1245
        %v1249 = vmul.f32 %v1248, %v1247
        %v1250 = vmul.f32 0.5, %v1249
        %v1251 = vsub.f32 1.5, %v1250
        %v1252 = vmul.f32 %v1247, %v1251
        %vm1253 = vweird.f32 %v1245
        %vm1254 = vweird.f32 %v1247
        %vm1255 = vmor %vm1253, %vm1254
        %v1256 = vsel %vm1255, %v1247, %v1252
        %v1257 = vrsqrt.pop %v1246
        %v1258 = vmul.f32 %v1257, %v1246
        %v1259 = vmul.f32 %v1258, %v1257
        %v1260 = vmul.f32 0.5, %v1259
        %v1261 = vsub.f32 1.5, %v1260
        %v1262 = vmul.f32 %v1257, %v1261
        %vm1263 = vweird.f32 %v1246
        %vm1264 = vweird.f32 %v1257
        %vm1265 = vmor %vm1263, %vm1264
        %v1266 = vsel %vm1265, %v1257, %v1262
        %v1267 = vmul.f32 %v1243, %v1256
        %v1268 = vmul.f32 %v1244, %v1266
        %v1270 = vperm.slane %v1209, 0
        %v1272 = vmul.f32 %v1267, %v1270
        %v1273 = vmul.f32 %v1268, %v1270
        %v1275 = vperm.slane %v1210, 0
        %v1277 = vadd.f32 %v1272, %v1275
        %v1278 = vadd.f32 %v1273, %v1275
        %v1279 = vpack.c.bf16 %v1278, %v1277
        %v1280 = vld [vmem:[%s988] sm:$0xf]
        %v1281 = vld [vmem:[%s988 + $0x4] sm:$0xf]
        %v1282 = vld [vmem:[%s988 + $0x8] sm:$0xf]
        %v1283 = vld [vmem:[%s988 + $0xc] sm:$0xf]
        %v1284 = vld [vmem:[%s991] sm:$0x1]
        %v1286 = vperm.slane %v1284, 0
        %v1292 = vunpack.c.l.b16 %v1280
        %v1293 = vunpack.c.l.b16 %v1281
        %v1294 = vunpack.c.l.b16 %v1282
        %v1295 = vunpack.c.l.b16 %v1283
        %v1296 = vpack.c.b16 %v1293, %v1292
        %v1297 = vpack.c.b16 %v1295, %v1294
        %v1301 = vsel %vm1211, %v1279, 0
        %1303 = vmatpush.bf16.msra.mxu0 0
        %1304 = vmatpush.bf16.msra.mxu0 0
        %1305 = vmatpush.bf16.msra.mxu0 0
        %1306 = vmatpush.bf16.msra.mxu0 0
        %1307 = vmatpush.bf16.msra.mxu0 0
        %1308 = vmatpush.bf16.msra.mxu0 0
        %1309 = vmatpush.bf16.msra.mxu0 %v1297
        %1310 = vmatpush.bf16.msra.mxu0 %v1296
        %1311 = vmatmul.bf16.gmra.mxu0 %v1301
        %v1312 = vpop.f32.mrf.mxu0
        %v1313 = vadd.f32 %v1286, %v1312
        %v1314 = vpop.f32.mrf.mxu0
        %v1315 = vadd.f32 %v1286, %v1314
        %1316 = vdwg.mxu0
        %v1317 = vld [vmem:[#allocation3] sm:$0xff]
        %v1318 = vld [vmem:[#allocation3 + $0x8] sm:$0xff]
        %v1319 = vld [vmem:[%s996] sm:$0xf]
        %v1320 = vld [vmem:[%s996 + $0x4] sm:$0xf]
        %v1321 = vld [vmem:[%s996 + $0x8] sm:$0xf]
        %v1322 = vld [vmem:[%s996 + $0xc] sm:$0xf]
        %v1323 = vpack.c.bf16 %v1313, %v1313
        %v1324 = vpack.c.bf16 %v1315, %v1315
        %v1326 = vunpack.c.l.b16 %v1323
        %v1327 = vpack.c.b16 %v1326, %v1326
        %1328 = vrot.lane.b32.xlu0 %v1327, 96
        %v1329 = vpop.permute.xlu0 %1328
        %vm1330 = vcmask 64512
        %v1332 = vsel %vm1330, %v1323, 0
        %v1335 = vsel %vm1330, %v1329, 0
        %1337 = vmatpush.bf16.xpose.msra.mxu0 0
        %1338 = vmatpush.bf16.xpose.msra.mxu0 0
        %1339 = vmatpush.bf16.xpose.msra.mxu0 0
        %1340 = vmatpush.bf16.xpose.msra.mxu0 0
        %1341 = vmatpush.bf16.xpose.msra.mxu0 0
        %1342 = vmatpush.bf16.xpose.msra.mxu0 0
        %1343 = vmatpush.bf16.xpose.msra.mxu0 0
        %1344 = vmatpush.bf16.xpose.msra.mxu0 %v1335
        %1345 = vmatmul.bf16.gmra.mxu0 %v1332
        %v1346 = vpop.f32.mrf.mxu0
        %v1347 = vadd.f32 %v1317, %v1346
        %v1348 = vpop.f32.mrf.mxu0
        %1349 = vdwg.mxu0
        %v1351 = vunpack.c.l.b16 %v1324
        %v1352 = vpack.c.b16 %v1351, %v1351
        %1353 = vrot.lane.b32.xlu0 %v1352, 96
        %v1354 = vpop.permute.xlu0 %1353
        %v1356 = vsel %vm1330, %v1324, 0
        %v1359 = vsel %vm1330, %v1354, 0
        %1361 = vmatpush.bf16.xpose.msra.mxu0 0
        %1362 = vmatpush.bf16.xpose.msra.mxu0 0
        %1363 = vmatpush.bf16.xpose.msra.mxu0 0
        %1364 = vmatpush.bf16.xpose.msra.mxu0 0
        %1365 = vmatpush.bf16.xpose.msra.mxu0 0
        %1366 = vmatpush.bf16.xpose.msra.mxu0 0
        %1367 = vmatpush.bf16.xpose.msra.mxu0 0
        %1368 = vmatpush.bf16.xpose.msra.mxu0 %v1359
        %1369 = vmatmul.bf16.gmra.mxu0 %v1356
        %v1370 = vpop.f32.mrf.mxu0
        %v1371 = vadd.f32 %v1318, %v1370
        %v1372 = vpop.f32.mrf.mxu0
        %1373 = vdwg.mxu0
        %v1374 = vsel %vm1330, %v1347, -inf
        %1375 = vmax.xlane.f32.xlu0 %v1374
        %v1376 = vpop.xlane.xlu0 %1375
        %v1377 = vsel %vm1330, %v1371, -inf
        %1378 = vmax.xlane.f32.xlu0 %v1377
        %v1379 = vpop.xlane.xlu0 %1378
        %v1380 = vsub.f32 %v1347, %v1376
        %v1381 = vsub.f32 %v1371, %v1379
        %v1382 = vmul.f32 %v1380, 1.442695
        %v1383 = vpow.pop %v1382
        %v1384 = vmul.f32 %v1381, 1.442695
        %v1385 = vpow.pop %v1384
        %v1386 = vsel %vm1330, %v1383, 0.0
        %1387 = vadd.xlane.f32.xlu0 %v1386
        %v1388 = vpop.xlane.xlu0 %1387
        %v1389 = vsel %vm1330, %v1385, 0.0
        %1390 = vadd.xlane.f32.xlu0 %v1389
        %v1391 = vpop.xlane.xlu0 %1390
        %v1392 = vrcp.pop %v1388
        %v1393 = vrcp.pop %v1391
        %v1394 = vpack.c.bf16 %v1383, %v1383
        %v1395 = vpack.c.bf16 %v1385, %v1385
        %1396 = vrot.lane.b32.xlu0 %v1327, 64
        %v1397 = vpop.permute.xlu0 %1396
        %v1399 = vsel %vm1330, %v1394, 0
        %vm1401 = vcmask 1043456
        %v1403 = vsel %vm1401, %v1397, 0
        %1405 = vmatpush.bf16.msra.mxu0 0
        %1406 = vmatpush.bf16.msra.mxu0 0
        %1407 = vmatpush.bf16.msra.mxu0 0
        %1408 = vmatpush.bf16.msra.mxu0 0
        %1409 = vmatpush.bf16.msra.mxu0 0
        %1410 = vmatpush.bf16.msra.mxu0 0
        %1411 = vmatpush.bf16.msra.mxu0 0
        %1412 = vmatpush.bf16.msra.mxu0 %v1403
        %1413 = vmatmul.bf16.gmra.mxu0 %v1399
        %v1414 = vpop.f32.mrf.mxu0
        %v1415 = vadd.f32 0.0, %v1414
        %v1416 = vpop.f32.mrf.mxu0
        %1417 = vdwg.mxu0
        %1418 = vrot.lane.b32.xlu0 %v1352, 64
        %v1419 = vpop.permute.xlu0 %1418
        %v1421 = vsel %vm1330, %v1395, 0
        %v1424 = vsel %vm1401, %v1419, 0
        %1426 = vmatpush.bf16.msra.mxu0 0
        %1427 = vmatpush.bf16.msra.mxu0 0
        %1428 = vmatpush.bf16.msra.mxu0 0
        %1429 = vmatpush.bf16.msra.mxu0 0
        %1430 = vmatpush.bf16.msra.mxu0 0
        %1431 = vmatpush.bf16.msra.mxu0 0
        %1432 = vmatpush.bf16.msra.mxu0 0
        %1433 = vmatpush.bf16.msra.mxu0 %v1424
        %1434 = vmatmul.bf16.gmra.mxu0 %v1421
        %v1435 = vpop.f32.mrf.mxu0
        %v1436 = vadd.f32 0.0, %v1435
        %v1437 = vpop.f32.mrf.mxu0
        %1438 = vdwg.mxu0
        %v1439 = vmul.f32 %v1415, %v1392
        %v1440 = vmul.f32 %v1436, %v1393
        %v1441 = vpack.c.bf16 %v1440, %v1439
        %1442 = vrot.lane.b32.xlu0 %v1327, 120
        %v1443 = vpop.permute.xlu0 %1442
        %1444 = vrot.lane.b32.xlu0 %v1327, 88
        %v1445 = vpop.permute.xlu0 %1444
        %v1447 = vsel %vm1330, %v1443, 0
        %v1450 = vsel %vm1330, %v1445, 0
        %1452 = vmatpush.bf16.xpose.msra.mxu0 0
        %1453 = vmatpush.bf16.xpose.msra.mxu0 0
        %1454 = vmatpush.bf16.xpose.msra.mxu0 0
        %1455 = vmatpush.bf16.xpose.msra.mxu0 0
        %1456 = vmatpush.bf16.xpose.msra.mxu0 0
        %1457 = vmatpush.bf16.xpose.msra.mxu0 0
        %1458 = vmatpush.bf16.xpose.msra.mxu0 0
        %1459 = vmatpush.bf16.xpose.msra.mxu0 %v1450
        %1460 = vmatmul.bf16.gmra.mxu0 %v1447
        %v1461 = vpop.f32.mrf.mxu0
        %v1462 = vadd.f32 %v1317, %v1461
        %v1463 = vpop.f32.mrf.mxu0
        %1464 = vdwg.mxu0
        %1465 = vrot.lane.b32.xlu0 %v1352, 120
        %v1466 = vpop.permute.xlu0 %1465
        %1467 = vrot.lane.b32.xlu0 %v1352, 88
        %v1468 = vpop.permute.xlu0 %1467
        %v1470 = vsel %vm1330, %v1466, 0
        %v1473 = vsel %vm1330, %v1468, 0
        %1475 = vmatpush.bf16.xpose.msra.mxu0 0
        %1476 = vmatpush.bf16.xpose.msra.mxu0 0
        %1477 = vmatpush.bf16.xpose.msra.mxu0 0
        %1478 = vmatpush.bf16.xpose.msra.mxu0 0
        %1479 = vmatpush.bf16.xpose.msra.mxu0 0
        %1480 = vmatpush.bf16.xpose.msra.mxu0 0
        %1481 = vmatpush.bf16.xpose.msra.mxu0 0
        %1482 = vmatpush.bf16.xpose.msra.mxu0 %v1473
        %1483 = vmatmul.bf16.gmra.mxu0 %v1470
        %v1484 = vpop.f32.mrf.mxu0
        %v1485 = vadd.f32 %v1318, %v1484
        %v1486 = vpop.f32.mrf.mxu0
        %1487 = vdwg.mxu0
        %v1488 = vsel %vm1330, %v1462, -inf
        %1489 = vmax.xlane.f32.xlu0 %v1488
        %v1490 = vpop.xlane.xlu0 %1489
        %v1491 = vsel %vm1330, %v1485, -inf
        %1492 = vmax.xlane.f32.xlu0 %v1491
        %v1493 = vpop.xlane.xlu0 %1492
        %v1494 = vsub.f32 %v1462, %v1490
        %v1495 = vsub.f32 %v1485, %v1493
        %v1496 = vmul.f32 %v1494, 1.442695
        %v1497 = vpow.pop %v1496
        %v1498 = vmul.f32 %v1495, 1.442695
        %v1499 = vpow.pop %v1498
        %v1500 = vsel %vm1330, %v1497, 0.0
        %1501 = vadd.xlane.f32.xlu0 %v1500
        %v1502 = vpop.xlane.xlu0 %1501
        %v1503 = vsel %vm1330, %v1499, 0.0
        %1504 = vadd.xlane.f32.xlu0 %v1503
        %v1505 = vpop.xlane.xlu0 %1504
        %v1506 = vrcp.pop %v1502
        %v1507 = vrcp.pop %v1505
        %v1508 = vpack.c.bf16 %v1497, %v1497
        %v1509 = vpack.c.bf16 %v1499, %v1499
        %1510 = vrot.lane.b32.xlu0 %v1327, 56
        %v1511 = vpop.permute.xlu0 %1510
        %v1513 = vsel %vm1330, %v1508, 0
        %v1516 = vsel %vm1401, %v1511, 0
        %1518 = vmatpush.bf16.msra.mxu0 0
        %1519 = vmatpush.bf16.msra.mxu0 0
        %1520 = vmatpush.bf16.msra.mxu0 0
        %1521 = vmatpush.bf16.msra.mxu0 0
        %1522 = vmatpush.bf16.msra.mxu0 0
        %1523 = vmatpush.bf16.msra.mxu0 0
        %1524 = vmatpush.bf16.msra.mxu0 0
        %1525 = vmatpush.bf16.msra.mxu0 %v1516
        %1526 = vmatmul.bf16.gmra.mxu0 %v1513
        %v1527 = vpop.f32.mrf.mxu0
        %v1528 = vadd.f32 0.0, %v1527
        %v1529 = vpop.f32.mrf.mxu0
        %1530 = vdwg.mxu0
        %1531 = vrot.lane.b32.xlu0 %v1352, 56
        %v1532 = vpop.permute.xlu0 %1531
        %v1534 = vsel %vm1330, %v1509, 0
        %v1537 = vsel %vm1401, %v1532, 0
        %1539 = vmatpush.bf16.msra.mxu0 0
        %1540 = vmatpush.bf16.msra.mxu0 0
        %1541 = vmatpush.bf16.msra.mxu0 0
        %1542 = vmatpush.bf16.msra.mxu0 0
        %1543 = vmatpush.bf16.msra.mxu0 0
        %1544 = vmatpush.bf16.msra.mxu0 0
        %1545 = vmatpush.bf16.msra.mxu0 0
        %1546 = vmatpush.bf16.msra.mxu0 %v1537
        %1547 = vmatmul.bf16.gmra.mxu0 %v1534
        %v1548 = vpop.f32.mrf.mxu0
        %v1549 = vadd.f32 0.0, %v1548
        %v1550 = vpop.f32.mrf.mxu0
        %1551 = vdwg.mxu0
        %v1552 = vmul.f32 %v1528, %v1506
        %v1553 = vmul.f32 %v1549, %v1507
        %v1554 = vpack.c.bf16 %v1553, %v1552
        %v1556 = vsel %vm1330, %v1554, 0
        %v1559 = vsel %vm1401, %v1320, 0
        %1561 = vmatpush.bf16.msra.mxu0 0
        %1562 = vmatpush.bf16.msra.mxu0 0
        %1563 = vmatpush.bf16.msra.mxu0 0
        %1564 = vmatpush.bf16.msra.mxu0 0
        %1565 = vmatpush.bf16.msra.mxu0 0
        %1566 = vmatpush.bf16.msra.mxu0 0
        %1567 = vmatpush.bf16.msra.mxu0 0
        %1568 = vmatpush.bf16.msra.mxu0 %v1559
        %1569 = vmatmul.bf16.gmra.mxu0 %v1556
        %v1570 = vpop.f32.mrf.mxu0
        %v1571 = vadd.f32 0.0, %v1570
        %v1572 = vpop.f32.mrf.mxu0
        %v1573 = vadd.f32 0.0, %v1572
        %1574 = vdwg.mxu0
        %v1576 = vsel %vm1330, %v1441, 0
        %v1579 = vsel %vm1401, %v1319, 0
        %1581 = vmatpush.bf16.msra.mxu0 0
        %1582 = vmatpush.bf16.msra.mxu0 0
        %1583 = vmatpush.bf16.msra.mxu0 0
        %1584 = vmatpush.bf16.msra.mxu0 0
        %1585 = vmatpush.bf16.msra.mxu0 0
        %1586 = vmatpush.bf16.msra.mxu0 0
        %1587 = vmatpush.bf16.msra.mxu0 0
        %1588 = vmatpush.bf16.msra.mxu0 %v1579
        %1589 = vmatmul.bf16.gmra.mxu0 %v1576
        %v1590 = vpop.f32.mrf.mxu0
        %v1591 = vadd.f32 %v1571, %v1590
        %v1592 = vpop.f32.mrf.mxu0
        %v1593 = vadd.f32 %v1573, %v1592
        %1594 = vdwg.mxu0
        %1595 = vrot.lane.b32.xlu0 %v1327, 112
        %v1596 = vpop.permute.xlu0 %1595
        %1597 = vrot.lane.b32.xlu0 %v1327, 80
        %v1598 = vpop.permute.xlu0 %1597
        %v1600 = vsel %vm1330, %v1596, 0
        %v1603 = vsel %vm1330, %v1598, 0
        %1605 = vmatpush.bf16.xpose.msra.mxu0 0
        %1606 = vmatpush.bf16.xpose.msra.mxu0 0
        %1607 = vmatpush.bf16.xpose.msra.mxu0 0
        %1608 = vmatpush.bf16.xpose.msra.mxu0 0
        %1609 = vmatpush.bf16.xpose.msra.mxu0 0
        %1610 = vmatpush.bf16.xpose.msra.mxu0 0
        %1611 = vmatpush.bf16.xpose.msra.mxu0 0
        %1612 = vmatpush.bf16.xpose.msra.mxu0 %v1603
        %1613 = vmatmul.bf16.gmra.mxu0 %v1600
        %v1614 = vpop.f32.mrf.mxu0
        %v1615 = vadd.f32 %v1317, %v1614
        %v1616 = vpop.f32.mrf.mxu0
        %1617 = vdwg.mxu0
        %1618 = vrot.lane.b32.xlu0 %v1352, 112
        %v1619 = vpop.permute.xlu0 %1618
        %1620 = vrot.lane.b32.xlu0 %v1352, 80
        %v1621 = vpop.permute.xlu0 %1620
        %v1623 = vsel %vm1330, %v1619, 0
        %v1626 = vsel %vm1330, %v1621, 0
        %1628 = vmatpush.bf16.xpose.msra.mxu0 0
        %1629 = vmatpush.bf16.xpose.msra.mxu0 0
        %1630 = vmatpush.bf16.xpose.msra.mxu0 0
        %1631 = vmatpush.bf16.xpose.msra.mxu0 0
        %1632 = vmatpush.bf16.xpose.msra.mxu0 0
        %1633 = vmatpush.bf16.xpose.msra.mxu0 0
        %1634 = vmatpush.bf16.xpose.msra.mxu0 0
        %1635 = vmatpush.bf16.xpose.msra.mxu0 %v1626
        %1636 = vmatmul.bf16.gmra.mxu0 %v1623
        %v1637 = vpop.f32.mrf.mxu0
        %v1638 = vadd.f32 %v1318, %v1637
        %v1639 = vpop.f32.mrf.mxu0
        %1640 = vdwg.mxu0
        %v1641 = vsel %vm1330, %v1615, -inf
        %1642 = vmax.xlane.f32.xlu0 %v1641
        %v1643 = vpop.xlane.xlu0 %1642
        %v1644 = vsel %vm1330, %v1638, -inf
        %1645 = vmax.xlane.f32.xlu0 %v1644
        %v1646 = vpop.xlane.xlu0 %1645
        %v1647 = vsub.f32 %v1615, %v1643
        %v1648 = vsub.f32 %v1638, %v1646
        %v1649 = vmul.f32 %v1647, 1.442695
        %v1650 = vpow.pop %v1649
        %v1651 = vmul.f32 %v1648, 1.442695
        %v1652 = vpow.pop %v1651
        %v1653 = vsel %vm1330, %v1650, 0.0
        %1654 = vadd.xlane.f32.xlu0 %v1653
        %v1655 = vpop.xlane.xlu0 %1654
        %v1656 = vsel %vm1330, %v1652, 0.0
        %1657 = vadd.xlane.f32.xlu0 %v1656
        %v1658 = vpop.xlane.xlu0 %1657
        %v1659 = vrcp.pop %v1655
        %v1660 = vrcp.pop %v1658
        %v1661 = vpack.c.bf16 %v1650, %v1650
        %v1662 = vpack.c.bf16 %v1652, %v1652
        %1663 = vrot.lane.b32.xlu0 %v1327, 48
        %v1664 = vpop.permute.xlu0 %1663
        %v1666 = vsel %vm1330, %v1661, 0
        %v1669 = vsel %vm1401, %v1664, 0
        %1671 = vmatpush.bf16.msra.mxu0 0
        %1672 = vmatpush.bf16.msra.mxu0 0
        %1673 = vmatpush.bf16.msra.mxu0 0
        %1674 = vmatpush.bf16.msra.mxu0 0
        %1675 = vmatpush.bf16.msra.mxu0 0
        %1676 = vmatpush.bf16.msra.mxu0 0
        %1677 = vmatpush.bf16.msra.mxu0 0
        %1678 = vmatpush.bf16.msra.mxu0 %v1669
        %1679 = vmatmul.bf16.gmra.mxu0 %v1666
        %v1680 = vpop.f32.mrf.mxu0
        %v1681 = vadd.f32 0.0, %v1680
        %v1682 = vpop.f32.mrf.mxu0
        %1683 = vdwg.mxu0
        %1684 = vrot.lane.b32.xlu0 %v1352, 48
        %v1685 = vpop.permute.xlu0 %1684
        %v1687 = vsel %vm1330, %v1662, 0
        %v1690 = vsel %vm1401, %v1685, 0
        %1692 = vmatpush.bf16.msra.mxu0 0
        %1693 = vmatpush.bf16.msra.mxu0 0
        %1694 = vmatpush.bf16.msra.mxu0 0
        %1695 = vmatpush.bf16.msra.mxu0 0
        %1696 = vmatpush.bf16.msra.mxu0 0
        %1697 = vmatpush.bf16.msra.mxu0 0
        %1698 = vmatpush.bf16.msra.mxu0 0
        %1699 = vmatpush.bf16.msra.mxu0 %v1690
        %1700 = vmatmul.bf16.gmra.mxu0 %v1687
        %v1701 = vpop.f32.mrf.mxu0
        %v1702 = vadd.f32 0.0, %v1701
        %v1703 = vpop.f32.mrf.mxu0
        %1704 = vdwg.mxu0
        %v1705 = vmul.f32 %v1681, %v1659
        %v1706 = vmul.f32 %v1702, %v1660
        %v1707 = vpack.c.bf16 %v1706, %v1705
        %v1709 = vsel %vm1330, %v1707, 0
        %v1712 = vsel %vm1401, %v1321, 0
        %1714 = vmatpush.bf16.msra.mxu0 0
        %1715 = vmatpush.bf16.msra.mxu0 0
        %1716 = vmatpush.bf16.msra.mxu0 0
        %1717 = vmatpush.bf16.msra.mxu0 0
        %1718 = vmatpush.bf16.msra.mxu0 0
        %1719 = vmatpush.bf16.msra.mxu0 0
        %1720 = vmatpush.bf16.msra.mxu0 0
        %1721 = vmatpush.bf16.msra.mxu0 %v1712
        %1722 = vmatmul.bf16.gmra.mxu0 %v1709
        %v1723 = vpop.f32.mrf.mxu0
        %v1724 = vadd.f32 0.0, %v1723
        %v1725 = vpop.f32.mrf.mxu0
        %v1726 = vadd.f32 0.0, %v1725
        %1727 = vdwg.mxu0
        %v1728 = vadd.f32 %v1591, %v1724
        %v1729 = vadd.f32 %v1593, %v1726
        %1730 = vrot.lane.b32.xlu0 %v1327, 104
        %v1731 = vpop.permute.xlu0 %1730
        %1732 = vrot.lane.b32.xlu0 %v1327, 72
        %v1733 = vpop.permute.xlu0 %1732
        %v1735 = vsel %vm1330, %v1731, 0
        %v1738 = vsel %vm1330, %v1733, 0
        %1740 = vmatpush.bf16.xpose.msra.mxu0 0
        %1741 = vmatpush.bf16.xpose.msra.mxu0 0
        %1742 = vmatpush.bf16.xpose.msra.mxu0 0
        %1743 = vmatpush.bf16.xpose.msra.mxu0 0
        %1744 = vmatpush.bf16.xpose.msra.mxu0 0
        %1745 = vmatpush.bf16.xpose.msra.mxu0 0
        %1746 = vmatpush.bf16.xpose.msra.mxu0 0
        %1747 = vmatpush.bf16.xpose.msra.mxu0 %v1738
        %1748 = vmatmul.bf16.gmra.mxu0 %v1735
        %v1749 = vpop.f32.mrf.mxu0
        %v1750 = vadd.f32 %v1317, %v1749
        %v1751 = vpop.f32.mrf.mxu0
        %1752 = vdwg.mxu0
        %1753 = vrot.lane.b32.xlu0 %v1352, 104
        %v1754 = vpop.permute.xlu0 %1753
        %1755 = vrot.lane.b32.xlu0 %v1352, 72
        %v1756 = vpop.permute.xlu0 %1755
        %v1758 = vsel %vm1330, %v1754, 0
        %v1761 = vsel %vm1330, %v1756, 0
        %1763 = vmatpush.bf16.xpose.msra.mxu0 0
        %1764 = vmatpush.bf16.xpose.msra.mxu0 0
        %1765 = vmatpush.bf16.xpose.msra.mxu0 0
        %1766 = vmatpush.bf16.xpose.msra.mxu0 0
        %1767 = vmatpush.bf16.xpose.msra.mxu0 0
        %1768 = vmatpush.bf16.xpose.msra.mxu0 0
        %1769 = vmatpush.bf16.xpose.msra.mxu0 0
        %1770 = vmatpush.bf16.xpose.msra.mxu0 %v1761
        %1771 = vmatmul.bf16.gmra.mxu0 %v1758
        %v1772 = vpop.f32.mrf.mxu0
        %v1773 = vadd.f32 %v1318, %v1772
        %v1774 = vpop.f32.mrf.mxu0
        %1775 = vdwg.mxu0
        %v1776 = vsel %vm1330, %v1750, -inf
        %1777 = vmax.xlane.f32.xlu0 %v1776
        %v1778 = vpop.xlane.xlu0 %1777
        %v1779 = vsel %vm1330, %v1773, -inf
        %1780 = vmax.xlane.f32.xlu0 %v1779
        %v1781 = vpop.xlane.xlu0 %1780
        %v1782 = vsub.f32 %v1750, %v1778
        %v1783 = vsub.f32 %v1773, %v1781
        %v1784 = vmul.f32 %v1782, 1.442695
        %v1785 = vpow.pop %v1784
        %v1786 = vmul.f32 %v1783, 1.442695
        %v1787 = vpow.pop %v1786
        %v1788 = vsel %vm1330, %v1785, 0.0
        %1789 = vadd.xlane.f32.xlu0 %v1788
        %v1790 = vpop.xlane.xlu0 %1789
        %v1791 = vsel %vm1330, %v1787, 0.0
        %1792 = vadd.xlane.f32.xlu0 %v1791
        %v1793 = vpop.xlane.xlu0 %1792
        %v1794 = vrcp.pop %v1790
        %v1795 = vrcp.pop %v1793
        %v1796 = vpack.c.bf16 %v1785, %v1785
        %v1797 = vpack.c.bf16 %v1787, %v1787
        %1798 = vrot.lane.b32.xlu0 %v1327, 40
        %v1799 = vpop.permute.xlu0 %1798
        %v1801 = vsel %vm1330, %v1796, 0
        %v1804 = vsel %vm1401, %v1799, 0
        %1806 = vmatpush.bf16.msra.mxu0 0
        %1807 = vmatpush.bf16.msra.mxu0 0
        %1808 = vmatpush.bf16.msra.mxu0 0
        %1809 = vmatpush.bf16.msra.mxu0 0
        %1810 = vmatpush.bf16.msra.mxu0 0
        %1811 = vmatpush.bf16.msra.mxu0 0
        %1812 = vmatpush.bf16.msra.mxu0 0
        %1813 = vmatpush.bf16.msra.mxu0 %v1804
        %1814 = vmatmul.bf16.gmra.mxu0 %v1801
        %v1815 = vpop.f32.mrf.mxu0
        %v1816 = vadd.f32 0.0, %v1815
        %v1817 = vpop.f32.mrf.mxu0
        %1818 = vdwg.mxu0
        %1819 = vrot.lane.b32.xlu0 %v1352, 40
        %v1820 = vpop.permute.xlu0 %1819
        %v1822 = vsel %vm1330, %v1797, 0
        %v1825 = vsel %vm1401, %v1820, 0
        %1827 = vmatpush.bf16.msra.mxu0 0
        %1828 = vmatpush.bf16.msra.mxu0 0
        %1829 = vmatpush.bf16.msra.mxu0 0
        %1830 = vmatpush.bf16.msra.mxu0 0
        %1831 = vmatpush.bf16.msra.mxu0 0
        %1832 = vmatpush.bf16.msra.mxu0 0
        %1833 = vmatpush.bf16.msra.mxu0 0
        %1834 = vmatpush.bf16.msra.mxu0 %v1825
        %1835 = vmatmul.bf16.gmra.mxu0 %v1822
        %v1836 = vpop.f32.mrf.mxu0
        %v1837 = vadd.f32 0.0, %v1836
        %v1838 = vpop.f32.mrf.mxu0
        %1839 = vdwg.mxu0
        %v1840 = vmul.f32 %v1816, %v1794
        %v1841 = vmul.f32 %v1837, %v1795
        %v1842 = vpack.c.bf16 %v1841, %v1840
        %v1844 = vsel %vm1330, %v1842, 0
        %v1847 = vsel %vm1401, %v1322, 0
        %1849 = vmatpush.bf16.msra.mxu0 0
        %1850 = vmatpush.bf16.msra.mxu0 0
        %1851 = vmatpush.bf16.msra.mxu0 0
        %1852 = vmatpush.bf16.msra.mxu0 0
        %1853 = vmatpush.bf16.msra.mxu0 0
        %1854 = vmatpush.bf16.msra.mxu0 0
        %1855 = vmatpush.bf16.msra.mxu0 0
        %1856 = vmatpush.bf16.msra.mxu0 %v1847
        %1857 = vmatmul.bf16.gmra.mxu0 %v1844
        %v1858 = vpop.f32.mrf.mxu0
        %v1859 = vadd.f32 0.0, %v1858
        %v1860 = vpop.f32.mrf.mxu0
        %v1861 = vadd.f32 0.0, %v1860
        %1862 = vdwg.mxu0
        %v1863 = vadd.f32 %v1728, %v1859
        %v1864 = vadd.f32 %v1729, %v1861
        %v1865 = vadd.f32 %v1207, %v1863
        %v1866 = vadd.f32 %v1208, %v1864
        %v1867 = vld [vmem:[%s999] sm:$0x1]
        %v1869 = vperm.slane %v1867, 0
        %v1871 = vadd.f32 %v1865, %v1869
        %v1872 = vadd.f32 %v1866, %v1869
        %v1873 = vld [vmem:[%s1002] sm:$0x1]
        %v1874 = vld [vmem:[%s1005] sm:$0x1]
        %v1875 = vsel %vm1211, %v1871, 0.0
        %1876 = vadd.xlane.f32.xlu0 %v1875
        %v1877 = vpop.xlane.xlu0 %1876
        %v1878 = vsel %vm1211, %v1872, 0.0
        %1879 = vadd.xlane.f32.xlu0 %v1878
        %v1880 = vpop.xlane.xlu0 %1879
        %v1881 = vmul.f32 %v1877, %v1224
        %v1882 = vmul.f32 %v1880, %v1224
        %v1883 = vmul.f32 %v1871, %v1871
        %v1884 = vmul.f32 %v1872, %v1872
        %v1885 = vsel %vm1211, %v1883, 0.0
        %1886 = vadd.xlane.f32.xlu0 %v1885
        %v1887 = vpop.xlane.xlu0 %1886
        %v1888 = vsel %vm1211, %v1884, 0.0
        %1889 = vadd.xlane.f32.xlu0 %v1888
        %v1890 = vpop.xlane.xlu0 %1889
        %v1891 = vmul.f32 %v1887, %v1224
        %v1892 = vmul.f32 %v1890, %v1224
        %v1893 = vmul.f32 %v1881, %v1881
        %v1894 = vmul.f32 %v1882, %v1882
        %v1895 = vsub.f32 %v1891, %v1893
        %v1896 = vsub.f32 %v1892, %v1894
        %v1897 = vmax.f32 %v1895, 0.0
        %v1898 = vmax.f32 %v1896, 0.0
        %v1899 = vsub.f32 %v1871, %v1881
        %v1900 = vsub.f32 %v1872, %v1882
        %v1901 = vadd.f32 %v1897, 1e-05
        %v1902 = vadd.f32 %v1898, 1e-05
        %v1903 = vrsqrt.pop %v1901
        %v1904 = vmul.f32 %v1903, %v1901
        %v1905 = vmul.f32 %v1904, %v1903
        %v1906 = vmul.f32 0.5, %v1905
        %v1907 = vsub.f32 1.5, %v1906
        %v1908 = vmul.f32 %v1903, %v1907
        %vm1909 = vweird.f32 %v1901
        %vm1910 = vweird.f32 %v1903
        %vm1911 = vmor %vm1909, %vm1910
        %v1912 = vsel %vm1911, %v1903, %v1908
        %v1913 = vrsqrt.pop %v1902
        %v1914 = vmul.f32 %v1913, %v1902
        %v1915 = vmul.f32 %v1914, %v1913
        %v1916 = vmul.f32 0.5, %v1915
        %v1917 = vsub.f32 1.5, %v1916
        %v1918 = vmul.f32 %v1913, %v1917
        %vm1919 = vweird.f32 %v1902
        %vm1920 = vweird.f32 %v1913
        %vm1921 = vmor %vm1919, %vm1920
        %v1922 = vsel %vm1921, %v1913, %v1918
        %v1923 = vmul.f32 %v1899, %v1912
        %v1924 = vmul.f32 %v1900, %v1922
        %v1926 = vperm.slane %v1873, 0
        %v1928 = vmul.f32 %v1923, %v1926
        %v1929 = vmul.f32 %v1924, %v1926
        %v1931 = vperm.slane %v1874, 0
        %v1933 = vadd.f32 %v1928, %v1931
        %v1934 = vadd.f32 %v1929, %v1931
        %v1935 = vpack.c.bf16 %v1934, %v1933
        %v1936 = vld [vmem:[%s1010] sm:$0xf]
        %v1937 = vld [vmem:[%s1010 + $0x4] sm:$0xf]
        %v1938 = vld [vmem:[%s1010 + $0x8] sm:$0xf]
        %v1939 = vld [vmem:[%s1010 + $0xc] sm:$0xf]
        %v1940 = vld [vmem:[%s1013] sm:$0x1]
        %v1942 = vperm.slane %v1940, 0
        %v1948 = vunpack.c.l.b16 %v1936
        %v1949 = vunpack.c.l.b16 %v1937
        %v1950 = vunpack.c.l.b16 %v1938
        %v1951 = vunpack.c.l.b16 %v1939
        %v1952 = vpack.c.b16 %v1949, %v1948
        %v1953 = vpack.c.b16 %v1951, %v1950
        %v1957 = vsel %vm1211, %v1935, 0
        %1959 = vmatpush.bf16.msra.mxu0 0
        %1960 = vmatpush.bf16.msra.mxu0 0
        %1961 = vmatpush.bf16.msra.mxu0 0
        %1962 = vmatpush.bf16.msra.mxu0 0
        %1963 = vmatpush.bf16.msra.mxu0 0
        %1964 = vmatpush.bf16.msra.mxu0 0
        %1965 = vmatpush.bf16.msra.mxu0 %v1953
        %1966 = vmatpush.bf16.msra.mxu0 %v1952
        %1967 = vmatmul.bf16.gmra.mxu0 %v1957
        %v1968 = vpop.f32.mrf.mxu0
        %v1969 = vadd.f32 %v1942, %v1968
        %v1970 = vpop.f32.mrf.mxu0
        %v1971 = vadd.f32 %v1942, %v1970
        %1972 = vdwg.mxu0
        %v1973 = vmul.f32 %v1969, 0.5
        %v1974 = vmul.f32 %v1971, 0.5
        %v1975 = vmul.f32 %v1969, 0.70710677
        %v1976 = vmul.f32 %v1971, 0.70710677
        %v1977 = vmul.f32 %v1975, %v1975
        %v1978 = vmin.f32 16.0, %v1977
        %v1979 = vmul.f32 %v1978, 2.1237322e-06
        %v1980 = vadd.f32 %v1979, 0.00028619796
        %v1981 = vmul.f32 %v1978, %v1980
        %v1982 = vadd.f32 %v1981, 0.0036580483
        %v1983 = vmul.f32 %v1978, %v1982
        %v1984 = vadd.f32 %v1983, 0.05243302
        %v1985 = vmul.f32 %v1978, %v1984
        %v1986 = vadd.f32 %v1985, 0.18741608
        %v1987 = vmul.f32 %v1978, %v1986
        %v1988 = vadd.f32 %v1987, 1.1283791
        %v1989 = vmul.f32 %v1975, %v1988
        %v1990 = vmul.f32 %v1978, 3.8918573e-05
        %v1991 = vadd.f32 %v1990, 0.001143296
        %v1992 = vmul.f32 %v1978, %v1991
        %v1993 = vadd.f32 %v1992, 0.014752088
        %v1994 = vmul.f32 %v1978, %v1993
        %v1995 = vadd.f32 %v1994, 0.112945676
        %v1996 = vmul.f32 %v1978, %v1995
        %v1997 = vadd.f32 %v1996, 0.4994258
        %v1998 = vmul.f32 %v1978, %v1997
        %v1999 = vadd.f32 %v1998, 1.0
        %v2000 = vrcp.pop %v1999
        %v2001 = vmul.f32 %v1999, %v2000
        %v2002 = vsub.f32 1.0, %v2001
        %v2003 = vmul.f32 %v2000, %v2002
        %v2004 = vadd.f32 %v2000, %v2003
        %vm2005 = vweird.f32 %v1999
        %vm2006 = vweird.f32 %v2000
        %vm2007 = vmor %vm2005, %vm2006
        %v2008 = vsel %vm2007, %v2000, %v2004
        %v2009 = vand.u32 2147483647, %v1999
        %vm2010 = vcmp.eq.f32.partialorder %v2009, 8.507059e+37
        %v2011 = vand.u32 %v1999, 2147483648
        %v2012 = vor.u32 1.1754944e-38, %v2011
        %v2013 = vsel %vm2010, %v2012, %v2008
        %v2014 = vmul.f32 %v1989, %v2013
        %v2015 = vmin.f32 %v2014, 1.0
        %v2016 = vmax.f32 %v2015, -1.0
        %v2017 = vmul.f32 %v1976, %v1976
        %v2018 = vmin.f32 16.0, %v2017
        %v2019 = vmul.f32 %v2018, 2.1237322e-06
        %v2020 = vadd.f32 %v2019, 0.00028619796
        %v2021 = vmul.f32 %v2018, %v2020
        %v2022 = vadd.f32 %v2021, 0.0036580483
        %v2023 = vmul.f32 %v2018, %v2022
        %v2024 = vadd.f32 %v2023, 0.05243302
        %v2025 = vmul.f32 %v2018, %v2024
        %v2026 = vadd.f32 %v2025, 0.18741608
        %v2027 = vmul.f32 %v2018, %v2026
        %v2028 = vadd.f32 %v2027, 1.1283791
        %v2029 = vmul.f32 %v1976, %v2028
        %v2030 = vmul.f32 %v2018, 3.8918573e-05
        %v2031 = vadd.f32 %v2030, 0.001143296
        %v2032 = vmul.f32 %v2018, %v2031
        %v2033 = vadd.f32 %v2032, 0.014752088
        %v2034 = vmul.f32 %v2018, %v2033
        %v2035 = vadd.f32 %v2034, 0.112945676
        %v2036 = vmul.f32 %v2018, %v2035
        %v2037 = vadd.f32 %v2036, 0.4994258
        %v2038 = vmul.f32 %v2018, %v2037
        %v2039 = vadd.f32 %v2038, 1.0
        %v2040 = vrcp.pop %v2039
        %v2041 = vmul.f32 %v2039, %v2040
        %v2042 = vsub.f32 1.0, %v2041
        %v2043 = vmul.f32 %v2040, %v2042
        %v2044 = vadd.f32 %v2040, %v2043
        %vm2045 = vweird.f32 %v2039
        %vm2046 = vweird.f32 %v2040
        %vm2047 = vmor %vm2045, %vm2046
        %v2048 = vsel %vm2047, %v2040, %v2044
        %v2049 = vand.u32 2147483647, %v2039
        %vm2050 = vcmp.eq.f32.partialorder %v2049, 8.507059e+37
        %v2051 = vand.u32 %v2039, 2147483648
        %v2052 = vor.u32 1.1754944e-38, %v2051
        %v2053 = vsel %vm2050, %v2052, %v2048
        %v2054 = vmul.f32 %v2029, %v2053
        %v2055 = vmin.f32 %v2054, 1.0
        %v2056 = vmax.f32 %v2055, -1.0
        %v2057 = vadd.f32 %v2016, 1.0
        %v2058 = vadd.f32 %v2056, 1.0
        %v2059 = vmul.f32 %v1973, %v2057
        %v2060 = vmul.f32 %v1974, %v2058
        %v2061 = vpack.c.bf16 %v2060, %v2059
        %v2062 = vld [vmem:[%s1018] sm:$0xf]
        %v2063 = vld [vmem:[%s1018 + $0x4] sm:$0xf]
        %v2064 = vld [vmem:[%s1018 + $0x8] sm:$0xf]
        %v2065 = vld [vmem:[%s1018 + $0xc] sm:$0xf]
        %v2066 = vld [vmem:[%s1021] sm:$0x1]
        %v2068 = vperm.slane %v2066, 0
        %v2074 = vunpack.c.l.b16 %v2062
        %v2075 = vunpack.c.l.b16 %v2063
        %v2076 = vunpack.c.l.b16 %v2064
        %v2077 = vunpack.c.l.b16 %v2065
        %v2078 = vpack.c.b16 %v2075, %v2074
        %v2079 = vpack.c.b16 %v2077, %v2076
        %v2083 = vsel %vm1211, %v2061, 0
        %2085 = vmatpush.bf16.msra.mxu0 0
        %2086 = vmatpush.bf16.msra.mxu0 0
        %2087 = vmatpush.bf16.msra.mxu0 0
        %2088 = vmatpush.bf16.msra.mxu0 0
        %2089 = vmatpush.bf16.msra.mxu0 0
        %2090 = vmatpush.bf16.msra.mxu0 0
        %2091 = vmatpush.bf16.msra.mxu0 %v2079
        %2092 = vmatpush.bf16.msra.mxu0 %v2078
        %2093 = vmatmul.bf16.gmra.mxu0 %v2083
        %v2094 = vpop.f32.mrf.mxu0
        %v2095 = vadd.f32 %v2068, %v2094
        %v2096 = vpop.f32.mrf.mxu0
        %v2097 = vadd.f32 %v2068, %v2096
        %2098 = vdwg.mxu0
        %v2099 = vadd.f32 %v1871, %v2095
        %v2100 = vadd.f32 %v1872, %v2097
        %2101 = vst.msk [vmem:[#allocation2] sm:$0xff] %vm1211, %v2099
        %2102 = vst.msk [vmem:[#allocation2 + $0x8] sm:$0xff] %vm1211, %v2100
        %p2103 = scmp.eq.s32.totalorder %s42, 3
        // Predicated region
        $region125: #{trans_dynamic_forward.1} parent=119 // pred_check
          %p2104 = pneg %p2103
        $region126: #{trans_dynamic_forward.1} parent=119 // pred_check_branch
          %2106 = sbr.rel (%p2104) target = $region128
        $region127: #{trans_dynamic_forward.1} parent=119 // pred_region
          %v2107 = vld [vmem:[%s22] sm:$0x1]
          %v2108 = vld [vmem:[%s23] sm:$0x1]
          %v2109 = vsel %vm1211, %v2099, 0.0
          %2110 = vadd.xlane.f32.xlu0 %v2109
          %v2111 = vpop.xlane.xlu0 %2110
          %v2112 = vsel %vm1211, %v2100, 0.0
          %2113 = vadd.xlane.f32.xlu0 %v2112
          %v2114 = vpop.xlane.xlu0 %2113
          %v2115 = vmul.f32 %v2111, %v1224
          %v2116 = vmul.f32 %v2114, %v1224
          %v2117 = vmul.f32 %v2099, %v2099
          %v2118 = vmul.f32 %v2100, %v2100
          %v2119 = vsel %vm1211, %v2117, 0.0
          %2120 = vadd.xlane.f32.xlu0 %v2119
          %v2121 = vpop.xlane.xlu0 %2120
          %v2122 = vsel %vm1211, %v2118, 0.0
          %2123 = vadd.xlane.f32.xlu0 %v2122
          %v2124 = vpop.xlane.xlu0 %2123
          %v2125 = vmul.f32 %v2121, %v1224
          %v2126 = vmul.f32 %v2124, %v1224
          %v2127 = vmul.f32 %v2115, %v2115
          %v2128 = vmul.f32 %v2116, %v2116
          %v2129 = vsub.f32 %v2125, %v2127
          %v2130 = vsub.f32 %v2126, %v2128
          %v2131 = vmax.f32 %v2129, 0.0
          %v2132 = vmax.f32 %v2130, 0.0
          %v2133 = vsub.f32 %v2099, %v2115
          %v2134 = vsub.f32 %v2100, %v2116
          %v2135 = vadd.f32 %v2131, 1e-05
          %v2136 = vadd.f32 %v2132, 1e-05
          %v2137 = vrsqrt.pop %v2135
          %v2138 = vmul.f32 %v2137, %v2135
          %v2139 = vmul.f32 %v2138, %v2137
          %v2140 = vmul.f32 0.5, %v2139
          %v2141 = vsub.f32 1.5, %v2140
          %v2142 = vmul.f32 %v2137, %v2141
          %vm2143 = vweird.f32 %v2135
          %vm2144 = vweird.f32 %v2137
          %vm2145 = vmor %vm2143, %vm2144
          %v2146 = vsel %vm2145, %v2137, %v2142
          %v2147 = vrsqrt.pop %v2136
          %v2148 = vmul.f32 %v2147, %v2136
          %v2149 = vmul.f32 %v2148, %v2147
          %v2150 = vmul.f32 0.5, %v2149
          %v2151 = vsub.f32 1.5, %v2150
          %v2152 = vmul.f32 %v2147, %v2151
          %vm2153 = vweird.f32 %v2136
          %vm2154 = vweird.f32 %v2147
          %vm2155 = vmor %vm2153, %vm2154
          %v2156 = vsel %vm2155, %v2147, %v2152
          %v2157 = vmul.f32 %v2133, %v2146
          %v2158 = vmul.f32 %v2134, %v2156
          %v2160 = vperm.slane %v2107, 0
          %v2162 = vmul.f32 %v2157, %v2160
          %v2163 = vmul.f32 %v2158, %v2160
          %v2165 = vperm.slane %v2108, 0
          %v2167 = vadd.f32 %v2162, %v2165
          %v2168 = vadd.f32 %v2163, %v2165
          %v2169 = vpack.c.bf16 %v2168, %v2167
          %v2170 = vld [vmem:[%s24] sm:$0xf]
          %v2171 = vld [vmem:[%s24 + $0x4] sm:$0xf]
          %v2172 = vld [vmem:[%s24 + $0x8] sm:$0xf]
          %v2173 = vld [vmem:[%s24 + $0xc] sm:$0xf]
          %v2178 = vunpack.c.l.b16 %v2170
          %v2179 = vunpack.c.l.b16 %v2171
          %v2180 = vunpack.c.l.b16 %v2172
          %v2181 = vunpack.c.l.b16 %v2173
          %v2182 = vpack.c.b16 %v2179, %v2178
          %v2183 = vpack.c.b16 %v2181, %v2180
          %v2187 = vsel %vm1211, %v2169, 0
          %2189 = vmatpush.bf16.msra.mxu0 0
          %2190 = vmatpush.bf16.msra.mxu0 0
          %2191 = vmatpush.bf16.msra.mxu0 0
          %2192 = vmatpush.bf16.msra.mxu0 0
          %2193 = vmatpush.bf16.msra.mxu0 0
          %2194 = vmatpush.bf16.msra.mxu0 0
          %2195 = vmatpush.bf16.msra.mxu0 %v2183
          %2196 = vmatpush.bf16.msra.mxu0 %v2182
          %2197 = vmatmul.bf16.gmra.mxu0 %v2187
          %v2198 = vpop.f32.mrf.mxu0
          %v2199 = vadd.f32 0.0, %v2198
          %v2200 = vpop.f32.mrf.mxu0
          %v2201 = vadd.f32 0.0, %v2200
          %2202 = vdwg.mxu0
          %2203 = vst [vmem:[#allocation4] sm:$0xff] %v2199
          %2204 = vst [vmem:[#allocation4 + $0x8] sm:$0xff] %v2201
        $region128: #{trans_dynamic_forward.1} parent=119 // pred_fallthru
          _
        // Predicated region
        $region129: #{trans_dynamic_forward.1} parent=119 // pred_check
          %p2205 = pneg %p672
        $region130: #{trans_dynamic_forward.1} parent=119 // pred_check_branch
          %2207 = sbr.rel (%p2205) target = $region132
        $region131: #{trans_dynamic_forward.1} parent=119 // pred_region
          %s2208 = smul.u32 2, %s41
          %2210 = vsyncadd [#allocation5], 0
          %s2211 = smul.addr %s2208, 8
          %s2212 = scalar_lea.hbm %s25, %s2211
          %s2213 = sshll.u32 [#allocation4], 4
          %s2214 = int_to_ptr.vmem [resolvable:$true] %s2213
          %s2215 = sshll.u32 %s2212, 4
          %s2216 = int_to_ptr.hbm [resolvable:$true] %s2215
          %2221 = dma.vmem_to_hbm [thread:$0]  %s2214, 256, %s2216, [#allocation5], 128, 128, 8
        $region132: #{trans_dynamic_forward.1} parent=119 // pred_fallthru
          _
        // Predicated region
        $region133: #{trans_dynamic_forward.1} parent=119 // pred_check
          %p2222 = pneg %p672
        $region134: #{trans_dynamic_forward.1} parent=119 // pred_check_branch
          %2224 = sbr.rel (%p2222) target = $region136
        $region135: #{trans_dynamic_forward.1} parent=119 // pred_region
          %2226 = dma.done [#allocation5], 256
        $region136: #{trans_dynamic_forward.1} parent=119 // pred_fallthru
          _
      $region120: #{trans_dynamic_forward.1} parent=5 // pred_fallthru
        _
      %p2227 = scmp.le.s32.totalorder 2, %s32
      // Predicated region
      $region137: #{trans_dynamic_forward.1} parent=5 // pred_check
        %p2228 = pneg %p2227
      $region138: #{trans_dynamic_forward.1} parent=5 // pred_check_branch
        %2230 = sbr.rel (%p2228) target = $region140
      $region139: #{trans_dynamic_forward.1} parent=5 // pred_region
        %s2231 = ssub.s32 %s32, 2
      $region140: #{trans_dynamic_forward.1} parent=5 // pred_fallthru
        _
    $region6: #{trans_dynamic_forward.1} parent=1 // loop_footer
      %s36 = sadd.s32 1, %s32
    $region7: #{trans_dynamic_forward.1} parent=1 // loop_footer_branch
      %31 = sbr.rel target = $region3
    $region8: #{trans_dynamic_forward.1} parent=1 // loop_exit
      _
    %2232 = vsyncpa [#allocation5], 1
    %s2233 = scalar_lea.sflag [#allocation5], 1
    %2234 = vsyncpa %s2233, 1

</llo_original>
